<compile_context>
chip_gen: v7x
topology: tpu7x:2x2x1
jax: 0.10.0
libtpu: 0.0.40
codegen_flags: <defaults>
</compile_context>

<pallas_src>
import functools

import jax
import jax.numpy as jnp
from jax.experimental import pallas as pl
from jax.experimental.pallas import tpu as pltpu

KSIZE = 7
PAD = 3
N_TAPS = KSIZE * KSIZE


def _round_up(x, m):
    return (x + m - 1) // m * m


def _outconv_kernel(x_ref, w_ref, b_ref, o_ref, rhs_ref, *, wp, cinp):
    # x_ref:   (1, 1, Cinp, SLAB)   bf16  halo'd input window of this lane tile
    # w_ref:   (Coutp, 49*Cinp)     bf16  lane-dense packed conv weights
    # b_ref:   (Coutp, 1)           f32
    # o_ref:   (1, Coutp, L_tile)   f32
    # rhs_ref: (49*Cinp, L_tile)    bf16  VMEM scratch: stacked shifted slices
    l_tile = o_ref.shape[2]

    # Build the stacked RHS: rows [k*Cinp, (k+1)*Cinp) hold the input shifted by
    # tap k = kh*7 + kw.  Every slice start is static (shift = kh*Wp + kw within
    # the window); stores are (16,128)-tile aligned since Cinp % 16 == 0.
    for k in range(N_TAPS):
        kh, kw = divmod(k, KSIZE)
        shift = kh * wp + kw
        rhs_ref[k * cinp:(k + 1) * cinp, :] = x_ref[0, 0, :, shift:shift + l_tile]

    # One fat MXU matmul: K = 49*Cinp (instead of 49 K=Cinp dots + 49 f32 adds).
    acc = jnp.dot(w_ref[...], rhs_ref[...], preferred_element_type=jnp.float32)
    o_ref[0] = jnp.tanh(acc + b_ref[...]).astype(o_ref.dtype)


def outconv_forward(x, weight, bias, *, l_tile=None):
    """
    x:      (N, Cin, H, W)    float32 NCHW
    weight: (Cout, Cin, 7, 7) PyTorch conv weight layout
    bias:   (Cout,)
    returns (N, Cout, H, W)   = tanh(conv7x7(reflection_pad3(x)) + bias)
    """
    N, Cin, H, W = x.shape
    Cout = weight.shape[0]
    Hp, Wp = H + 2 * PAD, W + 2 * PAD

    Cinp = _round_up(Cin, 16)     # bf16 sublane-pack aligned
    Coutp = _round_up(Cout, 8)

    L_valid = H * Wp              # flattened output lanes we keep
    halo = (KSIZE - 1) * Wp + (KSIZE - 1)

    if l_tile is None:
        # Big enough for lane-dense unmasked stores + grid-overhead amortization,
        # small enough for a vreg-resident result tile; grow toward the halo so
        # the per-window overlap stays modest.
        l_tile = _round_up(min(max(halo, 512), 2048), 128)
    l_tile = max(128, min(l_tile, _round_up(L_valid, 128)))
    nb = pl.cdiv(L_valid, l_tile)
    slab = _round_up(l_tile + halo, 128)

    # Reflection pad (host), flatten spatial, pad channels and lane tail.
    xp = jnp.pad(x, ((0, 0), (0, 0), (PAD, PAD), (PAD, PAD)), mode="reflect")
    xf = xp.reshape(N, Cin, Hp * Wp)
    lanes_needed = (nb - 1) * l_tile + slab
    xf = jnp.pad(xf, ((0, 0), (0, Cinp - Cin), (0, lanes_needed - Hp * Wp)))
    xf = xf.astype(jnp.bfloat16)

    # Per-tile halo'd windows (small overlap; keeps all kernel slices static).
    xw = jnp.stack(
        [jax.lax.dynamic_slice_in_dim(xf, i * l_tile, slab, axis=2) for i in range(nb)],
        axis=1)                                              # (N, nb, Cinp, slab)

    # Lane-dense packed weights: column index = (kh*7 + kw)*Cinp + ci.
    ktot = N_TAPS * Cinp
    w_k = jnp.transpose(weight, (0, 2, 3, 1))                # (Cout, 7, 7, Cin)
    w_k = jnp.pad(w_k, ((0, Coutp - Cout), (0, 0), (0, 0), (0, Cinp - Cin)))
    w_packed = w_k.reshape(Coutp, ktot).astype(jnp.bfloat16)
    b_packed = jnp.pad(bias, (0, Coutp - Cout)).reshape(Coutp, 1).astype(jnp.float32)

    kernel = functools.partial(_outconv_kernel, wp=Wp, cinp=Cinp)

    # Actual post-tiling VMEM footprint (double-buffered pipeline blocks + scratch),
    # with 2x headroom, capped well below v7x's 64 MiB physical VMEM.
    vmem_bytes = (2 * Cinp * slab * 2            # input window blocks (bf16)
                  + 2 * Coutp * ktot * 2         # packed weights (bf16)
                  + 2 * Coutp * 4                # bias (f32)
                  + 2 * Coutp * l_tile * 4       # output blocks (f32)
                  + ktot * l_tile * 2)           # stacked-RHS scratch (bf16)
    vmem_limit = int(min(48 * 1024 * 1024, max(8 * 1024 * 1024, 2 * vmem_bytes)))

    out = pl.pallas_call(
        kernel,
        out_shape=jax.ShapeDtypeStruct((N, Coutp, nb * l_tile), jnp.float32),
        grid_spec=pltpu.PrefetchScalarGridSpec(
            num_scalar_prefetch=0,
            grid=(N, nb),
            in_specs=[
                pl.BlockSpec((1, 1, Cinp, slab), lambda b, t: (b, t, 0, 0)),
                pl.BlockSpec((Coutp, ktot), lambda b, t: (0, 0)),
                pl.BlockSpec((Coutp, 1), lambda b, t: (0, 0)),
            ],
            out_specs=pl.BlockSpec((1, Coutp, l_tile), lambda b, t: (b, 0, t)),
            scratch_shapes=[pltpu.VMEM((ktot, l_tile), jnp.bfloat16)],
        ),
        compiler_params=pltpu.CompilerParams(
            dimension_semantics=("parallel", "parallel"),
            vmem_limit_bytes=vmem_limit,
        ),
    )(xw, w_packed, b_packed)

    # (N, Coutp, nb*L_tile) -> NCHW: drop channel padding, keep valid lanes,
    # then drop the Wp-W wrap-around columns (must stay last: those lanes hold
    # adjacent-row data).
    out = out[:, :Cout, :L_valid].reshape(N, Cout, H, Wp)[:, :, :, :W]
    return out


if __name__ == "__main__":
    key = jax.random.PRNGKey(0)
    k_x, k_w, k_b = jax.random.split(key, 3)

    N, Cin, H, W = 2, 4, 16, 16
    Cout = 3                                    # typical RGB output conv

    x = jax.random.normal(k_x, (N, Cin, H, W), dtype=jnp.float32)
    fan_in = Cin * KSIZE * KSIZE
    weight = jax.random.normal(k_w, (Cout, Cin, KSIZE, KSIZE),
                               dtype=jnp.float32) * (2.0 / fan_in) ** 0.5
    bias = jax.random.normal(k_b, (Cout,), dtype=jnp.float32) * 0.01

    y = outconv_forward(x, weight, bias)
    jax.block_until_ready(y)

    # Reference: reflection pad + 7x7 VALID conv + bias + tanh on the same
    # bf16-rounded matmul inputs the kernel uses (accumulation in f32).
    xp = jnp.pad(x, ((0, 0), (0, 0), (PAD, PAD), (PAD, PAD)), mode="reflect")
    xr = xp.astype(jnp.bfloat16).astype(jnp.float32)
    wr = weight.astype(jnp.bfloat16).astype(jnp.float32)
    ref = jax.lax.conv_general_dilated(
        xr, wr, window_strides=(1, 1), padding="VALID",
        dimension_numbers=("NCHW", "OIHW", "NCHW"),
        precision=jax.lax.Precision.HIGHEST) + bias[None, :, None, None]
    ref = jnp.tanh(ref)

    assert y.shape == (N, Cout, H, W), y.shape
    err = float(jnp.max(jnp.abs(y - ref)))
    assert err < 1e-3, err

    print("KERNEL_OK")
</pallas_src>

<mosaic_0001>
module attributes {stable_mosaic.version = 11 : i64} {
  func.func @_outconv_kernel(%arg0: i32, %arg1: i32, %arg2: memref<1x1x16x640xbf16, #tpu.memory_space<vmem>>, %arg3: memref<8x784xbf16, #tpu.memory_space<vmem>>, %arg4: memref<8x1xf32, #tpu.memory_space<vmem>>, %arg5: memref<1x8x384xf32, #tpu.memory_space<vmem>>, %arg6: memref<784x384xbf16, #tpu.memory_space<vmem>>) attributes {dimension_semantics = [#tpu.dimension_semantics<parallel>, #tpu.dimension_semantics<parallel>], iteration_bounds = array<i64: 2, 1>, scalar_prefetch = 0 : i64, scratch_operands = 1 : i64, tpu.core_type = #tpu.core_type<tc>, window_params = [{transform_indices = @transform_0, window_bounds = array<i64: 1, 1, 16, 640>}, {pipeline_mode = #tpu.pipeline_mode<synchronous>, transform_indices = @transform_1, window_bounds = array<i64: 8, 784>}, {pipeline_mode = #tpu.pipeline_mode<synchronous>, transform_indices = @transform_2, window_bounds = array<i64: 8, 1>}, {transform_indices = @transform_3, window_bounds = array<i64: 1, 8, 384>}]} {
    %c0 = arith.constant 0 : index
    %c0_0 = arith.constant 0 : index
    %c0_1 = arith.constant 0 : index
    %c0_2 = arith.constant 0 : index
    %0 = vector.load %arg2[%c0, %c0_0, %c0_1, %c0_2] : memref<1x1x16x640xbf16, #tpu.memory_space<vmem>>, vector<1x1x16x384xbf16>
    %1 = vector.shape_cast %0 : vector<1x1x16x384xbf16> to vector<16x384xbf16>
    %c0_3 = arith.constant 0 : index
    %c0_4 = arith.constant 0 : index
    %2 = vector.load %arg6[%c0_3, %c0_4] : memref<784x384xbf16, #tpu.memory_space<vmem>>, vector<16x384xbf16>
    tpu.vector_store %arg6[%c0_3, %c0_4], %1 {strides = array<i32>} : memref<784x384xbf16, #tpu.memory_space<vmem>>, vector<16x384xbf16>,
    %c0_5 = arith.constant 0 : index
    %c0_6 = arith.constant 0 : index
    %c0_7 = arith.constant 0 : index
    %c1 = arith.constant 1 : index
    %3 = vector.load %arg2[%c0_5, %c0_6, %c0_7, %c1] : memref<1x1x16x640xbf16, #tpu.memory_space<vmem>>, vector<1x1x16x384xbf16>
    %4 = vector.shape_cast %3 : vector<1x1x16x384xbf16> to vector<16x384xbf16>
    %c16 = arith.constant 16 : index
    %c0_8 = arith.constant 0 : index
    %5 = vector.load %arg6[%c16, %c0_8] : memref<784x384xbf16, #tpu.memory_space<vmem>>, vector<16x384xbf16>
    tpu.vector_store %arg6[%c16, %c0_8], %4 {strides = array<i32>} : memref<784x384xbf16, #tpu.memory_space<vmem>>, vector<16x384xbf16>,
    %c0_9 = arith.constant 0 : index
    %c0_10 = arith.constant 0 : index
    %c0_11 = arith.constant 0 : index
    %c2 = arith.constant 2 : index
    %6 = vector.load %arg2[%c0_9, %c0_10, %c0_11, %c2] : memref<1x1x16x640xbf16, #tpu.memory_space<vmem>>, vector<1x1x16x384xbf16>
    %7 = vector.shape_cast %6 : vector<1x1x16x384xbf16> to vector<16x384xbf16>
    %c32 = arith.constant 32 : index
    %c0_12 = arith.constant 0 : index
    %8 = vector.load %arg6[%c32, %c0_12] : memref<784x384xbf16, #tpu.memory_space<vmem>>, vector<16x384xbf16>
    tpu.vector_store %arg6[%c32, %c0_12], %7 {strides = array<i32>} : memref<784x384xbf16, #tpu.memory_space<vmem>>, vector<16x384xbf16>,
    %c0_13 = arith.constant 0 : index
    %c0_14 = arith.constant 0 : index
    %c0_15 = arith.constant 0 : index
    %c3 = arith.constant 3 : index
    %9 = vector.load %arg2[%c0_13, %c0_14, %c0_15, %c3] : memref<1x1x16x640xbf16, #tpu.memory_space<vmem>>, vector<1x1x16x384xbf16>
    %10 = vector.shape_cast %9 : vector<1x1x16x384xbf16> to vector<16x384xbf16>
    %c48 = arith.constant 48 : index
    %c0_16 = arith.constant 0 : index
    %11 = vector.load %arg6[%c48, %c0_16] : memref<784x384xbf16, #tpu.memory_space<vmem>>, vector<16x384xbf16>
    tpu.vector_store %arg6[%c48, %c0_16], %10 {strides = array<i32>} : memref<784x384xbf16, #tpu.memory_space<vmem>>, vector<16x384xbf16>,
    %c0_17 = arith.constant 0 : index
    %c0_18 = arith.constant 0 : index
    %c0_19 = arith.constant 0 : index
    %c4 = arith.constant 4 : index
    %12 = vector.load %arg2[%c0_17, %c0_18, %c0_19, %c4] : memref<1x1x16x640xbf16, #tpu.memory_space<vmem>>, vector<1x1x16x384xbf16>
    %13 = vector.shape_cast %12 : vector<1x1x16x384xbf16> to vector<16x384xbf16>
    %c64 = arith.constant 64 : index
    %c0_20 = arith.constant 0 : index
    %14 = vector.load %arg6[%c64, %c0_20] : memref<784x384xbf16, #tpu.memory_space<vmem>>, vector<16x384xbf16>
    tpu.vector_store %arg6[%c64, %c0_20], %13 {strides = array<i32>} : memref<784x384xbf16, #tpu.memory_space<vmem>>, vector<16x384xbf16>,
    %c0_21 = arith.constant 0 : index
    %c0_22 = arith.constant 0 : index
    %c0_23 = arith.constant 0 : index
    %c5 = arith.constant 5 : index
    %15 = vector.load %arg2[%c0_21, %c0_22, %c0_23, %c5] : memref<1x1x16x640xbf16, #tpu.memory_space<vmem>>, vector<1x1x16x384xbf16>
    %16 = vector.shape_cast %15 : vector<1x1x16x384xbf16> to vector<16x384xbf16>
    %c80 = arith.constant 80 : index
    %c0_24 = arith.constant 0 : index
    %17 = vector.load %arg6[%c80, %c0_24] : memref<784x384xbf16, #tpu.memory_space<vmem>>, vector<16x384xbf16>
    tpu.vector_store %arg6[%c80, %c0_24], %16 {strides = array<i32>} : memref<784x384xbf16, #tpu.memory_space<vmem>>, vector<16x384xbf16>,
    %c0_25 = arith.constant 0 : index
    %c0_26 = arith.constant 0 : index
    %c0_27 = arith.constant 0 : index
    %c6 = arith.constant 6 : index
    %18 = vector.load %arg2[%c0_25, %c0_26, %c0_27, %c6] : memref<1x1x16x640xbf16, #tpu.memory_space<vmem>>, vector<1x1x16x384xbf16>
    %19 = vector.shape_cast %18 : vector<1x1x16x384xbf16> to vector<16x384xbf16>
    %c96 = arith.constant 96 : index
    %c0_28 = arith.constant 0 : index
    %20 = vector.load %arg6[%c96, %c0_28] : memref<784x384xbf16, #tpu.memory_space<vmem>>, vector<16x384xbf16>
    tpu.vector_store %arg6[%c96, %c0_28], %19 {strides = array<i32>} : memref<784x384xbf16, #tpu.memory_space<vmem>>, vector<16x384xbf16>,
    %c0_29 = arith.constant 0 : index
    %c0_30 = arith.constant 0 : index
    %c0_31 = arith.constant 0 : index
    %c22 = arith.constant 22 : index
    %21 = vector.load %arg2[%c0_29, %c0_30, %c0_31, %c22] : memref<1x1x16x640xbf16, #tpu.memory_space<vmem>>, vector<1x1x16x384xbf16>
    %22 = vector.shape_cast %21 : vector<1x1x16x384xbf16> to vector<16x384xbf16>
    %c112 = arith.constant 112 : index
    %c0_32 = arith.constant 0 : index
    %23 = vector.load %arg6[%c112, %c0_32] : memref<784x384xbf16, #tpu.memory_space<vmem>>, vector<16x384xbf16>
    tpu.vector_store %arg6[%c112, %c0_32], %22 {strides = array<i32>} : memref<784x384xbf16, #tpu.memory_space<vmem>>, vector<16x384xbf16>,
    %c0_33 = arith.constant 0 : index
    %c0_34 = arith.constant 0 : index
    %c0_35 = arith.constant 0 : index
    %c23 = arith.constant 23 : index
    %24 = vector.load %arg2[%c0_33, %c0_34, %c0_35, %c23] : memref<1x1x16x640xbf16, #tpu.memory_space<vmem>>, vector<1x1x16x384xbf16>
    %25 = vector.shape_cast %24 : vector<1x1x16x384xbf16> to vector<16x384xbf16>
    %c128 = arith.constant 128 : index
    %c0_36 = arith.constant 0 : index
    %26 = vector.load %arg6[%c128, %c0_36] : memref<784x384xbf16, #tpu.memory_space<vmem>>, vector<16x384xbf16>
    tpu.vector_store %arg6[%c128, %c0_36], %25 {strides = array<i32>} : memref<784x384xbf16, #tpu.memory_space<vmem>>, vector<16x384xbf16>,
    %c0_37 = arith.constant 0 : index
    %c0_38 = arith.constant 0 : index
    %c0_39 = arith.constant 0 : index
    %c24 = arith.constant 24 : index
    %27 = vector.load %arg2[%c0_37, %c0_38, %c0_39, %c24] : memref<1x1x16x640xbf16, #tpu.memory_space<vmem>>, vector<1x1x16x384xbf16>
    %28 = vector.shape_cast %27 : vector<1x1x16x384xbf16> to vector<16x384xbf16>
    %c144 = arith.constant 144 : index
    %c0_40 = arith.constant 0 : index
    %29 = vector.load %arg6[%c144, %c0_40] : memref<784x384xbf16, #tpu.memory_space<vmem>>, vector<16x384xbf16>
    tpu.vector_store %arg6[%c144, %c0_40], %28 {strides = array<i32>} : memref<784x384xbf16, #tpu.memory_space<vmem>>, vector<16x384xbf16>,
    %c0_41 = arith.constant 0 : index
    %c0_42 = arith.constant 0 : index
    %c0_43 = arith.constant 0 : index
    %c25 = arith.constant 25 : index
    %30 = vector.load %arg2[%c0_41, %c0_42, %c0_43, %c25] : memref<1x1x16x640xbf16, #tpu.memory_space<vmem>>, vector<1x1x16x384xbf16>
    %31 = vector.shape_cast %30 : vector<1x1x16x384xbf16> to vector<16x384xbf16>
    %c160 = arith.constant 160 : index
    %c0_44 = arith.constant 0 : index
    %32 = vector.load %arg6[%c160, %c0_44] : memref<784x384xbf16, #tpu.memory_space<vmem>>, vector<16x384xbf16>
    tpu.vector_store %arg6[%c160, %c0_44], %31 {strides = array<i32>} : memref<784x384xbf16, #tpu.memory_space<vmem>>, vector<16x384xbf16>,
    %c0_45 = arith.constant 0 : index
    %c0_46 = arith.constant 0 : index
    %c0_47 = arith.constant 0 : index
    %c26 = arith.constant 26 : index
    %33 = vector.load %arg2[%c0_45, %c0_46, %c0_47, %c26] : memref<1x1x16x640xbf16, #tpu.memory_space<vmem>>, vector<1x1x16x384xbf16>
    %34 = vector.shape_cast %33 : vector<1x1x16x384xbf16> to vector<16x384xbf16>
    %c176 = arith.constant 176 : index
    %c0_48 = arith.constant 0 : index
    %35 = vector.load %arg6[%c176, %c0_48] : memref<784x384xbf16, #tpu.memory_space<vmem>>, vector<16x384xbf16>
    tpu.vector_store %arg6[%c176, %c0_48], %34 {strides = array<i32>} : memref<784x384xbf16, #tpu.memory_space<vmem>>, vector<16x384xbf16>,
    %c0_49 = arith.constant 0 : index
    %c0_50 = arith.constant 0 : index
    %c0_51 = arith.constant 0 : index
    %c27 = arith.constant 27 : index
    %36 = vector.load %arg2[%c0_49, %c0_50, %c0_51, %c27] : memref<1x1x16x640xbf16, #tpu.memory_space<vmem>>, vector<1x1x16x384xbf16>
    %37 = vector.shape_cast %36 : vector<1x1x16x384xbf16> to vector<16x384xbf16>
    %c192 = arith.constant 192 : index
    %c0_52 = arith.constant 0 : index
    %38 = vector.load %arg6[%c192, %c0_52] : memref<784x384xbf16, #tpu.memory_space<vmem>>, vector<16x384xbf16>
    tpu.vector_store %arg6[%c192, %c0_52], %37 {strides = array<i32>} : memref<784x384xbf16, #tpu.memory_space<vmem>>, vector<16x384xbf16>,
    %c0_53 = arith.constant 0 : index
    %c0_54 = arith.constant 0 : index
    %c0_55 = arith.constant 0 : index
    %c28 = arith.constant 28 : index
    %39 = vector.load %arg2[%c0_53, %c0_54, %c0_55, %c28] : memref<1x1x16x640xbf16, #tpu.memory_space<vmem>>, vector<1x1x16x384xbf16>
    %40 = vector.shape_cast %39 : vector<1x1x16x384xbf16> to vector<16x384xbf16>
    %c208 = arith.constant 208 : index
    %c0_56 = arith.constant 0 : index
    %41 = vector.load %arg6[%c208, %c0_56] : memref<784x384xbf16, #tpu.memory_space<vmem>>, vector<16x384xbf16>
    tpu.vector_store %arg6[%c208, %c0_56], %40 {strides = array<i32>} : memref<784x384xbf16, #tpu.memory_space<vmem>>, vector<16x384xbf16>,
    %c0_57 = arith.constant 0 : index
    %c0_58 = arith.constant 0 : index
    %c0_59 = arith.constant 0 : index
    %c44 = arith.constant 44 : index
    %42 = vector.load %arg2[%c0_57, %c0_58, %c0_59, %c44] : memref<1x1x16x640xbf16, #tpu.memory_space<vmem>>, vector<1x1x16x384xbf16>
    %43 = vector.shape_cast %42 : vector<1x1x16x384xbf16> to vector<16x384xbf16>
    %c224 = arith.constant 224 : index
    %c0_60 = arith.constant 0 : index
    %44 = vector.load %arg6[%c224, %c0_60] : memref<784x384xbf16, #tpu.memory_space<vmem>>, vector<16x384xbf16>
    tpu.vector_store %arg6[%c224, %c0_60], %43 {strides = array<i32>} : memref<784x384xbf16, #tpu.memory_space<vmem>>, vector<16x384xbf16>,
    %c0_61 = arith.constant 0 : index
    %c0_62 = arith.constant 0 : index
    %c0_63 = arith.constant 0 : index
    %c45 = arith.constant 45 : index
    %45 = vector.load %arg2[%c0_61, %c0_62, %c0_63, %c45] : memref<1x1x16x640xbf16, #tpu.memory_space<vmem>>, vector<1x1x16x384xbf16>
    %46 = vector.shape_cast %45 : vector<1x1x16x384xbf16> to vector<16x384xbf16>
    %c240 = arith.constant 240 : index
    %c0_64 = arith.constant 0 : index
    %47 = vector.load %arg6[%c240, %c0_64] : memref<784x384xbf16, #tpu.memory_space<vmem>>, vector<16x384xbf16>
    tpu.vector_store %arg6[%c240, %c0_64], %46 {strides = array<i32>} : memref<784x384xbf16, #tpu.memory_space<vmem>>, vector<16x384xbf16>,
    %c0_65 = arith.constant 0 : index
    %c0_66 = arith.constant 0 : index
    %c0_67 = arith.constant 0 : index
    %c46 = arith.constant 46 : index
    %48 = vector.load %arg2[%c0_65, %c0_66, %c0_67, %c46] : memref<1x1x16x640xbf16, #tpu.memory_space<vmem>>, vector<1x1x16x384xbf16>
    %49 = vector.shape_cast %48 : vector<1x1x16x384xbf16> to vector<16x384xbf16>
    %c256 = arith.constant 256 : index
    %c0_68 = arith.constant 0 : index
    %50 = vector.load %arg6[%c256, %c0_68] : memref<784x384xbf16, #tpu.memory_space<vmem>>, vector<16x384xbf16>
    tpu.vector_store %arg6[%c256, %c0_68], %49 {strides = array<i32>} : memref<784x384xbf16, #tpu.memory_space<vmem>>, vector<16x384xbf16>,
    %c0_69 = arith.constant 0 : index
    %c0_70 = arith.constant 0 : index
    %c0_71 = arith.constant 0 : index
    %c47 = arith.constant 47 : index
    %51 = vector.load %arg2[%c0_69, %c0_70, %c0_71, %c47] : memref<1x1x16x640xbf16, #tpu.memory_space<vmem>>, vector<1x1x16x384xbf16>
    %52 = vector.shape_cast %51 : vector<1x1x16x384xbf16> to vector<16x384xbf16>
    %c272 = arith.constant 272 : index
    %c0_72 = arith.constant 0 : index
    %53 = vector.load %arg6[%c272, %c0_72] : memref<784x384xbf16, #tpu.memory_space<vmem>>, vector<16x384xbf16>
    tpu.vector_store %arg6[%c272, %c0_72], %52 {strides = array<i32>} : memref<784x384xbf16, #tpu.memory_space<vmem>>, vector<16x384xbf16>,
    %c0_73 = arith.constant 0 : index
    %c0_74 = arith.constant 0 : index
    %c0_75 = arith.constant 0 : index
    %c48_76 = arith.constant 48 : index
    %54 = vector.load %arg2[%c0_73, %c0_74, %c0_75, %c48_76] : memref<1x1x16x640xbf16, #tpu.memory_space<vmem>>, vector<1x1x16x384xbf16>
    %55 = vector.shape_cast %54 : vector<1x1x16x384xbf16> to vector<16x384xbf16>
    %c288 = arith.constant 288 : index
    %c0_77 = arith.constant 0 : index
    %56 = vector.load %arg6[%c288, %c0_77] : memref<784x384xbf16, #tpu.memory_space<vmem>>, vector<16x384xbf16>
    tpu.vector_store %arg6[%c288, %c0_77], %55 {strides = array<i32>} : memref<784x384xbf16, #tpu.memory_space<vmem>>, vector<16x384xbf16>,
    %c0_78 = arith.constant 0 : index
    %c0_79 = arith.constant 0 : index
    %c0_80 = arith.constant 0 : index
    %c49 = arith.constant 49 : index
    %57 = vector.load %arg2[%c0_78, %c0_79, %c0_80, %c49] : memref<1x1x16x640xbf16, #tpu.memory_space<vmem>>, vector<1x1x16x384xbf16>
    %58 = vector.shape_cast %57 : vector<1x1x16x384xbf16> to vector<16x384xbf16>
    %c304 = arith.constant 304 : index
    %c0_81 = arith.constant 0 : index
    %59 = vector.load %arg6[%c304, %c0_81] : memref<784x384xbf16, #tpu.memory_space<vmem>>, vector<16x384xbf16>
    tpu.vector_store %arg6[%c304, %c0_81], %58 {strides = array<i32>} : memref<784x384xbf16, #tpu.memory_space<vmem>>, vector<16x384xbf16>,
    %c0_82 = arith.constant 0 : index
    %c0_83 = arith.constant 0 : index
    %c0_84 = arith.constant 0 : index
    %c50 = arith.constant 50 : index
    %60 = vector.load %arg2[%c0_82, %c0_83, %c0_84, %c50] : memref<1x1x16x640xbf16, #tpu.memory_space<vmem>>, vector<1x1x16x384xbf16>
    %61 = vector.shape_cast %60 : vector<1x1x16x384xbf16> to vector<16x384xbf16>
    %c320 = arith.constant 320 : index
    %c0_85 = arith.constant 0 : index
    %62 = vector.load %arg6[%c320, %c0_85] : memref<784x384xbf16, #tpu.memory_space<vmem>>, vector<16x384xbf16>
    tpu.vector_store %arg6[%c320, %c0_85], %61 {strides = array<i32>} : memref<784x384xbf16, #tpu.memory_space<vmem>>, vector<16x384xbf16>,
    %c0_86 = arith.constant 0 : index
    %c0_87 = arith.constant 0 : index
    %c0_88 = arith.constant 0 : index
    %c66 = arith.constant 66 : index
    %63 = vector.load %arg2[%c0_86, %c0_87, %c0_88, %c66] : memref<1x1x16x640xbf16, #tpu.memory_space<vmem>>, vector<1x1x16x384xbf16>
    %64 = vector.shape_cast %63 : vector<1x1x16x384xbf16> to vector<16x384xbf16>
    %c336 = arith.constant 336 : index
    %c0_89 = arith.constant 0 : index
    %65 = vector.load %arg6[%c336, %c0_89] : memref<784x384xbf16, #tpu.memory_space<vmem>>, vector<16x384xbf16>
    tpu.vector_store %arg6[%c336, %c0_89], %64 {strides = array<i32>} : memref<784x384xbf16, #tpu.memory_space<vmem>>, vector<16x384xbf16>,
    %c0_90 = arith.constant 0 : index
    %c0_91 = arith.constant 0 : index
    %c0_92 = arith.constant 0 : index
    %c67 = arith.constant 67 : index
    %66 = vector.load %arg2[%c0_90, %c0_91, %c0_92, %c67] : memref<1x1x16x640xbf16, #tpu.memory_space<vmem>>, vector<1x1x16x384xbf16>
    %67 = vector.shape_cast %66 : vector<1x1x16x384xbf16> to vector<16x384xbf16>
    %c352 = arith.constant 352 : index
    %c0_93 = arith.constant 0 : index
    %68 = vector.load %arg6[%c352, %c0_93] : memref<784x384xbf16, #tpu.memory_space<vmem>>, vector<16x384xbf16>
    tpu.vector_store %arg6[%c352, %c0_93], %67 {strides = array<i32>} : memref<784x384xbf16, #tpu.memory_space<vmem>>, vector<16x384xbf16>,
    %c0_94 = arith.constant 0 : index
    %c0_95 = arith.constant 0 : index
    %c0_96 = arith.constant 0 : index
    %c68 = arith.constant 68 : index
    %69 = vector.load %arg2[%c0_94, %c0_95, %c0_96, %c68] : memref<1x1x16x640xbf16, #tpu.memory_space<vmem>>, vector<1x1x16x384xbf16>
    %70 = vector.shape_cast %69 : vector<1x1x16x384xbf16> to vector<16x384xbf16>
    %c368 = arith.constant 368 : index
    %c0_97 = arith.constant 0 : index
    %71 = vector.load %arg6[%c368, %c0_97] : memref<784x384xbf16, #tpu.memory_space<vmem>>, vector<16x384xbf16>
    tpu.vector_store %arg6[%c368, %c0_97], %70 {strides = array<i32>} : memref<784x384xbf16, #tpu.memory_space<vmem>>, vector<16x384xbf16>,
    %c0_98 = arith.constant 0 : index
    %c0_99 = arith.constant 0 : index
    %c0_100 = arith.constant 0 : index
    %c69 = arith.constant 69 : index
    %72 = vector.load %arg2[%c0_98, %c0_99, %c0_100, %c69] : memref<1x1x16x640xbf16, #tpu.memory_space<vmem>>, vector<1x1x16x384xbf16>
    %73 = vector.shape_cast %72 : vector<1x1x16x384xbf16> to vector<16x384xbf16>
    %c384 = arith.constant 384 : index
    %c0_101 = arith.constant 0 : index
    %74 = vector.load %arg6[%c384, %c0_101] : memref<784x384xbf16, #tpu.memory_space<vmem>>, vector<16x384xbf16>
    tpu.vector_store %arg6[%c384, %c0_101], %73 {strides = array<i32>} : memref<784x384xbf16, #tpu.memory_space<vmem>>, vector<16x384xbf16>,
    %c0_102 = arith.constant 0 : index
    %c0_103 = arith.constant 0 : index
    %c0_104 = arith.constant 0 : index
    %c70 = arith.constant 70 : index
    %75 = vector.load %arg2[%c0_102, %c0_103, %c0_104, %c70] : memref<1x1x16x640xbf16, #tpu.memory_space<vmem>>, vector<1x1x16x384xbf16>
    %76 = vector.shape_cast %75 : vector<1x1x16x384xbf16> to vector<16x384xbf16>
    %c400 = arith.constant 400 : index
    %c0_105 = arith.constant 0 : index
    %77 = vector.load %arg6[%c400, %c0_105] : memref<784x384xbf16, #tpu.memory_space<vmem>>, vector<16x384xbf16>
    tpu.vector_store %arg6[%c400, %c0_105], %76 {strides = array<i32>} : memref<784x384xbf16, #tpu.memory_space<vmem>>, vector<16x384xbf16>,
    %c0_106 = arith.constant 0 : index
    %c0_107 = arith.constant 0 : index
    %c0_108 = arith.constant 0 : index
    %c71 = arith.constant 71 : index
    %78 = vector.load %arg2[%c0_106, %c0_107, %c0_108, %c71] : memref<1x1x16x640xbf16, #tpu.memory_space<vmem>>, vector<1x1x16x384xbf16>
    %79 = vector.shape_cast %78 : vector<1x1x16x384xbf16> to vector<16x384xbf16>
    %c416 = arith.constant 416 : index
    %c0_109 = arith.constant 0 : index
    %80 = vector.load %arg6[%c416, %c0_109] : memref<784x384xbf16, #tpu.memory_space<vmem>>, vector<16x384xbf16>
    tpu.vector_store %arg6[%c416, %c0_109], %79 {strides = array<i32>} : memref<784x384xbf16, #tpu.memory_space<vmem>>, vector<16x384xbf16>,
    %c0_110 = arith.constant 0 : index
    %c0_111 = arith.constant 0 : index
    %c0_112 = arith.constant 0 : index
    %c72 = arith.constant 72 : index
    %81 = vector.load %arg2[%c0_110, %c0_111, %c0_112, %c72] : memref<1x1x16x640xbf16, #tpu.memory_space<vmem>>, vector<1x1x16x384xbf16>
    %82 = vector.shape_cast %81 : vector<1x1x16x384xbf16> to vector<16x384xbf16>
    %c432 = arith.constant 432 : index
    %c0_113 = arith.constant 0 : index
    %83 = vector.load %arg6[%c432, %c0_113] : memref<784x384xbf16, #tpu.memory_space<vmem>>, vector<16x384xbf16>
    tpu.vector_store %arg6[%c432, %c0_113], %82 {strides = array<i32>} : memref<784x384xbf16, #tpu.memory_space<vmem>>, vector<16x384xbf16>,
    %c0_114 = arith.constant 0 : index
    %c0_115 = arith.constant 0 : index
    %c0_116 = arith.constant 0 : index
    %c88 = arith.constant 88 : index
    %84 = vector.load %arg2[%c0_114, %c0_115, %c0_116, %c88] : memref<1x1x16x640xbf16, #tpu.memory_space<vmem>>, vector<1x1x16x384xbf16>
    %85 = vector.shape_cast %84 : vector<1x1x16x384xbf16> to vector<16x384xbf16>
    %c448 = arith.constant 448 : index
    %c0_117 = arith.constant 0 : index
    %86 = vector.load %arg6[%c448, %c0_117] : memref<784x384xbf16, #tpu.memory_space<vmem>>, vector<16x384xbf16>
    tpu.vector_store %arg6[%c448, %c0_117], %85 {strides = array<i32>} : memref<784x384xbf16, #tpu.memory_space<vmem>>, vector<16x384xbf16>,
    %c0_118 = arith.constant 0 : index
    %c0_119 = arith.constant 0 : index
    %c0_120 = arith.constant 0 : index
    %c89 = arith.constant 89 : index
    %87 = vector.load %arg2[%c0_118, %c0_119, %c0_120, %c89] : memref<1x1x16x640xbf16, #tpu.memory_space<vmem>>, vector<1x1x16x384xbf16>
    %88 = vector.shape_cast %87 : vector<1x1x16x384xbf16> to vector<16x384xbf16>
    %c464 = arith.constant 464 : index
    %c0_121 = arith.constant 0 : index
    %89 = vector.load %arg6[%c464, %c0_121] : memref<784x384xbf16, #tpu.memory_space<vmem>>, vector<16x384xbf16>
    tpu.vector_store %arg6[%c464, %c0_121], %88 {strides = array<i32>} : memref<784x384xbf16, #tpu.memory_space<vmem>>, vector<16x384xbf16>,
    %c0_122 = arith.constant 0 : index
    %c0_123 = arith.constant 0 : index
    %c0_124 = arith.constant 0 : index
    %c90 = arith.constant 90 : index
    %90 = vector.load %arg2[%c0_122, %c0_123, %c0_124, %c90] : memref<1x1x16x640xbf16, #tpu.memory_space<vmem>>, vector<1x1x16x384xbf16>
    %91 = vector.shape_cast %90 : vector<1x1x16x384xbf16> to vector<16x384xbf16>
    %c480 = arith.constant 480 : index
    %c0_125 = arith.constant 0 : index
    %92 = vector.load %arg6[%c480, %c0_125] : memref<784x384xbf16, #tpu.memory_space<vmem>>, vector<16x384xbf16>
    tpu.vector_store %arg6[%c480, %c0_125], %91 {strides = array<i32>} : memref<784x384xbf16, #tpu.memory_space<vmem>>, vector<16x384xbf16>,
    %c0_126 = arith.constant 0 : index
    %c0_127 = arith.constant 0 : index
    %c0_128 = arith.constant 0 : index
    %c91 = arith.constant 91 : index
    %93 = vector.load %arg2[%c0_126, %c0_127, %c0_128, %c91] : memref<1x1x16x640xbf16, #tpu.memory_space<vmem>>, vector<1x1x16x384xbf16>
    %94 = vector.shape_cast %93 : vector<1x1x16x384xbf16> to vector<16x384xbf16>
    %c496 = arith.constant 496 : index
    %c0_129 = arith.constant 0 : index
    %95 = vector.load %arg6[%c496, %c0_129] : memref<784x384xbf16, #tpu.memory_space<vmem>>, vector<16x384xbf16>
    tpu.vector_store %arg6[%c496, %c0_129], %94 {strides = array<i32>} : memref<784x384xbf16, #tpu.memory_space<vmem>>, vector<16x384xbf16>,
    %c0_130 = arith.constant 0 : index
    %c0_131 = arith.constant 0 : index
    %c0_132 = arith.constant 0 : index
    %c92 = arith.constant 92 : index
    %96 = vector.load %arg2[%c0_130, %c0_131, %c0_132, %c92] : memref<1x1x16x640xbf16, #tpu.memory_space<vmem>>, vector<1x1x16x384xbf16>
    %97 = vector.shape_cast %96 : vector<1x1x16x384xbf16> to vector<16x384xbf16>
    %c512 = arith.constant 512 : index
    %c0_133 = arith.constant 0 : index
    %98 = vector.load %arg6[%c512, %c0_133] : memref<784x384xbf16, #tpu.memory_space<vmem>>, vector<16x384xbf16>
    tpu.vector_store %arg6[%c512, %c0_133], %97 {strides = array<i32>} : memref<784x384xbf16, #tpu.memory_space<vmem>>, vector<16x384xbf16>,
    %c0_134 = arith.constant 0 : index
    %c0_135 = arith.constant 0 : index
    %c0_136 = arith.constant 0 : index
    %c93 = arith.constant 93 : index
    %99 = vector.load %arg2[%c0_134, %c0_135, %c0_136, %c93] : memref<1x1x16x640xbf16, #tpu.memory_space<vmem>>, vector<1x1x16x384xbf16>
    %100 = vector.shape_cast %99 : vector<1x1x16x384xbf16> to vector<16x384xbf16>
    %c528 = arith.constant 528 : index
    %c0_137 = arith.constant 0 : index
    %101 = vector.load %arg6[%c528, %c0_137] : memref<784x384xbf16, #tpu.memory_space<vmem>>, vector<16x384xbf16>
    tpu.vector_store %arg6[%c528, %c0_137], %100 {strides = array<i32>} : memref<784x384xbf16, #tpu.memory_space<vmem>>, vector<16x384xbf16>,
    %c0_138 = arith.constant 0 : index
    %c0_139 = arith.constant 0 : index
    %c0_140 = arith.constant 0 : index
    %c94 = arith.constant 94 : index
    %102 = vector.load %arg2[%c0_138, %c0_139, %c0_140, %c94] : memref<1x1x16x640xbf16, #tpu.memory_space<vmem>>, vector<1x1x16x384xbf16>
    %103 = vector.shape_cast %102 : vector<1x1x16x384xbf16> to vector<16x384xbf16>
    %c544 = arith.constant 544 : index
    %c0_141 = arith.constant 0 : index
    %104 = vector.load %arg6[%c544, %c0_141] : memref<784x384xbf16, #tpu.memory_space<vmem>>, vector<16x384xbf16>
    tpu.vector_store %arg6[%c544, %c0_141], %103 {strides = array<i32>} : memref<784x384xbf16, #tpu.memory_space<vmem>>, vector<16x384xbf16>,
    %c0_142 = arith.constant 0 : index
    %c0_143 = arith.constant 0 : index
    %c0_144 = arith.constant 0 : index
    %c110 = arith.constant 110 : index
    %105 = vector.load %arg2[%c0_142, %c0_143, %c0_144, %c110] : memref<1x1x16x640xbf16, #tpu.memory_space<vmem>>, vector<1x1x16x384xbf16>
    %106 = vector.shape_cast %105 : vector<1x1x16x384xbf16> to vector<16x384xbf16>
    %c560 = arith.constant 560 : index
    %c0_145 = arith.constant 0 : index
    %107 = vector.load %arg6[%c560, %c0_145] : memref<784x384xbf16, #tpu.memory_space<vmem>>, vector<16x384xbf16>
    tpu.vector_store %arg6[%c560, %c0_145], %106 {strides = array<i32>} : memref<784x384xbf16, #tpu.memory_space<vmem>>, vector<16x384xbf16>,
    %c0_146 = arith.constant 0 : index
    %c0_147 = arith.constant 0 : index
    %c0_148 = arith.constant 0 : index
    %c111 = arith.constant 111 : index
    %108 = vector.load %arg2[%c0_146, %c0_147, %c0_148, %c111] : memref<1x1x16x640xbf16, #tpu.memory_space<vmem>>, vector<1x1x16x384xbf16>
    %109 = vector.shape_cast %108 : vector<1x1x16x384xbf16> to vector<16x384xbf16>
    %c576 = arith.constant 576 : index
    %c0_149 = arith.constant 0 : index
    %110 = vector.load %arg6[%c576, %c0_149] : memref<784x384xbf16, #tpu.memory_space<vmem>>, vector<16x384xbf16>
    tpu.vector_store %arg6[%c576, %c0_149], %109 {strides = array<i32>} : memref<784x384xbf16, #tpu.memory_space<vmem>>, vector<16x384xbf16>,
    %c0_150 = arith.constant 0 : index
    %c0_151 = arith.constant 0 : index
    %c0_152 = arith.constant 0 : index
    %c112_153 = arith.constant 112 : index
    %111 = vector.load %arg2[%c0_150, %c0_151, %c0_152, %c112_153] : memref<1x1x16x640xbf16, #tpu.memory_space<vmem>>, vector<1x1x16x384xbf16>
    %112 = vector.shape_cast %111 : vector<1x1x16x384xbf16> to vector<16x384xbf16>
    %c592 = arith.constant 592 : index
    %c0_154 = arith.constant 0 : index
    %113 = vector.load %arg6[%c592, %c0_154] : memref<784x384xbf16, #tpu.memory_space<vmem>>, vector<16x384xbf16>
    tpu.vector_store %arg6[%c592, %c0_154], %112 {strides = array<i32>} : memref<784x384xbf16, #tpu.memory_space<vmem>>, vector<16x384xbf16>,
    %c0_155 = arith.constant 0 : index
    %c0_156 = arith.constant 0 : index
    %c0_157 = arith.constant 0 : index
    %c113 = arith.constant 113 : index
    %114 = vector.load %arg2[%c0_155, %c0_156, %c0_157, %c113] : memref<1x1x16x640xbf16, #tpu.memory_space<vmem>>, vector<1x1x16x384xbf16>
    %115 = vector.shape_cast %114 : vector<1x1x16x384xbf16> to vector<16x384xbf16>
    %c608 = arith.constant 608 : index
    %c0_158 = arith.constant 0 : index
    %116 = vector.load %arg6[%c608, %c0_158] : memref<784x384xbf16, #tpu.memory_space<vmem>>, vector<16x384xbf16>
    tpu.vector_store %arg6[%c608, %c0_158], %115 {strides = array<i32>} : memref<784x384xbf16, #tpu.memory_space<vmem>>, vector<16x384xbf16>,
    %c0_159 = arith.constant 0 : index
    %c0_160 = arith.constant 0 : index
    %c0_161 = arith.constant 0 : index
    %c114 = arith.constant 114 : index
    %117 = vector.load %arg2[%c0_159, %c0_160, %c0_161, %c114] : memref<1x1x16x640xbf16, #tpu.memory_space<vmem>>, vector<1x1x16x384xbf16>
    %118 = vector.shape_cast %117 : vector<1x1x16x384xbf16> to vector<16x384xbf16>
    %c624 = arith.constant 624 : index
    %c0_162 = arith.constant 0 : index
    %119 = vector.load %arg6[%c624, %c0_162] : memref<784x384xbf16, #tpu.memory_space<vmem>>, vector<16x384xbf16>
    tpu.vector_store %arg6[%c624, %c0_162], %118 {strides = array<i32>} : memref<784x384xbf16, #tpu.memory_space<vmem>>, vector<16x384xbf16>,
    %c0_163 = arith.constant 0 : index
    %c0_164 = arith.constant 0 : index
    %c0_165 = arith.constant 0 : index
    %c115 = arith.constant 115 : index
    %120 = vector.load %arg2[%c0_163, %c0_164, %c0_165, %c115] : memref<1x1x16x640xbf16, #tpu.memory_space<vmem>>, vector<1x1x16x384xbf16>
    %121 = vector.shape_cast %120 : vector<1x1x16x384xbf16> to vector<16x384xbf16>
    %c640 = arith.constant 640 : index
    %c0_166 = arith.constant 0 : index
    %122 = vector.load %arg6[%c640, %c0_166] : memref<784x384xbf16, #tpu.memory_space<vmem>>, vector<16x384xbf16>
    tpu.vector_store %arg6[%c640, %c0_166], %121 {strides = array<i32>} : memref<784x384xbf16, #tpu.memory_space<vmem>>, vector<16x384xbf16>,
    %c0_167 = arith.constant 0 : index
    %c0_168 = arith.constant 0 : index
    %c0_169 = arith.constant 0 : index
    %c116 = arith.constant 116 : index
    %123 = vector.load %arg2[%c0_167, %c0_168, %c0_169, %c116] : memref<1x1x16x640xbf16, #tpu.memory_space<vmem>>, vector<1x1x16x384xbf16>
    %124 = vector.shape_cast %123 : vector<1x1x16x384xbf16> to vector<16x384xbf16>
    %c656 = arith.constant 656 : index
    %c0_170 = arith.constant 0 : index
    %125 = vector.load %arg6[%c656, %c0_170] : memref<784x384xbf16, #tpu.memory_space<vmem>>, vector<16x384xbf16>
    tpu.vector_store %arg6[%c656, %c0_170], %124 {strides = array<i32>} : memref<784x384xbf16, #tpu.memory_space<vmem>>, vector<16x384xbf16>,
    %c0_171 = arith.constant 0 : index
    %c0_172 = arith.constant 0 : index
    %c0_173 = arith.constant 0 : index
    %c132 = arith.constant 132 : index
    %126 = vector.load %arg2[%c0_171, %c0_172, %c0_173, %c132] : memref<1x1x16x640xbf16, #tpu.memory_space<vmem>>, vector<1x1x16x384xbf16>
    %127 = vector.shape_cast %126 : vector<1x1x16x384xbf16> to vector<16x384xbf16>
    %c672 = arith.constant 672 : index
    %c0_174 = arith.constant 0 : index
    %128 = vector.load %arg6[%c672, %c0_174] : memref<784x384xbf16, #tpu.memory_space<vmem>>, vector<16x384xbf16>
    tpu.vector_store %arg6[%c672, %c0_174], %127 {strides = array<i32>} : memref<784x384xbf16, #tpu.memory_space<vmem>>, vector<16x384xbf16>,
    %c0_175 = arith.constant 0 : index
    %c0_176 = arith.constant 0 : index
    %c0_177 = arith.constant 0 : index
    %c133 = arith.constant 133 : index
    %129 = vector.load %arg2[%c0_175, %c0_176, %c0_177, %c133] : memref<1x1x16x640xbf16, #tpu.memory_space<vmem>>, vector<1x1x16x384xbf16>
    %130 = vector.shape_cast %129 : vector<1x1x16x384xbf16> to vector<16x384xbf16>
    %c688 = arith.constant 688 : index
    %c0_178 = arith.constant 0 : index
    %131 = vector.load %arg6[%c688, %c0_178] : memref<784x384xbf16, #tpu.memory_space<vmem>>, vector<16x384xbf16>
    tpu.vector_store %arg6[%c688, %c0_178], %130 {strides = array<i32>} : memref<784x384xbf16, #tpu.memory_space<vmem>>, vector<16x384xbf16>,
    %c0_179 = arith.constant 0 : index
    %c0_180 = arith.constant 0 : index
    %c0_181 = arith.constant 0 : index
    %c134 = arith.constant 134 : index
    %132 = vector.load %arg2[%c0_179, %c0_180, %c0_181, %c134] : memref<1x1x16x640xbf16, #tpu.memory_space<vmem>>, vector<1x1x16x384xbf16>
    %133 = vector.shape_cast %132 : vector<1x1x16x384xbf16> to vector<16x384xbf16>
    %c704 = arith.constant 704 : index
    %c0_182 = arith.constant 0 : index
    %134 = vector.load %arg6[%c704, %c0_182] : memref<784x384xbf16, #tpu.memory_space<vmem>>, vector<16x384xbf16>
    tpu.vector_store %arg6[%c704, %c0_182], %133 {strides = array<i32>} : memref<784x384xbf16, #tpu.memory_space<vmem>>, vector<16x384xbf16>,
    %c0_183 = arith.constant 0 : index
    %c0_184 = arith.constant 0 : index
    %c0_185 = arith.constant 0 : index
    %c135 = arith.constant 135 : index
    %135 = vector.load %arg2[%c0_183, %c0_184, %c0_185, %c135] : memref<1x1x16x640xbf16, #tpu.memory_space<vmem>>, vector<1x1x16x384xbf16>
    %136 = vector.shape_cast %135 : vector<1x1x16x384xbf16> to vector<16x384xbf16>
    %c720 = arith.constant 720 : index
    %c0_186 = arith.constant 0 : index
    %137 = vector.load %arg6[%c720, %c0_186] : memref<784x384xbf16, #tpu.memory_space<vmem>>, vector<16x384xbf16>
    tpu.vector_store %arg6[%c720, %c0_186], %136 {strides = array<i32>} : memref<784x384xbf16, #tpu.memory_space<vmem>>, vector<16x384xbf16>,
    %c0_187 = arith.constant 0 : index
    %c0_188 = arith.constant 0 : index
    %c0_189 = arith.constant 0 : index
    %c136 = arith.constant 136 : index
    %138 = vector.load %arg2[%c0_187, %c0_188, %c0_189, %c136] : memref<1x1x16x640xbf16, #tpu.memory_space<vmem>>, vector<1x1x16x384xbf16>
    %139 = vector.shape_cast %138 : vector<1x1x16x384xbf16> to vector<16x384xbf16>
    %c736 = arith.constant 736 : index
    %c0_190 = arith.constant 0 : index
    %140 = vector.load %arg6[%c736, %c0_190] : memref<784x384xbf16, #tpu.memory_space<vmem>>, vector<16x384xbf16>
    tpu.vector_store %arg6[%c736, %c0_190], %139 {strides = array<i32>} : memref<784x384xbf16, #tpu.memory_space<vmem>>, vector<16x384xbf16>,
    %c0_191 = arith.constant 0 : index
    %c0_192 = arith.constant 0 : index
    %c0_193 = arith.constant 0 : index
    %c137 = arith.constant 137 : index
    %141 = vector.load %arg2[%c0_191, %c0_192, %c0_193, %c137] : memref<1x1x16x640xbf16, #tpu.memory_space<vmem>>, vector<1x1x16x384xbf16>
    %142 = vector.shape_cast %141 : vector<1x1x16x384xbf16> to vector<16x384xbf16>
    %c752 = arith.constant 752 : index
    %c0_194 = arith.constant 0 : index
    %143 = vector.load %arg6[%c752, %c0_194] : memref<784x384xbf16, #tpu.memory_space<vmem>>, vector<16x384xbf16>
    tpu.vector_store %arg6[%c752, %c0_194], %142 {strides = array<i32>} : memref<784x384xbf16, #tpu.memory_space<vmem>>, vector<16x384xbf16>,
    %c0_195 = arith.constant 0 : index
    %c0_196 = arith.constant 0 : index
    %c0_197 = arith.constant 0 : index
    %c138 = arith.constant 138 : index
    %144 = vector.load %arg2[%c0_195, %c0_196, %c0_197, %c138] : memref<1x1x16x640xbf16, #tpu.memory_space<vmem>>, vector<1x1x16x384xbf16>
    %145 = vector.shape_cast %144 : vector<1x1x16x384xbf16> to vector<16x384xbf16>
    %c768 = arith.constant 768 : index
    %c0_198 = arith.constant 0 : index
    %146 = vector.load %arg6[%c768, %c0_198] : memref<784x384xbf16, #tpu.memory_space<vmem>>, vector<16x384xbf16>
    tpu.vector_store %arg6[%c768, %c0_198], %145 {strides = array<i32>} : memref<784x384xbf16, #tpu.memory_space<vmem>>, vector<16x384xbf16>,
    %c0_199 = arith.constant 0 : index
    %c0_200 = arith.constant 0 : index
    %147 = vector.load %arg3[%c0_199, %c0_200] : memref<8x784xbf16, #tpu.memory_space<vmem>>, vector<8x784xbf16>
    %c0_201 = arith.constant 0 : index
    %c0_202 = arith.constant 0 : index
    %148 = vector.load %arg6[%c0_201, %c0_202] : memref<784x384xbf16, #tpu.memory_space<vmem>>, vector<784x384xbf16>
    %cst = arith.constant dense<0.000000e+00> : vector<8x384xf32>
    %149 = tpu.matmul %147, %148, %cst {dimension_numbers = #tpu.dot_dimension_numbers<[1], [0], [0], [1], [0, 0, 1, 1], [], []>} : vector<8x784xbf16>, vector<784x384xbf16>, vector<8x384xf32> -> vector<8x384xf32>
    %c0_203 = arith.constant 0 : index
    %c0_204 = arith.constant 0 : index
    %150 = vector.load %arg4[%c0_203, %c0_204] : memref<8x1xf32, #tpu.memory_space<vmem>>, vector<8x1xf32>
    %151 = vector.broadcast %150 : vector<8x1xf32> to vector<8x384xf32>
    %152 = arith.addf %149, %151 : vector<8x384xf32>
    %153 = math.tanh %152 : vector<8x384xf32>
    %c0_205 = arith.constant 0 : index
    %c0_206 = arith.constant 0 : index
    %c0_207 = arith.constant 0 : index
    %154 = vector.load %arg5[%c0_205, %c0_206, %c0_207] : memref<1x8x384xf32, #tpu.memory_space<vmem>>, vector<1x8x384xf32>
    %155 = vector.shape_cast %154 : vector<1x8x384xf32> to vector<8x384xf32>
    %156 = vector.shape_cast %153 : vector<8x384xf32> to vector<1x8x384xf32>
    tpu.vector_store %arg5[%c0_205, %c0_206, %c0_207], %156 {strides = array<i32>} : memref<1x8x384xf32, #tpu.memory_space<vmem>>, vector<1x8x384xf32>,
    return
  }
  func.func @transform_0(%arg0: i32, %arg1: i32) -> (i32, i32, i32, i32) {
    %c0_i32 = arith.constant 0 : i32
    %c0_i32_0 = arith.constant 0 : i32
    %c0_i32_1 = arith.constant 0 : i32
    return %arg0, %arg1, %c0_i32, %c0_i32_0 : i32, i32, i32, i32
  }
  func.func @transform_1(%arg0: i32, %arg1: i32) -> (i32, i32) {
    %c0_i32 = arith.constant 0 : i32
    %c0_i32_0 = arith.constant 0 : i32
    %c0_i32_1 = arith.constant 0 : i32
    return %c0_i32, %c0_i32_0 : i32, i32
  }
  func.func @transform_2(%arg0: i32, %arg1: i32) -> (i32, i32) {
    %c0_i32 = arith.constant 0 : i32
    %c0_i32_0 = arith.constant 0 : i32
    %c0_i32_1 = arith.constant 0 : i32
    return %c0_i32, %c0_i32_0 : i32, i32
  }
  func.func @transform_3(%arg0: i32, %arg1: i32) -> (i32, i32, i32) {
    %c0_i32 = arith.constant 0 : i32
    %c0_i32_0 = arith.constant 0 : i32
    return %arg0, %c0_i32, %arg1 : i32, i32, i32
  }
}

</mosaic_0001>

<llo_original>
// kernel: tpu_custom_call.1
$region0: #{tpu_custom_call.1}
  #allocation0 [shape = 'u32[]', space=smem, size = 0x4, offset = 0x4, fixed_abs, tag = 'smem constant byte address 0x4 - core index']
  #allocation1 [shape = 'u32[144,128]{1,0:T(1,128)}', space=vmem, size = 0x12000, scoped, tag = 'internal scratch']
  #allocation2 [shape = 'bf16[784,384]{1,0:T(16,128)(2,1)}', space=vmem, size = 0x93000, scoped, tag = 'scratch operand']
  %s0 = inlined_call_operand.hbm [shape: bf16[2,1,16,640], index: 0, kind: input, shape index: {}]
  %s1 = inlined_call_operand.hbm [shape: bf16[8,784], index: 1, kind: input, shape index: {}]
  %s2 = inlined_call_operand.vmem [shape: f32[8,1], index: 2, kind: input, shape index: {}]
  %s3 = inlined_call_operand.hbm [shape: f32[2,8,384], index: 3, kind: output, shape index: {}]
  %s4 = sld [smem:[#allocation0]]
  $region53: #{tpu_custom_call.1} parent=0
    _
  %s6 = ssub.s32 1, %s4
  %s7 = scalar_select 0, %s6, %s4
  $region1: #{tpu_custom_call.1} parent=0
    #allocation3 [shape = 'u8[40960]{0}', space=vmem, size = 0xa000, scoped, tag = 'input window, operand 0']
    #allocation4 [shape = 's32[2]{0}', space=sflag, size = 0x8, scoped, tag = 'scoped memory for tpu_custom_call.1']
    #allocation5 [shape = 's32[2]{0}', space=sflag, size = 0x8, scoped, tag = 'scoped memory for tpu_custom_call.1']
    #allocation6 [shape = 'u8[14336]{0}', space=vmem, size = 0x3800, scoped, tag = 'input window, operand 1, single buffered']
    #allocation7 [shape = 's32[1]{0}', space=sflag, size = 0x4, scoped, tag = 'scoped memory for tpu_custom_call.1']
    #allocation8 [shape = 'u8[24576]{0}', space=vmem, size = 0x6000, scoped, tag = 'output window, operand 0']
    %8 = vsyncpa [#allocation4], 0
    %s9 = scalar_lea.sflag [#allocation4], 1
    %10 = vsyncpa %s9, 0
    %11 = vsyncpa [#allocation7], 0
    %12 = vsyncpa [#allocation5], 0
    %s13 = scalar_lea.sflag [#allocation5], 1
    %14 = vsyncpa %s13, 0
    loop: start=0, step=1, limit=4
    $region2: #{tpu_custom_call.1} parent=1 // loop_pre_header
      _
    $region3: #{tpu_custom_call.1} parent=1 // loop_header
      %s16 = sphi 0, %s20
      %p17 = scmp.ge.s32.totalorder %s16, 4
      %s23 = sphi 0, %s35
      %s24 = sphi 0, %s31
      %s25 = sphi 0, %s23
      %s26 = sphi 0, %s24
      %s27 = sphi 0, %s25
      %s28 = sphi 0, %s26
      %s40 = sphi 0, %s42
      %s43 = sphi 0, %s40
      %s44 = sphi 0, %s43
      %s60 = sphi 0, %s44
      %s64 = sphi 0, %s64
      %s66 = sphi 0, %s64
      %s67 = sphi 0, %s66
      %s81 = sphi 0, %s67
      %s85 = sphi 0, %s85
      %s87 = sphi 0, %s85
      %s88 = sphi 0, %s87
      %s102 = sphi 0, %s88
      %s110 = sphi 0, %s112
      %s113 = sphi 0, %s110
      %s114 = sphi 0, %s113
      %s130 = sphi 0, %s114
    $region4: #{tpu_custom_call.1} parent=1 // loop_header_branch
      %19 = sbr.rel (%p17) target = $region8
    $region5: #{tpu_custom_call.1} parent=1 // loop_body
      %s21 = ssub.s32 %s16, 1
      %s22 = ssub.s32 %s16, 2
      %s29 = sadd.s32 1, %s24
      %p30 = scmp.ge.s32.totalorder %s29, 1
      %s31 = scalar_select %p30, 0, %s29
      %s32 = sadd.s32 1, %s23
      %s33 = scalar_select %p30, %s32, %s23
      %p34 = scmp.ge.s32.totalorder %s33, 2
      %s35 = scalar_select %p34, 0, %s33
      %s36 = ssub.s32 %s23, %s35
      %s37 = ssub.s32 %s24, %s31
      %s38 = sor.u32 %s36, %s37
      %p39 = scmp.eq.s32.totalorder %s38, 0
      %s41 = sadd.s32 %s40, 1
      %s42 = scalar_select %p39, %s40, %s41
      %p45 = pneg %p39
      %p46 = scmp.eq.s32.totalorder %s16, 1
      %p47 = por %p45, %p46
      %p48 = scmp.ne.s32.totalorder %s40, %s43
      %p49 = scmp.eq.s32.totalorder %s16, 0
      %p50 = por %p48, %p49
      %p51 = scmp.ne.s32.totalorder %s40, %s43
      %p52 = scmp.eq.s32.totalorder %s21, 1
      %p53 = por %p51, %p52
      %p54 = scmp.ne.s32.totalorder %s43, %s44
      %p55 = scmp.eq.s32.totalorder %s21, 0
      %p56 = por %p54, %p55
      %p57 = scmp.ne.s32.totalorder %s43, %s44
      %p58 = scmp.eq.s32.totalorder %s22, 1
      %p59 = por %p57, %p58
      %p61 = scmp.ne.s32.totalorder %s44, %s60
      %p62 = scmp.eq.s32.totalorder %s22, 0
      %p63 = por %p61, %p62
      %s65 = sadd.s32 %s64, 1
      %p68 = scmp.eq.s32.totalorder %s16, 1
      %p69 = scmp.ne.s32.totalorder %s64, %s66
      %p70 = scmp.eq.s32.totalorder %s16, 0
      %p71 = por %p69, %p70
      %p72 = scmp.ne.s32.totalorder %s64, %s66
      %p73 = scmp.eq.s32.totalorder %s21, 1
      %p74 = por %p72, %p73
      %p75 = scmp.ne.s32.totalorder %s66, %s67
      %p76 = scmp.eq.s32.totalorder %s21, 0
      %p77 = por %p75, %p76
      %p78 = scmp.ne.s32.totalorder %s66, %s67
      %p79 = scmp.eq.s32.totalorder %s22, 1
      %p80 = por %p78, %p79
      %p82 = scmp.ne.s32.totalorder %s67, %s81
      %p83 = scmp.eq.s32.totalorder %s22, 0
      %p84 = por %p82, %p83
      %s86 = sadd.s32 %s85, 1
      %p89 = scmp.eq.s32.totalorder %s16, 1
      %p90 = scmp.ne.s32.totalorder %s85, %s87
      %p91 = scmp.eq.s32.totalorder %s16, 0
      %p92 = por %p90, %p91
      %p93 = scmp.ne.s32.totalorder %s85, %s87
      %p94 = scmp.eq.s32.totalorder %s21, 1
      %p95 = por %p93, %p94
      %p96 = scmp.ne.s32.totalorder %s87, %s88
      %p97 = scmp.eq.s32.totalorder %s21, 0
      %p98 = por %p96, %p97
      %p99 = scmp.ne.s32.totalorder %s87, %s88
      %p100 = scmp.eq.s32.totalorder %s22, 1
      %p101 = por %p99, %p100
      %p103 = scmp.ne.s32.totalorder %s88, %s102
      %p104 = scmp.eq.s32.totalorder %s22, 0
      %p105 = por %p103, %p104
      %s106 = ssub.s32 %s23, %s35
      %s107 = ssub.s32 %s24, %s31
      %s108 = sor.u32 %s106, %s107
      %p109 = scmp.eq.s32.totalorder %s108, 0
      %s111 = sadd.s32 %s110, 1
      %s112 = scalar_select %p109, %s110, %s111
      %p115 = pneg %p109
      %p116 = scmp.eq.s32.totalorder %s16, 1
      %p117 = por %p115, %p116
      %p118 = scmp.ne.s32.totalorder %s110, %s113
      %p119 = scmp.eq.s32.totalorder %s16, 0
      %p120 = por %p118, %p119
      %p121 = scmp.ne.s32.totalorder %s110, %s113
      %p122 = scmp.eq.s32.totalorder %s21, 1
      %p123 = por %p121, %p122
      %p124 = scmp.ne.s32.totalorder %s113, %s114
      %p125 = scmp.eq.s32.totalorder %s21, 0
      %p126 = por %p124, %p125
      %p127 = scmp.ne.s32.totalorder %s113, %s114
      %p128 = scmp.eq.s32.totalorder %s22, 1
      %p129 = por %p127, %p128
      %p131 = scmp.ne.s32.totalorder %s114, %s130
      %p132 = scmp.eq.s32.totalorder %s22, 0
      %p133 = por %p131, %p132
      %p134 = scmp.le.s32.totalorder 1, %s16
      %p135 = scmp.lt.s32.totalorder %s16, 3
      %p136 = pnand %p134, %p135
      %p137 = pneg %p136
      // Predicated region
      $region9: #{tpu_custom_call.1} parent=5 // pred_check
        _
      $region10: #{tpu_custom_call.1} parent=5 // pred_check_branch
        %139 = sbr.rel (%p136) target = $region12
      $region11: #{tpu_custom_call.1} parent=5 // pred_region
        %s140 = ssub.s32 %s16, 1
        // Predicated region
        $region13: #{tpu_custom_call.1} parent=11 // pred_check
          %p141 = pneg %p77
        $region14: #{tpu_custom_call.1} parent=11 // pred_check_branch
          %143 = sbr.rel (%p141) target = $region16
        $region15: #{tpu_custom_call.1} parent=11 // pred_region
          %s145 = ssub.s32 448, 448
          %146 = vsyncadd [#allocation7], %s145
          %s148 = sshll.u32 [#allocation6], 4
          %s149 = int_to_ptr.vmem [resolvable:$true] %s148
          %151 = dma.hbm_to_vmem [thread:$0]  %s1, 448, %s149, [#allocation7]
        $region16: #{tpu_custom_call.1} parent=11 // pred_fallthru
          _
        // Predicated region
        $region17: #{tpu_custom_call.1} parent=11 // pred_check
          %p152 = pneg %p98
        $region18: #{tpu_custom_call.1} parent=11 // pred_check_branch
          %154 = sbr.rel (%p152) target = $region20
        $region19: #{tpu_custom_call.1} parent=11 // pred_region
          _
        $region20: #{tpu_custom_call.1} parent=11 // pred_fallthru
          _
      $region12: #{tpu_custom_call.1} parent=5 // pred_fallthru
        _
      %p155 = scmp.lt.s32.totalorder %s16, 2
      // Predicated region
      $region21: #{tpu_custom_call.1} parent=5 // pred_check
        %p156 = pneg %p155
      $region22: #{tpu_custom_call.1} parent=5 // pred_check_branch
        %158 = sbr.rel (%p156) target = $region24
      $region23: #{tpu_custom_call.1} parent=5 // pred_region
        // Predicated region
        $region25: #{tpu_custom_call.1} parent=23 // pred_check
          %p159 = pneg %p50
        $region26: #{tpu_custom_call.1} parent=23 // pred_check_branch
          %161 = sbr.rel (%p159) target = $region28
        $region27: #{tpu_custom_call.1} parent=23 // pred_region
          %s162 = sand.u32 %s40, 1
          %s163 = scalar_lea.sflag [#allocation4], %s162
          %s164 = sand.u32 %s40, 1
          %s165 = smul.addr %s164, 40
          %s166 = scalar_lea.vmem [#allocation3], %s165
          %s168 = ssub.s32 640, 640
          %169 = vsyncadd %s163, %s168
          %s170 = smul.addr %s24, 10
          %s171 = smul.addr %s23, 10
          %s172 = sadd.s32 %s170, %s171
          %s173 = smul.addr %s172, 64
          %s174 = scalar_lea.hbm %s0, %s173
          %s175 = sshll.u32 %s166, 4
          %s176 = int_to_ptr.vmem [resolvable:$true] %s175
          %181 = dma.hbm_to_vmem [thread:$0]  %s174, 640, %s176, %s163, 320, 320, 20
        $region28: #{tpu_custom_call.1} parent=23 // pred_fallthru
          _
      $region24: #{tpu_custom_call.1} parent=5 // pred_fallthru
        _
      %p182 = scmp.le.s32.totalorder 1, %s16
      %p183 = scmp.lt.s32.totalorder %s16, 3
      %p184 = pnand %p182, %p183
      %p185 = pneg %p184
      // Predicated region
      $region29: #{tpu_custom_call.1} parent=5 // pred_check
        _
      $region30: #{tpu_custom_call.1} parent=5 // pred_check_branch
        %187 = sbr.rel (%p184) target = $region32
      $region31: #{tpu_custom_call.1} parent=5 // pred_region
        %s188 = ssub.s32 %s16, 1
        %s189 = sand.u32 %s43, 1
        %s190 = scalar_lea.sflag [#allocation4], %s189
        %s191 = sand.u32 %s43, 1
        %s192 = smul.addr %s191, 40
        %s193 = scalar_lea.vmem [#allocation3], %s192
        // Predicated region
        $region33: #{tpu_custom_call.1} parent=31 // pred_check
          %p194 = pneg %p56
        $region34: #{tpu_custom_call.1} parent=31 // pred_check_branch
          %196 = sbr.rel (%p194) target = $region36
        $region35: #{tpu_custom_call.1} parent=31 // pred_region
          %197 = dma.done %s190, 640
        $region36: #{tpu_custom_call.1} parent=31 // pred_fallthru
          _
        // Predicated region
        $region37: #{tpu_custom_call.1} parent=31 // pred_check
          %p198 = pneg %p77
        $region38: #{tpu_custom_call.1} parent=31 // pred_check_branch
          %200 = sbr.rel (%p198) target = $region40
        $region39: #{tpu_custom_call.1} parent=31 // pred_region
          %201 = dma.done [#allocation7], 448
        $region40: #{tpu_custom_call.1} parent=31 // pred_fallthru
          _
        %s202 = sand.u32 %s43, 1
        %s203 = scalar_lea.sflag [#allocation4], %s202
        %s204 = sand.u32 %s43, 1
        %s205 = smul.addr %s204, 40
        %s206 = scalar_lea.vmem [#allocation3], %s205
        %p207 = pneg %p56
        %p208 = pneg %p53
        %p209 = pneg %p77
        %p210 = pneg %p74
        %p211 = pneg %p98
        %p212 = pneg %p95
        %p213 = pneg %p126
        %p214 = pneg %p123
        %s215 = sand.u32 %s113, 1
        %s216 = scalar_lea.sflag [#allocation5], %s215
        %s217 = sand.u32 %s113, 1
        %s218 = smul.addr %s217, 24
        %s219 = scalar_lea.vmem [#allocation8], %s218
        %s220 = smul.u32 3, %s26
        %v222 = vld [vmem:[%s193] sm:$0xff]
        %v223 = vld [vmem:[%s193 + $0x8] sm:$0xf]
        %v224 = vld [vmem:[%s193 + $0x14] sm:$0xff]
        %v225 = vld [vmem:[%s193 + $0x1c] sm:$0xf]
        %v230 = vunpack.c.l.b16 %v222
        %v231 = vunpack.c.h.b16 %v222
        %v232 = vunpack.c.l.b16 %v223
        %v233 = vunpack.c.l.b16 %v224
        %v234 = vunpack.c.h.b16 %v224
        %v235 = vunpack.c.l.b16 %v225
        %v236 = vpack.c.b16 %v233, %v230
        %v237 = vpack.c.b16 %v234, %v231
        %v238 = vpack.c.b16 %v235, %v232
        %242 = vst [vmem:[#allocation2] sm:$0xff] %v236
        %243 = vst [vmem:[#allocation2 + $0x8] sm:$0xff] %v237
        %244 = vst [vmem:[#allocation2 + $0x10] sm:$0xff] %v238
        %v245 = vld [vmem:[%s193] sm:$0xff]
        %v246 = vld [vmem:[%s193 + $0x8] sm:$0xff]
        %v247 = vld [vmem:[%s193 + $0x14] sm:$0xff]
        %v248 = vld [vmem:[%s193 + $0x1c] sm:$0xff]
        %v253 = vunpack.c.l.b16 %v245
        %v254 = vunpack.c.h.b16 %v245
        %v255 = vunpack.c.l.b16 %v246
        %v256 = vunpack.c.h.b16 %v246
        %v257 = vunpack.c.l.b16 %v247
        %v258 = vunpack.c.h.b16 %v247
        %v259 = vunpack.c.l.b16 %v248
        %v260 = vunpack.c.h.b16 %v248
        %v261 = vpack.c.b16 %v257, %v253
        %v262 = vpack.c.b16 %v258, %v254
        %v263 = vpack.c.b16 %v259, %v255
        %v264 = vpack.c.b16 %v260, %v256
        %265 = vrot.lane.b32.xlu0 %v261, 127
        %v266 = vpop.permute.xlu0 %265
        %267 = vrot.lane.b32.xlu0 %v262, 127
        %v268 = vpop.permute.xlu0 %267
        %269 = vrot.lane.b32.xlu0 %v263, 127
        %v270 = vpop.permute.xlu0 %269
        %271 = vrot.lane.b32.xlu0 %v264, 127
        %v272 = vpop.permute.xlu0 %271
        %vm273 = vcmask 1039360
        %v274 = vsel %vm273, %v266, %v268
        %v275 = vsel %vm273, %v268, %v270
        %v276 = vsel %vm273, %v270, %v272
        %280 = vst [vmem:[#allocation2 + $0x18] sm:$0xff] %v274
        %281 = vst [vmem:[#allocation2 + $0x20] sm:$0xff] %v275
        %282 = vst [vmem:[#allocation2 + $0x28] sm:$0xff] %v276
        %v283 = vld [vmem:[%s193] sm:$0xff]
        %v284 = vld [vmem:[%s193 + $0x8] sm:$0xff]
        %v285 = vld [vmem:[%s193 + $0x14] sm:$0xff]
        %v286 = vld [vmem:[%s193 + $0x1c] sm:$0xff]
        %v291 = vunpack.c.l.b16 %v283
        %v292 = vunpack.c.h.b16 %v283
        %v293 = vunpack.c.l.b16 %v284
        %v294 = vunpack.c.h.b16 %v284
        %v295 = vunpack.c.l.b16 %v285
        %v296 = vunpack.c.h.b16 %v285
        %v297 = vunpack.c.l.b16 %v286
        %v298 = vunpack.c.h.b16 %v286
        %v299 = vpack.c.b16 %v295, %v291
        %v300 = vpack.c.b16 %v296, %v292
        %v301 = vpack.c.b16 %v297, %v293
        %v302 = vpack.c.b16 %v298, %v294
        %303 = vrot.lane.b32.xlu0 %v299, 126
        %v304 = vpop.permute.xlu0 %303
        %305 = vrot.lane.b32.xlu0 %v300, 126
        %v306 = vpop.permute.xlu0 %305
        %307 = vrot.lane.b32.xlu0 %v301, 126
        %v308 = vpop.permute.xlu0 %307
        %309 = vrot.lane.b32.xlu0 %v302, 126
        %v310 = vpop.permute.xlu0 %309
        %vm311 = vcmask 1031168
        %v312 = vsel %vm311, %v304, %v306
        %v313 = vsel %vm311, %v306, %v308
        %v314 = vsel %vm311, %v308, %v310
        %318 = vst [vmem:[#allocation2 + $0x30] sm:$0xff] %v312
        %319 = vst [vmem:[#allocation2 + $0x38] sm:$0xff] %v313
        %320 = vst [vmem:[#allocation2 + $0x40] sm:$0xff] %v314
        %v321 = vld [vmem:[%s193] sm:$0xff]
        %v322 = vld [vmem:[%s193 + $0x8] sm:$0xff]
        %v323 = vld [vmem:[%s193 + $0x14] sm:$0xff]
        %v324 = vld [vmem:[%s193 + $0x1c] sm:$0xff]
        %v329 = vunpack.c.l.b16 %v321
        %v330 = vunpack.c.h.b16 %v321
        %v331 = vunpack.c.l.b16 %v322
        %v332 = vunpack.c.h.b16 %v322
        %v333 = vunpack.c.l.b16 %v323
        %v334 = vunpack.c.h.b16 %v323
        %v335 = vunpack.c.l.b16 %v324
        %v336 = vunpack.c.h.b16 %v324
        %v337 = vpack.c.b16 %v333, %v329
        %v338 = vpack.c.b16 %v334, %v330
        %v339 = vpack.c.b16 %v335, %v331
        %v340 = vpack.c.b16 %v336, %v332
        %341 = vrot.lane.b32.xlu0 %v337, 125
        %v342 = vpop.permute.xlu0 %341
        %343 = vrot.lane.b32.xlu0 %v338, 125
        %v344 = vpop.permute.xlu0 %343
        %345 = vrot.lane.b32.xlu0 %v339, 125
        %v346 = vpop.permute.xlu0 %345
        %347 = vrot.lane.b32.xlu0 %v340, 125
        %v348 = vpop.permute.xlu0 %347
        %vm349 = vcmask 1022976
        %v350 = vsel %vm349, %v342, %v344
        %v351 = vsel %vm349, %v344, %v346
        %v352 = vsel %vm349, %v346, %v348
        %356 = vst [vmem:[#allocation2 + $0x48] sm:$0xff] %v350
        %357 = vst [vmem:[#allocation2 + $0x50] sm:$0xff] %v351
        %358 = vst [vmem:[#allocation2 + $0x58] sm:$0xff] %v352
        %v359 = vld [vmem:[%s193] sm:$0xff]
        %v360 = vld [vmem:[%s193 + $0x8] sm:$0xff]
        %v361 = vld [vmem:[%s193 + $0x14] sm:$0xff]
        %v362 = vld [vmem:[%s193 + $0x1c] sm:$0xff]
        %v367 = vunpack.c.l.b16 %v359
        %v368 = vunpack.c.h.b16 %v359
        %v369 = vunpack.c.l.b16 %v360
        %v370 = vunpack.c.h.b16 %v360
        %v371 = vunpack.c.l.b16 %v361
        %v372 = vunpack.c.h.b16 %v361
        %v373 = vunpack.c.l.b16 %v362
        %v374 = vunpack.c.h.b16 %v362
        %v375 = vpack.c.b16 %v371, %v367
        %v376 = vpack.c.b16 %v372, %v368
        %v377 = vpack.c.b16 %v373, %v369
        %v378 = vpack.c.b16 %v374, %v370
        %379 = vrot.lane.b32.xlu0 %v375, 124
        %v380 = vpop.permute.xlu0 %379
        %381 = vrot.lane.b32.xlu0 %v376, 124
        %v382 = vpop.permute.xlu0 %381
        %383 = vrot.lane.b32.xlu0 %v377, 124
        %v384 = vpop.permute.xlu0 %383
        %385 = vrot.lane.b32.xlu0 %v378, 124
        %v386 = vpop.permute.xlu0 %385
        %vm387 = vcmask 1014784
        %v388 = vsel %vm387, %v380, %v382
        %v389 = vsel %vm387, %v382, %v384
        %v390 = vsel %vm387, %v384, %v386
        %394 = vst [vmem:[#allocation2 + $0x60] sm:$0xff] %v388
        %395 = vst [vmem:[#allocation2 + $0x68] sm:$0xff] %v389
        %396 = vst [vmem:[#allocation2 + $0x70] sm:$0xff] %v390
        %v397 = vld [vmem:[%s193] sm:$0xff]
        %v398 = vld [vmem:[%s193 + $0x8] sm:$0xff]
        %v399 = vld [vmem:[%s193 + $0x14] sm:$0xff]
        %v400 = vld [vmem:[%s193 + $0x1c] sm:$0xff]
        %v405 = vunpack.c.l.b16 %v397
        %v406 = vunpack.c.h.b16 %v397
        %v407 = vunpack.c.l.b16 %v398
        %v408 = vunpack.c.h.b16 %v398
        %v409 = vunpack.c.l.b16 %v399
        %v410 = vunpack.c.h.b16 %v399
        %v411 = vunpack.c.l.b16 %v400
        %v412 = vunpack.c.h.b16 %v400
        %v413 = vpack.c.b16 %v409, %v405
        %v414 = vpack.c.b16 %v410, %v406
        %v415 = vpack.c.b16 %v411, %v407
        %v416 = vpack.c.b16 %v412, %v408
        %417 = vrot.lane.b32.xlu0 %v413, 123
        %v418 = vpop.permute.xlu0 %417
        %419 = vrot.lane.b32.xlu0 %v414, 123
        %v420 = vpop.permute.xlu0 %419
        %421 = vrot.lane.b32.xlu0 %v415, 123
        %v422 = vpop.permute.xlu0 %421
        %423 = vrot.lane.b32.xlu0 %v416, 123
        %v424 = vpop.permute.xlu0 %423
        %vm425 = vcmask 1006592
        %v426 = vsel %vm425, %v418, %v420
        %v427 = vsel %vm425, %v420, %v422
        %v428 = vsel %vm425, %v422, %v424
        %432 = vst [vmem:[#allocation2 + $0x78] sm:$0xff] %v426
        %433 = vst [vmem:[#allocation2 + $0x80] sm:$0xff] %v427
        %434 = vst [vmem:[#allocation2 + $0x88] sm:$0xff] %v428
        %v435 = vld [vmem:[%s193] sm:$0xff]
        %v436 = vld [vmem:[%s193 + $0x8] sm:$0xff]
        %v437 = vld [vmem:[%s193 + $0x14] sm:$0xff]
        %v438 = vld [vmem:[%s193 + $0x1c] sm:$0xff]
        %v443 = vunpack.c.l.b16 %v435
        %v444 = vunpack.c.h.b16 %v435
        %v445 = vunpack.c.l.b16 %v436
        %v446 = vunpack.c.h.b16 %v436
        %v447 = vunpack.c.l.b16 %v437
        %v448 = vunpack.c.h.b16 %v437
        %v449 = vunpack.c.l.b16 %v438
        %v450 = vunpack.c.h.b16 %v438
        %v451 = vpack.c.b16 %v447, %v443
        %v452 = vpack.c.b16 %v448, %v444
        %v453 = vpack.c.b16 %v449, %v445
        %v454 = vpack.c.b16 %v450, %v446
        %455 = vrot.lane.b32.xlu0 %v451, 122
        %v456 = vpop.permute.xlu0 %455
        %457 = vrot.lane.b32.xlu0 %v452, 122
        %v458 = vpop.permute.xlu0 %457
        %459 = vrot.lane.b32.xlu0 %v453, 122
        %v460 = vpop.permute.xlu0 %459
        %461 = vrot.lane.b32.xlu0 %v454, 122
        %v462 = vpop.permute.xlu0 %461
        %vm463 = vcmask 998400
        %v464 = vsel %vm463, %v456, %v458
        %v465 = vsel %vm463, %v458, %v460
        %v466 = vsel %vm463, %v460, %v462
        %470 = vst [vmem:[#allocation2 + $0x90] sm:$0xff] %v464
        %471 = vst [vmem:[#allocation2 + $0x98] sm:$0xff] %v465
        %472 = vst [vmem:[#allocation2 + $0xa0] sm:$0xff] %v466
        %v473 = vld [vmem:[%s193] sm:$0xff]
        %v474 = vld [vmem:[%s193 + $0x8] sm:$0xff]
        %v475 = vld [vmem:[%s193 + $0x14] sm:$0xff]
        %v476 = vld [vmem:[%s193 + $0x1c] sm:$0xff]
        %v481 = vunpack.c.l.b16 %v473
        %v482 = vunpack.c.h.b16 %v473
        %v483 = vunpack.c.l.b16 %v474
        %v484 = vunpack.c.h.b16 %v474
        %v485 = vunpack.c.l.b16 %v475
        %v486 = vunpack.c.h.b16 %v475
        %v487 = vunpack.c.l.b16 %v476
        %v488 = vunpack.c.h.b16 %v476
        %v489 = vpack.c.b16 %v485, %v481
        %v490 = vpack.c.b16 %v486, %v482
        %v491 = vpack.c.b16 %v487, %v483
        %v492 = vpack.c.b16 %v488, %v484
        %493 = vrot.lane.b32.xlu0 %v489, 106
        %v494 = vpop.permute.xlu0 %493
        %495 = vrot.lane.b32.xlu0 %v490, 106
        %v496 = vpop.permute.xlu0 %495
        %497 = vrot.lane.b32.xlu0 %v491, 106
        %v498 = vpop.permute.xlu0 %497
        %499 = vrot.lane.b32.xlu0 %v492, 106
        %v500 = vpop.permute.xlu0 %499
        %vm501 = vcmask 867328
        %v502 = vsel %vm501, %v494, %v496
        %v503 = vsel %vm501, %v496, %v498
        %v504 = vsel %vm501, %v498, %v500
        %508 = vst [vmem:[#allocation2 + $0xa8] sm:$0xff] %v502
        %509 = vst [vmem:[#allocation2 + $0xb0] sm:$0xff] %v503
        %510 = vst [vmem:[#allocation2 + $0xb8] sm:$0xff] %v504
        %v511 = vld [vmem:[%s193] sm:$0xff]
        %v512 = vld [vmem:[%s193 + $0x8] sm:$0xff]
        %v513 = vld [vmem:[%s193 + $0x14] sm:$0xff]
        %v514 = vld [vmem:[%s193 + $0x1c] sm:$0xff]
        %v519 = vunpack.c.l.b16 %v511
        %v520 = vunpack.c.h.b16 %v511
        %v521 = vunpack.c.l.b16 %v512
        %v522 = vunpack.c.h.b16 %v512
        %v523 = vunpack.c.l.b16 %v513
        %v524 = vunpack.c.h.b16 %v513
        %v525 = vunpack.c.l.b16 %v514
        %v526 = vunpack.c.h.b16 %v514
        %v527 = vpack.c.b16 %v523, %v519
        %v528 = vpack.c.b16 %v524, %v520
        %v529 = vpack.c.b16 %v525, %v521
        %v530 = vpack.c.b16 %v526, %v522
        %531 = vrot.lane.b32.xlu0 %v527, 105
        %v532 = vpop.permute.xlu0 %531
        %533 = vrot.lane.b32.xlu0 %v528, 105
        %v534 = vpop.permute.xlu0 %533
        %535 = vrot.lane.b32.xlu0 %v529, 105
        %v536 = vpop.permute.xlu0 %535
        %537 = vrot.lane.b32.xlu0 %v530, 105
        %v538 = vpop.permute.xlu0 %537
        %vm539 = vcmask 859136
        %v540 = vsel %vm539, %v532, %v534
        %v541 = vsel %vm539, %v534, %v536
        %v542 = vsel %vm539, %v536, %v538
        %546 = vst [vmem:[#allocation2 + $0xc0] sm:$0xff] %v540
        %547 = vst [vmem:[#allocation2 + $0xc8] sm:$0xff] %v541
        %548 = vst [vmem:[#allocation2 + $0xd0] sm:$0xff] %v542
        %v549 = vld [vmem:[%s193] sm:$0xff]
        %v550 = vld [vmem:[%s193 + $0x8] sm:$0xff]
        %v551 = vld [vmem:[%s193 + $0x14] sm:$0xff]
        %v552 = vld [vmem:[%s193 + $0x1c] sm:$0xff]
        %v557 = vunpack.c.l.b16 %v549
        %v558 = vunpack.c.h.b16 %v549
        %v559 = vunpack.c.l.b16 %v550
        %v560 = vunpack.c.h.b16 %v550
        %v561 = vunpack.c.l.b16 %v551
        %v562 = vunpack.c.h.b16 %v551
        %v563 = vunpack.c.l.b16 %v552
        %v564 = vunpack.c.h.b16 %v552
        %v565 = vpack.c.b16 %v561, %v557
        %v566 = vpack.c.b16 %v562, %v558
        %v567 = vpack.c.b16 %v563, %v559
        %v568 = vpack.c.b16 %v564, %v560
        %569 = vrot.lane.b32.xlu0 %v565, 104
        %v570 = vpop.permute.xlu0 %569
        %571 = vrot.lane.b32.xlu0 %v566, 104
        %v572 = vpop.permute.xlu0 %571
        %573 = vrot.lane.b32.xlu0 %v567, 104
        %v574 = vpop.permute.xlu0 %573
        %575 = vrot.lane.b32.xlu0 %v568, 104
        %v576 = vpop.permute.xlu0 %575
        %vm577 = vcmask 850944
        %v578 = vsel %vm577, %v570, %v572
        %v579 = vsel %vm577, %v572, %v574
        %v580 = vsel %vm577, %v574, %v576
        %584 = vst [vmem:[#allocation2 + $0xd8] sm:$0xff] %v578
        %585 = vst [vmem:[#allocation2 + $0xe0] sm:$0xff] %v579
        %586 = vst [vmem:[#allocation2 + $0xe8] sm:$0xff] %v580
        %v587 = vld [vmem:[%s193] sm:$0xff]
        %v588 = vld [vmem:[%s193 + $0x8] sm:$0xff]
        %v589 = vld [vmem:[%s193 + $0x14] sm:$0xff]
        %v590 = vld [vmem:[%s193 + $0x1c] sm:$0xff]
        %v595 = vunpack.c.l.b16 %v587
        %v596 = vunpack.c.h.b16 %v587
        %v597 = vunpack.c.l.b16 %v588
        %v598 = vunpack.c.h.b16 %v588
        %v599 = vunpack.c.l.b16 %v589
        %v600 = vunpack.c.h.b16 %v589
        %v601 = vunpack.c.l.b16 %v590
        %v602 = vunpack.c.h.b16 %v590
        %v603 = vpack.c.b16 %v599, %v595
        %v604 = vpack.c.b16 %v600, %v596
        %v605 = vpack.c.b16 %v601, %v597
        %v606 = vpack.c.b16 %v602, %v598
        %607 = vrot.lane.b32.xlu0 %v603, 103
        %v608 = vpop.permute.xlu0 %607
        %609 = vrot.lane.b32.xlu0 %v604, 103
        %v610 = vpop.permute.xlu0 %609
        %611 = vrot.lane.b32.xlu0 %v605, 103
        %v612 = vpop.permute.xlu0 %611
        %613 = vrot.lane.b32.xlu0 %v606, 103
        %v614 = vpop.permute.xlu0 %613
        %vm615 = vcmask 842752
        %v616 = vsel %vm615, %v608, %v610
        %v617 = vsel %vm615, %v610, %v612
        %v618 = vsel %vm615, %v612, %v614
        %622 = vst [vmem:[#allocation2 + $0xf0] sm:$0xff] %v616
        %623 = vst [vmem:[#allocation2 + $0xf8] sm:$0xff] %v617
        %624 = vst [vmem:[#allocation2 + $0x100] sm:$0xff] %v618
        %v625 = vld [vmem:[%s193] sm:$0xff]
        %v626 = vld [vmem:[%s193 + $0x8] sm:$0xff]
        %v627 = vld [vmem:[%s193 + $0x14] sm:$0xff]
        %v628 = vld [vmem:[%s193 + $0x1c] sm:$0xff]
        %v633 = vunpack.c.l.b16 %v625
        %v634 = vunpack.c.h.b16 %v625
        %v635 = vunpack.c.l.b16 %v626
        %v636 = vunpack.c.h.b16 %v626
        %v637 = vunpack.c.l.b16 %v627
        %v638 = vunpack.c.h.b16 %v627
        %v639 = vunpack.c.l.b16 %v628
        %v640 = vunpack.c.h.b16 %v628
        %v641 = vpack.c.b16 %v637, %v633
        %v642 = vpack.c.b16 %v638, %v634
        %v643 = vpack.c.b16 %v639, %v635
        %v644 = vpack.c.b16 %v640, %v636
        %645 = vrot.lane.b32.xlu0 %v641, 102
        %v646 = vpop.permute.xlu0 %645
        %647 = vrot.lane.b32.xlu0 %v642, 102
        %v648 = vpop.permute.xlu0 %647
        %649 = vrot.lane.b32.xlu0 %v643, 102
        %v650 = vpop.permute.xlu0 %649
        %651 = vrot.lane.b32.xlu0 %v644, 102
        %v652 = vpop.permute.xlu0 %651
        %vm653 = vcmask 834560
        %v654 = vsel %vm653, %v646, %v648
        %v655 = vsel %vm653, %v648, %v650
        %v656 = vsel %vm653, %v650, %v652
        %660 = vst [vmem:[#allocation2 + $0x108] sm:$0xff] %v654
        %661 = vst [vmem:[#allocation2 + $0x110] sm:$0xff] %v655
        %662 = vst [vmem:[#allocation2 + $0x118] sm:$0xff] %v656
        %v663 = vld [vmem:[%s193] sm:$0xff]
        %v664 = vld [vmem:[%s193 + $0x8] sm:$0xff]
        %v665 = vld [vmem:[%s193 + $0x14] sm:$0xff]
        %v666 = vld [vmem:[%s193 + $0x1c] sm:$0xff]
        %v671 = vunpack.c.l.b16 %v663
        %v672 = vunpack.c.h.b16 %v663
        %v673 = vunpack.c.l.b16 %v664
        %v674 = vunpack.c.h.b16 %v664
        %v675 = vunpack.c.l.b16 %v665
        %v676 = vunpack.c.h.b16 %v665
        %v677 = vunpack.c.l.b16 %v666
        %v678 = vunpack.c.h.b16 %v666
        %v679 = vpack.c.b16 %v675, %v671
        %v680 = vpack.c.b16 %v676, %v672
        %v681 = vpack.c.b16 %v677, %v673
        %v682 = vpack.c.b16 %v678, %v674
        %683 = vrot.lane.b32.xlu0 %v679, 101
        %v684 = vpop.permute.xlu0 %683
        %685 = vrot.lane.b32.xlu0 %v680, 101
        %v686 = vpop.permute.xlu0 %685
        %687 = vrot.lane.b32.xlu0 %v681, 101
        %v688 = vpop.permute.xlu0 %687
        %689 = vrot.lane.b32.xlu0 %v682, 101
        %v690 = vpop.permute.xlu0 %689
        %vm691 = vcmask 826368
        %v692 = vsel %vm691, %v684, %v686
        %v693 = vsel %vm691, %v686, %v688
        %v694 = vsel %vm691, %v688, %v690
        %698 = vst [vmem:[#allocation2 + $0x120] sm:$0xff] %v692
        %699 = vst [vmem:[#allocation2 + $0x128] sm:$0xff] %v693
        %700 = vst [vmem:[#allocation2 + $0x130] sm:$0xff] %v694
        %v701 = vld [vmem:[%s193] sm:$0xff]
        %v702 = vld [vmem:[%s193 + $0x8] sm:$0xff]
        %v703 = vld [vmem:[%s193 + $0x14] sm:$0xff]
        %v704 = vld [vmem:[%s193 + $0x1c] sm:$0xff]
        %v709 = vunpack.c.l.b16 %v701
        %v710 = vunpack.c.h.b16 %v701
        %v711 = vunpack.c.l.b16 %v702
        %v712 = vunpack.c.h.b16 %v702
        %v713 = vunpack.c.l.b16 %v703
        %v714 = vunpack.c.h.b16 %v703
        %v715 = vunpack.c.l.b16 %v704
        %v716 = vunpack.c.h.b16 %v704
        %v717 = vpack.c.b16 %v713, %v709
        %v718 = vpack.c.b16 %v714, %v710
        %v719 = vpack.c.b16 %v715, %v711
        %v720 = vpack.c.b16 %v716, %v712
        %721 = vrot.lane.b32.xlu0 %v717, 100
        %v722 = vpop.permute.xlu0 %721
        %723 = vrot.lane.b32.xlu0 %v718, 100
        %v724 = vpop.permute.xlu0 %723
        %725 = vrot.lane.b32.xlu0 %v719, 100
        %v726 = vpop.permute.xlu0 %725
        %727 = vrot.lane.b32.xlu0 %v720, 100
        %v728 = vpop.permute.xlu0 %727
        %vm729 = vcmask 818176
        %v730 = vsel %vm729, %v722, %v724
        %v731 = vsel %vm729, %v724, %v726
        %v732 = vsel %vm729, %v726, %v728
        %736 = vst [vmem:[#allocation2 + $0x138] sm:$0xff] %v730
        %737 = vst [vmem:[#allocation2 + $0x140] sm:$0xff] %v731
        %738 = vst [vmem:[#allocation2 + $0x148] sm:$0xff] %v732
        %v739 = vld [vmem:[%s193] sm:$0xff]
        %v740 = vld [vmem:[%s193 + $0x8] sm:$0xff]
        %v741 = vld [vmem:[%s193 + $0x14] sm:$0xff]
        %v742 = vld [vmem:[%s193 + $0x1c] sm:$0xff]
        %v747 = vunpack.c.l.b16 %v739
        %v748 = vunpack.c.h.b16 %v739
        %v749 = vunpack.c.l.b16 %v740
        %v750 = vunpack.c.h.b16 %v740
        %v751 = vunpack.c.l.b16 %v741
        %v752 = vunpack.c.h.b16 %v741
        %v753 = vunpack.c.l.b16 %v742
        %v754 = vunpack.c.h.b16 %v742
        %v755 = vpack.c.b16 %v751, %v747
        %v756 = vpack.c.b16 %v752, %v748
        %v757 = vpack.c.b16 %v753, %v749
        %v758 = vpack.c.b16 %v754, %v750
        %759 = vrot.lane.b32.xlu0 %v755, 84
        %v760 = vpop.permute.xlu0 %759
        %761 = vrot.lane.b32.xlu0 %v756, 84
        %v762 = vpop.permute.xlu0 %761
        %763 = vrot.lane.b32.xlu0 %v757, 84
        %v764 = vpop.permute.xlu0 %763
        %765 = vrot.lane.b32.xlu0 %v758, 84
        %v766 = vpop.permute.xlu0 %765
        %vm767 = vcmask 687104
        %v768 = vsel %vm767, %v760, %v762
        %v769 = vsel %vm767, %v762, %v764
        %v770 = vsel %vm767, %v764, %v766
        %774 = vst [vmem:[#allocation2 + $0x150] sm:$0xff] %v768
        %775 = vst [vmem:[#allocation2 + $0x158] sm:$0xff] %v769
        %776 = vst [vmem:[#allocation2 + $0x160] sm:$0xff] %v770
        %v777 = vld [vmem:[%s193] sm:$0xff]
        %v778 = vld [vmem:[%s193 + $0x8] sm:$0xff]
        %v779 = vld [vmem:[%s193 + $0x14] sm:$0xff]
        %v780 = vld [vmem:[%s193 + $0x1c] sm:$0xff]
        %v785 = vunpack.c.l.b16 %v777
        %v786 = vunpack.c.h.b16 %v777
        %v787 = vunpack.c.l.b16 %v778
        %v788 = vunpack.c.h.b16 %v778
        %v789 = vunpack.c.l.b16 %v779
        %v790 = vunpack.c.h.b16 %v779
        %v791 = vunpack.c.l.b16 %v780
        %v792 = vunpack.c.h.b16 %v780
        %v793 = vpack.c.b16 %v789, %v785
        %v794 = vpack.c.b16 %v790, %v786
        %v795 = vpack.c.b16 %v791, %v787
        %v796 = vpack.c.b16 %v792, %v788
        %797 = vrot.lane.b32.xlu0 %v793, 83
        %v798 = vpop.permute.xlu0 %797
        %799 = vrot.lane.b32.xlu0 %v794, 83
        %v800 = vpop.permute.xlu0 %799
        %801 = vrot.lane.b32.xlu0 %v795, 83
        %v802 = vpop.permute.xlu0 %801
        %803 = vrot.lane.b32.xlu0 %v796, 83
        %v804 = vpop.permute.xlu0 %803
        %vm805 = vcmask 678912
        %v806 = vsel %vm805, %v798, %v800
        %v807 = vsel %vm805, %v800, %v802
        %v808 = vsel %vm805, %v802, %v804
        %812 = vst [vmem:[#allocation2 + $0x168] sm:$0xff] %v806
        %813 = vst [vmem:[#allocation2 + $0x170] sm:$0xff] %v807
        %814 = vst [vmem:[#allocation2 + $0x178] sm:$0xff] %v808
        %v815 = vld [vmem:[%s193] sm:$0xff]
        %v816 = vld [vmem:[%s193 + $0x8] sm:$0xff]
        %v817 = vld [vmem:[%s193 + $0x14] sm:$0xff]
        %v818 = vld [vmem:[%s193 + $0x1c] sm:$0xff]
        %v823 = vunpack.c.l.b16 %v815
        %v824 = vunpack.c.h.b16 %v815
        %v825 = vunpack.c.l.b16 %v816
        %v826 = vunpack.c.h.b16 %v816
        %v827 = vunpack.c.l.b16 %v817
        %v828 = vunpack.c.h.b16 %v817
        %v829 = vunpack.c.l.b16 %v818
        %v830 = vunpack.c.h.b16 %v818
        %v831 = vpack.c.b16 %v827, %v823
        %v832 = vpack.c.b16 %v828, %v824
        %v833 = vpack.c.b16 %v829, %v825
        %v834 = vpack.c.b16 %v830, %v826
        %835 = vrot.lane.b32.xlu0 %v831, 82
        %v836 = vpop.permute.xlu0 %835
        %837 = vrot.lane.b32.xlu0 %v832, 82
        %v838 = vpop.permute.xlu0 %837
        %839 = vrot.lane.b32.xlu0 %v833, 82
        %v840 = vpop.permute.xlu0 %839
        %841 = vrot.lane.b32.xlu0 %v834, 82
        %v842 = vpop.permute.xlu0 %841
        %vm843 = vcmask 670720
        %v844 = vsel %vm843, %v836, %v838
        %v845 = vsel %vm843, %v838, %v840
        %v846 = vsel %vm843, %v840, %v842
        %850 = vst [vmem:[#allocation2 + $0x180] sm:$0xff] %v844
        %851 = vst [vmem:[#allocation2 + $0x188] sm:$0xff] %v845
        %852 = vst [vmem:[#allocation2 + $0x190] sm:$0xff] %v846
        %v853 = vld [vmem:[%s193] sm:$0xff]
        %v854 = vld [vmem:[%s193 + $0x8] sm:$0xff]
        %v855 = vld [vmem:[%s193 + $0x14] sm:$0xff]
        %v856 = vld [vmem:[%s193 + $0x1c] sm:$0xff]
        %v861 = vunpack.c.l.b16 %v853
        %v862 = vunpack.c.h.b16 %v853
        %v863 = vunpack.c.l.b16 %v854
        %v864 = vunpack.c.h.b16 %v854
        %v865 = vunpack.c.l.b16 %v855
        %v866 = vunpack.c.h.b16 %v855
        %v867 = vunpack.c.l.b16 %v856
        %v868 = vunpack.c.h.b16 %v856
        %v869 = vpack.c.b16 %v865, %v861
        %v870 = vpack.c.b16 %v866, %v862
        %v871 = vpack.c.b16 %v867, %v863
        %v872 = vpack.c.b16 %v868, %v864
        %873 = vrot.lane.b32.xlu0 %v869, 81
        %v874 = vpop.permute.xlu0 %873
        %875 = vrot.lane.b32.xlu0 %v870, 81
        %v876 = vpop.permute.xlu0 %875
        %877 = vrot.lane.b32.xlu0 %v871, 81
        %v878 = vpop.permute.xlu0 %877
        %879 = vrot.lane.b32.xlu0 %v872, 81
        %v880 = vpop.permute.xlu0 %879
        %vm881 = vcmask 662528
        %v882 = vsel %vm881, %v874, %v876
        %v883 = vsel %vm881, %v876, %v878
        %v884 = vsel %vm881, %v878, %v880
        %888 = vst [vmem:[#allocation2 + $0x198] sm:$0xff] %v882
        %889 = vst [vmem:[#allocation2 + $0x1a0] sm:$0xff] %v883
        %890 = vst [vmem:[#allocation2 + $0x1a8] sm:$0xff] %v884
        %v891 = vld [vmem:[%s193] sm:$0xff]
        %v892 = vld [vmem:[%s193 + $0x8] sm:$0xff]
        %v893 = vld [vmem:[%s193 + $0x14] sm:$0xff]
        %v894 = vld [vmem:[%s193 + $0x1c] sm:$0xff]
        %v899 = vunpack.c.l.b16 %v891
        %v900 = vunpack.c.h.b16 %v891
        %v901 = vunpack.c.l.b16 %v892
        %v902 = vunpack.c.h.b16 %v892
        %v903 = vunpack.c.l.b16 %v893
        %v904 = vunpack.c.h.b16 %v893
        %v905 = vunpack.c.l.b16 %v894
        %v906 = vunpack.c.h.b16 %v894
        %v907 = vpack.c.b16 %v903, %v899
        %v908 = vpack.c.b16 %v904, %v900
        %v909 = vpack.c.b16 %v905, %v901
        %v910 = vpack.c.b16 %v906, %v902
        %911 = vrot.lane.b32.xlu0 %v907, 80
        %v912 = vpop.permute.xlu0 %911
        %913 = vrot.lane.b32.xlu0 %v908, 80
        %v914 = vpop.permute.xlu0 %913
        %915 = vrot.lane.b32.xlu0 %v909, 80
        %v916 = vpop.permute.xlu0 %915
        %917 = vrot.lane.b32.xlu0 %v910, 80
        %v918 = vpop.permute.xlu0 %917
        %vm919 = vcmask 654336
        %v920 = vsel %vm919, %v912, %v914
        %v921 = vsel %vm919, %v914, %v916
        %v922 = vsel %vm919, %v916, %v918
        %926 = vst [vmem:[#allocation2 + $0x1b0] sm:$0xff] %v920
        %927 = vst [vmem:[#allocation2 + $0x1b8] sm:$0xff] %v921
        %928 = vst [vmem:[#allocation2 + $0x1c0] sm:$0xff] %v922
        %v929 = vld [vmem:[%s193] sm:$0xff]
        %v930 = vld [vmem:[%s193 + $0x8] sm:$0xff]
        %v931 = vld [vmem:[%s193 + $0x14] sm:$0xff]
        %v932 = vld [vmem:[%s193 + $0x1c] sm:$0xff]
        %v937 = vunpack.c.l.b16 %v929
        %v938 = vunpack.c.h.b16 %v929
        %v939 = vunpack.c.l.b16 %v930
        %v940 = vunpack.c.h.b16 %v930
        %v941 = vunpack.c.l.b16 %v931
        %v942 = vunpack.c.h.b16 %v931
        %v943 = vunpack.c.l.b16 %v932
        %v944 = vunpack.c.h.b16 %v932
        %v945 = vpack.c.b16 %v941, %v937
        %v946 = vpack.c.b16 %v942, %v938
        %v947 = vpack.c.b16 %v943, %v939
        %v948 = vpack.c.b16 %v944, %v940
        %949 = vrot.lane.b32.xlu0 %v945, 79
        %v950 = vpop.permute.xlu0 %949
        %951 = vrot.lane.b32.xlu0 %v946, 79
        %v952 = vpop.permute.xlu0 %951
        %953 = vrot.lane.b32.xlu0 %v947, 79
        %v954 = vpop.permute.xlu0 %953
        %955 = vrot.lane.b32.xlu0 %v948, 79
        %v956 = vpop.permute.xlu0 %955
        %vm957 = vcmask 646144
        %v958 = vsel %vm957, %v950, %v952
        %v959 = vsel %vm957, %v952, %v954
        %v960 = vsel %vm957, %v954, %v956
        %964 = vst [vmem:[#allocation2 + $0x1c8] sm:$0xff] %v958
        %965 = vst [vmem:[#allocation2 + $0x1d0] sm:$0xff] %v959
        %966 = vst [vmem:[#allocation2 + $0x1d8] sm:$0xff] %v960
        %v967 = vld [vmem:[%s193] sm:$0xff]
        %v968 = vld [vmem:[%s193 + $0x8] sm:$0xff]
        %v969 = vld [vmem:[%s193 + $0x14] sm:$0xff]
        %v970 = vld [vmem:[%s193 + $0x1c] sm:$0xff]
        %v975 = vunpack.c.l.b16 %v967
        %v976 = vunpack.c.h.b16 %v967
        %v977 = vunpack.c.l.b16 %v968
        %v978 = vunpack.c.h.b16 %v968
        %v979 = vunpack.c.l.b16 %v969
        %v980 = vunpack.c.h.b16 %v969
        %v981 = vunpack.c.l.b16 %v970
        %v982 = vunpack.c.h.b16 %v970
        %v983 = vpack.c.b16 %v979, %v975
        %v984 = vpack.c.b16 %v980, %v976
        %v985 = vpack.c.b16 %v981, %v977
        %v986 = vpack.c.b16 %v982, %v978
        %987 = vrot.lane.b32.xlu0 %v983, 78
        %v988 = vpop.permute.xlu0 %987
        %989 = vrot.lane.b32.xlu0 %v984, 78
        %v990 = vpop.permute.xlu0 %989
        %991 = vrot.lane.b32.xlu0 %v985, 78
        %v992 = vpop.permute.xlu0 %991
        %993 = vrot.lane.b32.xlu0 %v986, 78
        %v994 = vpop.permute.xlu0 %993
        %vm995 = vcmask 637952
        %v996 = vsel %vm995, %v988, %v990
        %v997 = vsel %vm995, %v990, %v992
        %v998 = vsel %vm995, %v992, %v994
        %1002 = vst [vmem:[#allocation2 + $0x1e0] sm:$0xff] %v996
        %1003 = vst [vmem:[#allocation2 + $0x1e8] sm:$0xff] %v997
        %1004 = vst [vmem:[#allocation2 + $0x1f0] sm:$0xff] %v998
        %v1005 = vld [vmem:[%s193] sm:$0xff]
        %v1006 = vld [vmem:[%s193 + $0x8] sm:$0xff]
        %v1007 = vld [vmem:[%s193 + $0x14] sm:$0xff]
        %v1008 = vld [vmem:[%s193 + $0x1c] sm:$0xff]
        %v1013 = vunpack.c.l.b16 %v1005
        %v1014 = vunpack.c.h.b16 %v1005
        %v1015 = vunpack.c.l.b16 %v1006
        %v1016 = vunpack.c.h.b16 %v1006
        %v1017 = vunpack.c.l.b16 %v1007
        %v1018 = vunpack.c.h.b16 %v1007
        %v1019 = vunpack.c.l.b16 %v1008
        %v1020 = vunpack.c.h.b16 %v1008
        %v1021 = vpack.c.b16 %v1017, %v1013
        %v1022 = vpack.c.b16 %v1018, %v1014
        %v1023 = vpack.c.b16 %v1019, %v1015
        %v1024 = vpack.c.b16 %v1020, %v1016
        %1025 = vrot.lane.b32.xlu0 %v1021, 62
        %v1026 = vpop.permute.xlu0 %1025
        %1027 = vrot.lane.b32.xlu0 %v1022, 62
        %v1028 = vpop.permute.xlu0 %1027
        %1029 = vrot.lane.b32.xlu0 %v1023, 62
        %v1030 = vpop.permute.xlu0 %1029
        %1031 = vrot.lane.b32.xlu0 %v1024, 62
        %v1032 = vpop.permute.xlu0 %1031
        %vm1033 = vcmask 506880
        %v1034 = vsel %vm1033, %v1026, %v1028
        %v1035 = vsel %vm1033, %v1028, %v1030
        %v1036 = vsel %vm1033, %v1030, %v1032
        %1040 = vst [vmem:[#allocation2 + $0x1f8] sm:$0xff] %v1034
        %1041 = vst [vmem:[#allocation2 + $0x200] sm:$0xff] %v1035
        %1042 = vst [vmem:[#allocation2 + $0x208] sm:$0xff] %v1036
        %v1043 = vld [vmem:[%s193] sm:$0xff]
        %v1044 = vld [vmem:[%s193 + $0x8] sm:$0xff]
        %v1045 = vld [vmem:[%s193 + $0x14] sm:$0xff]
        %v1046 = vld [vmem:[%s193 + $0x1c] sm:$0xff]
        %v1051 = vunpack.c.l.b16 %v1043
        %v1052 = vunpack.c.h.b16 %v1043
        %v1053 = vunpack.c.l.b16 %v1044
        %v1054 = vunpack.c.h.b16 %v1044
        %v1055 = vunpack.c.l.b16 %v1045
        %v1056 = vunpack.c.h.b16 %v1045
        %v1057 = vunpack.c.l.b16 %v1046
        %v1058 = vunpack.c.h.b16 %v1046
        %v1059 = vpack.c.b16 %v1055, %v1051
        %v1060 = vpack.c.b16 %v1056, %v1052
        %v1061 = vpack.c.b16 %v1057, %v1053
        %v1062 = vpack.c.b16 %v1058, %v1054
        %1063 = vrot.lane.b32.xlu0 %v1059, 61
        %v1064 = vpop.permute.xlu0 %1063
        %1065 = vrot.lane.b32.xlu0 %v1060, 61
        %v1066 = vpop.permute.xlu0 %1065
        %1067 = vrot.lane.b32.xlu0 %v1061, 61
        %v1068 = vpop.permute.xlu0 %1067
        %1069 = vrot.lane.b32.xlu0 %v1062, 61
        %v1070 = vpop.permute.xlu0 %1069
        %vm1071 = vcmask 498688
        %v1072 = vsel %vm1071, %v1064, %v1066
        %v1073 = vsel %vm1071, %v1066, %v1068
        %v1074 = vsel %vm1071, %v1068, %v1070
        %1078 = vst [vmem:[#allocation2 + $0x210] sm:$0xff] %v1072
        %1079 = vst [vmem:[#allocation2 + $0x218] sm:$0xff] %v1073
        %1080 = vst [vmem:[#allocation2 + $0x220] sm:$0xff] %v1074
        %v1081 = vld [vmem:[%s193] sm:$0xff]
        %v1082 = vld [vmem:[%s193 + $0x8] sm:$0xff]
        %v1083 = vld [vmem:[%s193 + $0x14] sm:$0xff]
        %v1084 = vld [vmem:[%s193 + $0x1c] sm:$0xff]
        %v1089 = vunpack.c.l.b16 %v1081
        %v1090 = vunpack.c.h.b16 %v1081
        %v1091 = vunpack.c.l.b16 %v1082
        %v1092 = vunpack.c.h.b16 %v1082
        %v1093 = vunpack.c.l.b16 %v1083
        %v1094 = vunpack.c.h.b16 %v1083
        %v1095 = vunpack.c.l.b16 %v1084
        %v1096 = vunpack.c.h.b16 %v1084
        %v1097 = vpack.c.b16 %v1093, %v1089
        %v1098 = vpack.c.b16 %v1094, %v1090
        %v1099 = vpack.c.b16 %v1095, %v1091
        %v1100 = vpack.c.b16 %v1096, %v1092
        %1101 = vrot.lane.b32.xlu0 %v1097, 60
        %v1102 = vpop.permute.xlu0 %1101
        %1103 = vrot.lane.b32.xlu0 %v1098, 60
        %v1104 = vpop.permute.xlu0 %1103
        %1105 = vrot.lane.b32.xlu0 %v1099, 60
        %v1106 = vpop.permute.xlu0 %1105
        %1107 = vrot.lane.b32.xlu0 %v1100, 60
        %v1108 = vpop.permute.xlu0 %1107
        %vm1109 = vcmask 490496
        %v1110 = vsel %vm1109, %v1102, %v1104
        %v1111 = vsel %vm1109, %v1104, %v1106
        %v1112 = vsel %vm1109, %v1106, %v1108
        %1116 = vst [vmem:[#allocation2 + $0x228] sm:$0xff] %v1110
        %1117 = vst [vmem:[#allocation2 + $0x230] sm:$0xff] %v1111
        %1118 = vst [vmem:[#allocation2 + $0x238] sm:$0xff] %v1112
        %v1119 = vld [vmem:[%s193] sm:$0xff]
        %v1120 = vld [vmem:[%s193 + $0x8] sm:$0xff]
        %v1121 = vld [vmem:[%s193 + $0x14] sm:$0xff]
        %v1122 = vld [vmem:[%s193 + $0x1c] sm:$0xff]
        %v1127 = vunpack.c.l.b16 %v1119
        %v1128 = vunpack.c.h.b16 %v1119
        %v1129 = vunpack.c.l.b16 %v1120
        %v1130 = vunpack.c.h.b16 %v1120
        %v1131 = vunpack.c.l.b16 %v1121
        %v1132 = vunpack.c.h.b16 %v1121
        %v1133 = vunpack.c.l.b16 %v1122
        %v1134 = vunpack.c.h.b16 %v1122
        %v1135 = vpack.c.b16 %v1131, %v1127
        %v1136 = vpack.c.b16 %v1132, %v1128
        %v1137 = vpack.c.b16 %v1133, %v1129
        %v1138 = vpack.c.b16 %v1134, %v1130
        %1139 = vrot.lane.b32.xlu0 %v1135, 59
        %v1140 = vpop.permute.xlu0 %1139
        %1141 = vrot.lane.b32.xlu0 %v1136, 59
        %v1142 = vpop.permute.xlu0 %1141
        %1143 = vrot.lane.b32.xlu0 %v1137, 59
        %v1144 = vpop.permute.xlu0 %1143
        %1145 = vrot.lane.b32.xlu0 %v1138, 59
        %v1146 = vpop.permute.xlu0 %1145
        %vm1147 = vcmask 482304
        %v1148 = vsel %vm1147, %v1140, %v1142
        %v1149 = vsel %vm1147, %v1142, %v1144
        %v1150 = vsel %vm1147, %v1144, %v1146
        %1154 = vst [vmem:[#allocation2 + $0x240] sm:$0xff] %v1148
        %1155 = vst [vmem:[#allocation2 + $0x248] sm:$0xff] %v1149
        %1156 = vst [vmem:[#allocation2 + $0x250] sm:$0xff] %v1150
        %v1157 = vld [vmem:[%s193] sm:$0xff]
        %v1158 = vld [vmem:[%s193 + $0x8] sm:$0xff]
        %v1159 = vld [vmem:[%s193 + $0x14] sm:$0xff]
        %v1160 = vld [vmem:[%s193 + $0x1c] sm:$0xff]
        %v1165 = vunpack.c.l.b16 %v1157
        %v1166 = vunpack.c.h.b16 %v1157
        %v1167 = vunpack.c.l.b16 %v1158
        %v1168 = vunpack.c.h.b16 %v1158
        %v1169 = vunpack.c.l.b16 %v1159
        %v1170 = vunpack.c.h.b16 %v1159
        %v1171 = vunpack.c.l.b16 %v1160
        %v1172 = vunpack.c.h.b16 %v1160
        %v1173 = vpack.c.b16 %v1169, %v1165
        %v1174 = vpack.c.b16 %v1170, %v1166
        %v1175 = vpack.c.b16 %v1171, %v1167
        %v1176 = vpack.c.b16 %v1172, %v1168
        %1177 = vrot.lane.b32.xlu0 %v1173, 58
        %v1178 = vpop.permute.xlu0 %1177
        %1179 = vrot.lane.b32.xlu0 %v1174, 58
        %v1180 = vpop.permute.xlu0 %1179
        %1181 = vrot.lane.b32.xlu0 %v1175, 58
        %v1182 = vpop.permute.xlu0 %1181
        %1183 = vrot.lane.b32.xlu0 %v1176, 58
        %v1184 = vpop.permute.xlu0 %1183
        %vm1185 = vcmask 474112
        %v1186 = vsel %vm1185, %v1178, %v1180
        %v1187 = vsel %vm1185, %v1180, %v1182
        %v1188 = vsel %vm1185, %v1182, %v1184
        %1192 = vst [vmem:[#allocation2 + $0x258] sm:$0xff] %v1186
        %1193 = vst [vmem:[#allocation2 + $0x260] sm:$0xff] %v1187
        %1194 = vst [vmem:[#allocation2 + $0x268] sm:$0xff] %v1188
        %v1195 = vld [vmem:[%s193] sm:$0xff]
        %v1196 = vld [vmem:[%s193 + $0x8] sm:$0xff]
        %v1197 = vld [vmem:[%s193 + $0x14] sm:$0xff]
        %v1198 = vld [vmem:[%s193 + $0x1c] sm:$0xff]
        %v1203 = vunpack.c.l.b16 %v1195
        %v1204 = vunpack.c.h.b16 %v1195
        %v1205 = vunpack.c.l.b16 %v1196
        %v1206 = vunpack.c.h.b16 %v1196
        %v1207 = vunpack.c.l.b16 %v1197
        %v1208 = vunpack.c.h.b16 %v1197
        %v1209 = vunpack.c.l.b16 %v1198
        %v1210 = vunpack.c.h.b16 %v1198
        %v1211 = vpack.c.b16 %v1207, %v1203
        %v1212 = vpack.c.b16 %v1208, %v1204
        %v1213 = vpack.c.b16 %v1209, %v1205
        %v1214 = vpack.c.b16 %v1210, %v1206
        %1215 = vrot.lane.b32.xlu0 %v1211, 57
        %v1216 = vpop.permute.xlu0 %1215
        %1217 = vrot.lane.b32.xlu0 %v1212, 57
        %v1218 = vpop.permute.xlu0 %1217
        %1219 = vrot.lane.b32.xlu0 %v1213, 57
        %v1220 = vpop.permute.xlu0 %1219
        %1221 = vrot.lane.b32.xlu0 %v1214, 57
        %v1222 = vpop.permute.xlu0 %1221
        %vm1223 = vcmask 465920
        %v1224 = vsel %vm1223, %v1216, %v1218
        %v1225 = vsel %vm1223, %v1218, %v1220
        %v1226 = vsel %vm1223, %v1220, %v1222
        %1230 = vst [vmem:[#allocation2 + $0x270] sm:$0xff] %v1224
        %1231 = vst [vmem:[#allocation2 + $0x278] sm:$0xff] %v1225
        %1232 = vst [vmem:[#allocation2 + $0x280] sm:$0xff] %v1226
        %v1233 = vld [vmem:[%s193] sm:$0xff]
        %v1234 = vld [vmem:[%s193 + $0x8] sm:$0xff]
        %v1235 = vld [vmem:[%s193 + $0x14] sm:$0xff]
        %v1236 = vld [vmem:[%s193 + $0x1c] sm:$0xff]
        %v1241 = vunpack.c.l.b16 %v1233
        %v1242 = vunpack.c.h.b16 %v1233
        %v1243 = vunpack.c.l.b16 %v1234
        %v1244 = vunpack.c.h.b16 %v1234
        %v1245 = vunpack.c.l.b16 %v1235
        %v1246 = vunpack.c.h.b16 %v1235
        %v1247 = vunpack.c.l.b16 %v1236
        %v1248 = vunpack.c.h.b16 %v1236
        %v1249 = vpack.c.b16 %v1245, %v1241
        %v1250 = vpack.c.b16 %v1246, %v1242
        %v1251 = vpack.c.b16 %v1247, %v1243
        %v1252 = vpack.c.b16 %v1248, %v1244
        %1253 = vrot.lane.b32.xlu0 %v1249, 56
        %v1254 = vpop.permute.xlu0 %1253
        %1255 = vrot.lane.b32.xlu0 %v1250, 56
        %v1256 = vpop.permute.xlu0 %1255
        %1257 = vrot.lane.b32.xlu0 %v1251, 56
        %v1258 = vpop.permute.xlu0 %1257
        %1259 = vrot.lane.b32.xlu0 %v1252, 56
        %v1260 = vpop.permute.xlu0 %1259
        %vm1261 = vcmask 457728
        %v1262 = vsel %vm1261, %v1254, %v1256
        %v1263 = vsel %vm1261, %v1256, %v1258
        %v1264 = vsel %vm1261, %v1258, %v1260
        %1268 = vst [vmem:[#allocation2 + $0x288] sm:$0xff] %v1262
        %1269 = vst [vmem:[#allocation2 + $0x290] sm:$0xff] %v1263
        %1270 = vst [vmem:[#allocation2 + $0x298] sm:$0xff] %v1264
        %v1271 = vld [vmem:[%s193] sm:$0xff]
        %v1272 = vld [vmem:[%s193 + $0x8] sm:$0xff]
        %v1273 = vld [vmem:[%s193 + $0x14] sm:$0xff]
        %v1274 = vld [vmem:[%s193 + $0x1c] sm:$0xff]
        %v1279 = vunpack.c.l.b16 %v1271
        %v1280 = vunpack.c.h.b16 %v1271
        %v1281 = vunpack.c.l.b16 %v1272
        %v1282 = vunpack.c.h.b16 %v1272
        %v1283 = vunpack.c.l.b16 %v1273
        %v1284 = vunpack.c.h.b16 %v1273
        %v1285 = vunpack.c.l.b16 %v1274
        %v1286 = vunpack.c.h.b16 %v1274
        %v1287 = vpack.c.b16 %v1283, %v1279
        %v1288 = vpack.c.b16 %v1284, %v1280
        %v1289 = vpack.c.b16 %v1285, %v1281
        %v1290 = vpack.c.b16 %v1286, %v1282
        %1291 = vrot.lane.b32.xlu0 %v1287, 40
        %v1292 = vpop.permute.xlu0 %1291
        %1293 = vrot.lane.b32.xlu0 %v1288, 40
        %v1294 = vpop.permute.xlu0 %1293
        %1295 = vrot.lane.b32.xlu0 %v1289, 40
        %v1296 = vpop.permute.xlu0 %1295
        %1297 = vrot.lane.b32.xlu0 %v1290, 40
        %v1298 = vpop.permute.xlu0 %1297
        %vm1299 = vcmask 326656
        %v1300 = vsel %vm1299, %v1292, %v1294
        %v1301 = vsel %vm1299, %v1294, %v1296
        %v1302 = vsel %vm1299, %v1296, %v1298
        %1306 = vst [vmem:[#allocation2 + $0x2a0] sm:$0xff] %v1300
        %1307 = vst [vmem:[#allocation2 + $0x2a8] sm:$0xff] %v1301
        %1308 = vst [vmem:[#allocation2 + $0x2b0] sm:$0xff] %v1302
        %v1309 = vld [vmem:[%s193] sm:$0xff]
        %v1310 = vld [vmem:[%s193 + $0x8] sm:$0xff]
        %v1311 = vld [vmem:[%s193 + $0x14] sm:$0xff]
        %v1312 = vld [vmem:[%s193 + $0x1c] sm:$0xff]
        %v1317 = vunpack.c.l.b16 %v1309
        %v1318 = vunpack.c.h.b16 %v1309
        %v1319 = vunpack.c.l.b16 %v1310
        %v1320 = vunpack.c.h.b16 %v1310
        %v1321 = vunpack.c.l.b16 %v1311
        %v1322 = vunpack.c.h.b16 %v1311
        %v1323 = vunpack.c.l.b16 %v1312
        %v1324 = vunpack.c.h.b16 %v1312
        %v1325 = vpack.c.b16 %v1321, %v1317
        %v1326 = vpack.c.b16 %v1322, %v1318
        %v1327 = vpack.c.b16 %v1323, %v1319
        %v1328 = vpack.c.b16 %v1324, %v1320
        %1329 = vrot.lane.b32.xlu0 %v1325, 39
        %v1330 = vpop.permute.xlu0 %1329
        %1331 = vrot.lane.b32.xlu0 %v1326, 39
        %v1332 = vpop.permute.xlu0 %1331
        %1333 = vrot.lane.b32.xlu0 %v1327, 39
        %v1334 = vpop.permute.xlu0 %1333
        %1335 = vrot.lane.b32.xlu0 %v1328, 39
        %v1336 = vpop.permute.xlu0 %1335
        %vm1337 = vcmask 318464
        %v1338 = vsel %vm1337, %v1330, %v1332
        %v1339 = vsel %vm1337, %v1332, %v1334
        %v1340 = vsel %vm1337, %v1334, %v1336
        %1344 = vst [vmem:[#allocation2 + $0x2b8] sm:$0xff] %v1338
        %1345 = vst [vmem:[#allocation2 + $0x2c0] sm:$0xff] %v1339
        %1346 = vst [vmem:[#allocation2 + $0x2c8] sm:$0xff] %v1340
        %v1347 = vld [vmem:[%s193] sm:$0xff]
        %v1348 = vld [vmem:[%s193 + $0x8] sm:$0xff]
        %v1349 = vld [vmem:[%s193 + $0x14] sm:$0xff]
        %v1350 = vld [vmem:[%s193 + $0x1c] sm:$0xff]
        %v1355 = vunpack.c.l.b16 %v1347
        %v1356 = vunpack.c.h.b16 %v1347
        %v1357 = vunpack.c.l.b16 %v1348
        %v1358 = vunpack.c.h.b16 %v1348
        %v1359 = vunpack.c.l.b16 %v1349
        %v1360 = vunpack.c.h.b16 %v1349
        %v1361 = vunpack.c.l.b16 %v1350
        %v1362 = vunpack.c.h.b16 %v1350
        %v1363 = vpack.c.b16 %v1359, %v1355
        %v1364 = vpack.c.b16 %v1360, %v1356
        %v1365 = vpack.c.b16 %v1361, %v1357
        %v1366 = vpack.c.b16 %v1362, %v1358
        %1367 = vrot.lane.b32.xlu0 %v1363, 38
        %v1368 = vpop.permute.xlu0 %1367
        %1369 = vrot.lane.b32.xlu0 %v1364, 38
        %v1370 = vpop.permute.xlu0 %1369
        %1371 = vrot.lane.b32.xlu0 %v1365, 38
        %v1372 = vpop.permute.xlu0 %1371
        %1373 = vrot.lane.b32.xlu0 %v1366, 38
        %v1374 = vpop.permute.xlu0 %1373
        %vm1375 = vcmask 310272
        %v1376 = vsel %vm1375, %v1368, %v1370
        %v1377 = vsel %vm1375, %v1370, %v1372
        %v1378 = vsel %vm1375, %v1372, %v1374
        %1382 = vst [vmem:[#allocation2 + $0x2d0] sm:$0xff] %v1376
        %1383 = vst [vmem:[#allocation2 + $0x2d8] sm:$0xff] %v1377
        %1384 = vst [vmem:[#allocation2 + $0x2e0] sm:$0xff] %v1378
        %v1385 = vld [vmem:[%s193] sm:$0xff]
        %v1386 = vld [vmem:[%s193 + $0x8] sm:$0xff]
        %v1387 = vld [vmem:[%s193 + $0x14] sm:$0xff]
        %v1388 = vld [vmem:[%s193 + $0x1c] sm:$0xff]
        %v1393 = vunpack.c.l.b16 %v1385
        %v1394 = vunpack.c.h.b16 %v1385
        %v1395 = vunpack.c.l.b16 %v1386
        %v1396 = vunpack.c.h.b16 %v1386
        %v1397 = vunpack.c.l.b16 %v1387
        %v1398 = vunpack.c.h.b16 %v1387
        %v1399 = vunpack.c.l.b16 %v1388
        %v1400 = vunpack.c.h.b16 %v1388
        %v1401 = vpack.c.b16 %v1397, %v1393
        %v1402 = vpack.c.b16 %v1398, %v1394
        %v1403 = vpack.c.b16 %v1399, %v1395
        %v1404 = vpack.c.b16 %v1400, %v1396
        %1405 = vrot.lane.b32.xlu0 %v1401, 37
        %v1406 = vpop.permute.xlu0 %1405
        %1407 = vrot.lane.b32.xlu0 %v1402, 37
        %v1408 = vpop.permute.xlu0 %1407
        %1409 = vrot.lane.b32.xlu0 %v1403, 37
        %v1410 = vpop.permute.xlu0 %1409
        %1411 = vrot.lane.b32.xlu0 %v1404, 37
        %v1412 = vpop.permute.xlu0 %1411
        %vm1413 = vcmask 302080
        %v1414 = vsel %vm1413, %v1406, %v1408
        %v1415 = vsel %vm1413, %v1408, %v1410
        %v1416 = vsel %vm1413, %v1410, %v1412
        %1420 = vst [vmem:[#allocation2 + $0x2e8] sm:$0xff] %v1414
        %1421 = vst [vmem:[#allocation2 + $0x2f0] sm:$0xff] %v1415
        %1422 = vst [vmem:[#allocation2 + $0x2f8] sm:$0xff] %v1416
        %v1423 = vld [vmem:[%s193] sm:$0xff]
        %v1424 = vld [vmem:[%s193 + $0x8] sm:$0xff]
        %v1425 = vld [vmem:[%s193 + $0x14] sm:$0xff]
        %v1426 = vld [vmem:[%s193 + $0x1c] sm:$0xff]
        %v1431 = vunpack.c.l.b16 %v1423
        %v1432 = vunpack.c.h.b16 %v1423
        %v1433 = vunpack.c.l.b16 %v1424
        %v1434 = vunpack.c.h.b16 %v1424
        %v1435 = vunpack.c.l.b16 %v1425
        %v1436 = vunpack.c.h.b16 %v1425
        %v1437 = vunpack.c.l.b16 %v1426
        %v1438 = vunpack.c.h.b16 %v1426
        %v1439 = vpack.c.b16 %v1435, %v1431
        %v1440 = vpack.c.b16 %v1436, %v1432
        %v1441 = vpack.c.b16 %v1437, %v1433
        %v1442 = vpack.c.b16 %v1438, %v1434
        %1443 = vrot.lane.b32.xlu0 %v1439, 36
        %v1444 = vpop.permute.xlu0 %1443
        %1445 = vrot.lane.b32.xlu0 %v1440, 36
        %v1446 = vpop.permute.xlu0 %1445
        %1447 = vrot.lane.b32.xlu0 %v1441, 36
        %v1448 = vpop.permute.xlu0 %1447
        %1449 = vrot.lane.b32.xlu0 %v1442, 36
        %v1450 = vpop.permute.xlu0 %1449
        %vm1451 = vcmask 293888
        %v1452 = vsel %vm1451, %v1444, %v1446
        %v1453 = vsel %vm1451, %v1446, %v1448
        %v1454 = vsel %vm1451, %v1448, %v1450
        %1458 = vst [vmem:[#allocation2 + $0x300] sm:$0xff] %v1452
        %1459 = vst [vmem:[#allocation2 + $0x308] sm:$0xff] %v1453
        %1460 = vst [vmem:[#allocation2 + $0x310] sm:$0xff] %v1454
        %v1461 = vld [vmem:[%s193] sm:$0xff]
        %v1462 = vld [vmem:[%s193 + $0x8] sm:$0xff]
        %v1463 = vld [vmem:[%s193 + $0x14] sm:$0xff]
        %v1464 = vld [vmem:[%s193 + $0x1c] sm:$0xff]
        %v1469 = vunpack.c.l.b16 %v1461
        %v1470 = vunpack.c.h.b16 %v1461
        %v1471 = vunpack.c.l.b16 %v1462
        %v1472 = vunpack.c.h.b16 %v1462
        %v1473 = vunpack.c.l.b16 %v1463
        %v1474 = vunpack.c.h.b16 %v1463
        %v1475 = vunpack.c.l.b16 %v1464
        %v1476 = vunpack.c.h.b16 %v1464
        %v1477 = vpack.c.b16 %v1473, %v1469
        %v1478 = vpack.c.b16 %v1474, %v1470
        %v1479 = vpack.c.b16 %v1475, %v1471
        %v1480 = vpack.c.b16 %v1476, %v1472
        %1481 = vrot.lane.b32.xlu0 %v1477, 35
        %v1482 = vpop.permute.xlu0 %1481
        %1483 = vrot.lane.b32.xlu0 %v1478, 35
        %v1484 = vpop.permute.xlu0 %1483
        %1485 = vrot.lane.b32.xlu0 %v1479, 35
        %v1486 = vpop.permute.xlu0 %1485
        %1487 = vrot.lane.b32.xlu0 %v1480, 35
        %v1488 = vpop.permute.xlu0 %1487
        %vm1489 = vcmask 285696
        %v1490 = vsel %vm1489, %v1482, %v1484
        %v1491 = vsel %vm1489, %v1484, %v1486
        %v1492 = vsel %vm1489, %v1486, %v1488
        %1496 = vst [vmem:[#allocation2 + $0x318] sm:$0xff] %v1490
        %1497 = vst [vmem:[#allocation2 + $0x320] sm:$0xff] %v1491
        %1498 = vst [vmem:[#allocation2 + $0x328] sm:$0xff] %v1492
        %v1499 = vld [vmem:[%s193] sm:$0xff]
        %v1500 = vld [vmem:[%s193 + $0x8] sm:$0xff]
        %v1501 = vld [vmem:[%s193 + $0x14] sm:$0xff]
        %v1502 = vld [vmem:[%s193 + $0x1c] sm:$0xff]
        %v1507 = vunpack.c.l.b16 %v1499
        %v1508 = vunpack.c.h.b16 %v1499
        %v1509 = vunpack.c.l.b16 %v1500
        %v1510 = vunpack.c.h.b16 %v1500
        %v1511 = vunpack.c.l.b16 %v1501
        %v1512 = vunpack.c.h.b16 %v1501
        %v1513 = vunpack.c.l.b16 %v1502
        %v1514 = vunpack.c.h.b16 %v1502
        %v1515 = vpack.c.b16 %v1511, %v1507
        %v1516 = vpack.c.b16 %v1512, %v1508
        %v1517 = vpack.c.b16 %v1513, %v1509
        %v1518 = vpack.c.b16 %v1514, %v1510
        %1519 = vrot.lane.b32.xlu0 %v1515, 34
        %v1520 = vpop.permute.xlu0 %1519
        %1521 = vrot.lane.b32.xlu0 %v1516, 34
        %v1522 = vpop.permute.xlu0 %1521
        %1523 = vrot.lane.b32.xlu0 %v1517, 34
        %v1524 = vpop.permute.xlu0 %1523
        %1525 = vrot.lane.b32.xlu0 %v1518, 34
        %v1526 = vpop.permute.xlu0 %1525
        %vm1527 = vcmask 277504
        %v1528 = vsel %vm1527, %v1520, %v1522
        %v1529 = vsel %vm1527, %v1522, %v1524
        %v1530 = vsel %vm1527, %v1524, %v1526
        %1534 = vst [vmem:[#allocation2 + $0x330] sm:$0xff] %v1528
        %1535 = vst [vmem:[#allocation2 + $0x338] sm:$0xff] %v1529
        %1536 = vst [vmem:[#allocation2 + $0x340] sm:$0xff] %v1530
        %v1537 = vld [vmem:[%s193] sm:$0xff]
        %v1538 = vld [vmem:[%s193 + $0x8] sm:$0xff]
        %v1539 = vld [vmem:[%s193 + $0x14] sm:$0xff]
        %v1540 = vld [vmem:[%s193 + $0x1c] sm:$0xff]
        %v1545 = vunpack.c.l.b16 %v1537
        %v1546 = vunpack.c.h.b16 %v1537
        %v1547 = vunpack.c.l.b16 %v1538
        %v1548 = vunpack.c.h.b16 %v1538
        %v1549 = vunpack.c.l.b16 %v1539
        %v1550 = vunpack.c.h.b16 %v1539
        %v1551 = vunpack.c.l.b16 %v1540
        %v1552 = vunpack.c.h.b16 %v1540
        %v1553 = vpack.c.b16 %v1549, %v1545
        %v1554 = vpack.c.b16 %v1550, %v1546
        %v1555 = vpack.c.b16 %v1551, %v1547
        %v1556 = vpack.c.b16 %v1552, %v1548
        %1557 = vrot.lane.b32.xlu0 %v1553, 18
        %v1558 = vpop.permute.xlu0 %1557
        %1559 = vrot.lane.b32.xlu0 %v1554, 18
        %v1560 = vpop.permute.xlu0 %1559
        %1561 = vrot.lane.b32.xlu0 %v1555, 18
        %v1562 = vpop.permute.xlu0 %1561
        %1563 = vrot.lane.b32.xlu0 %v1556, 18
        %v1564 = vpop.permute.xlu0 %1563
        %vm1565 = vcmask 146432
        %v1566 = vsel %vm1565, %v1558, %v1560
        %v1567 = vsel %vm1565, %v1560, %v1562
        %v1568 = vsel %vm1565, %v1562, %v1564
        %1572 = vst [vmem:[#allocation2 + $0x348] sm:$0xff] %v1566
        %1573 = vst [vmem:[#allocation2 + $0x350] sm:$0xff] %v1567
        %1574 = vst [vmem:[#allocation2 + $0x358] sm:$0xff] %v1568
        %v1575 = vld [vmem:[%s193] sm:$0xff]
        %v1576 = vld [vmem:[%s193 + $0x8] sm:$0xff]
        %v1577 = vld [vmem:[%s193 + $0x14] sm:$0xff]
        %v1578 = vld [vmem:[%s193 + $0x1c] sm:$0xff]
        %v1583 = vunpack.c.l.b16 %v1575
        %v1584 = vunpack.c.h.b16 %v1575
        %v1585 = vunpack.c.l.b16 %v1576
        %v1586 = vunpack.c.h.b16 %v1576
        %v1587 = vunpack.c.l.b16 %v1577
        %v1588 = vunpack.c.h.b16 %v1577
        %v1589 = vunpack.c.l.b16 %v1578
        %v1590 = vunpack.c.h.b16 %v1578
        %v1591 = vpack.c.b16 %v1587, %v1583
        %v1592 = vpack.c.b16 %v1588, %v1584
        %v1593 = vpack.c.b16 %v1589, %v1585
        %v1594 = vpack.c.b16 %v1590, %v1586
        %1595 = vrot.lane.b32.xlu0 %v1591, 17
        %v1596 = vpop.permute.xlu0 %1595
        %1597 = vrot.lane.b32.xlu0 %v1592, 17
        %v1598 = vpop.permute.xlu0 %1597
        %1599 = vrot.lane.b32.xlu0 %v1593, 17
        %v1600 = vpop.permute.xlu0 %1599
        %1601 = vrot.lane.b32.xlu0 %v1594, 17
        %v1602 = vpop.permute.xlu0 %1601
        %vm1603 = vcmask 138240
        %v1604 = vsel %vm1603, %v1596, %v1598
        %v1605 = vsel %vm1603, %v1598, %v1600
        %v1606 = vsel %vm1603, %v1600, %v1602
        %1610 = vst [vmem:[#allocation2 + $0x360] sm:$0xff] %v1604
        %1611 = vst [vmem:[#allocation2 + $0x368] sm:$0xff] %v1605
        %1612 = vst [vmem:[#allocation2 + $0x370] sm:$0xff] %v1606
        %v1613 = vld [vmem:[%s193] sm:$0xff]
        %v1614 = vld [vmem:[%s193 + $0x8] sm:$0xff]
        %v1615 = vld [vmem:[%s193 + $0x14] sm:$0xff]
        %v1616 = vld [vmem:[%s193 + $0x1c] sm:$0xff]
        %v1621 = vunpack.c.l.b16 %v1613
        %v1622 = vunpack.c.h.b16 %v1613
        %v1623 = vunpack.c.l.b16 %v1614
        %v1624 = vunpack.c.h.b16 %v1614
        %v1625 = vunpack.c.l.b16 %v1615
        %v1626 = vunpack.c.h.b16 %v1615
        %v1627 = vunpack.c.l.b16 %v1616
        %v1628 = vunpack.c.h.b16 %v1616
        %v1629 = vpack.c.b16 %v1625, %v1621
        %v1630 = vpack.c.b16 %v1626, %v1622
        %v1631 = vpack.c.b16 %v1627, %v1623
        %v1632 = vpack.c.b16 %v1628, %v1624
        %1633 = vrot.lane.b32.xlu0 %v1629, 16
        %v1634 = vpop.permute.xlu0 %1633
        %1635 = vrot.lane.b32.xlu0 %v1630, 16
        %v1636 = vpop.permute.xlu0 %1635
        %1637 = vrot.lane.b32.xlu0 %v1631, 16
        %v1638 = vpop.permute.xlu0 %1637
        %1639 = vrot.lane.b32.xlu0 %v1632, 16
        %v1640 = vpop.permute.xlu0 %1639
        %vm1641 = vcmask 130048
        %v1642 = vsel %vm1641, %v1634, %v1636
        %v1643 = vsel %vm1641, %v1636, %v1638
        %v1644 = vsel %vm1641, %v1638, %v1640
        %1648 = vst [vmem:[#allocation2 + $0x378] sm:$0xff] %v1642
        %1649 = vst [vmem:[#allocation2 + $0x380] sm:$0xff] %v1643
        %1650 = vst [vmem:[#allocation2 + $0x388] sm:$0xff] %v1644
        %v1651 = vld [vmem:[%s193] sm:$0xff]
        %v1652 = vld [vmem:[%s193 + $0x8] sm:$0xff]
        %v1653 = vld [vmem:[%s193 + $0x14] sm:$0xff]
        %v1654 = vld [vmem:[%s193 + $0x1c] sm:$0xff]
        %v1659 = vunpack.c.l.b16 %v1651
        %v1660 = vunpack.c.h.b16 %v1651
        %v1661 = vunpack.c.l.b16 %v1652
        %v1662 = vunpack.c.h.b16 %v1652
        %v1663 = vunpack.c.l.b16 %v1653
        %v1664 = vunpack.c.h.b16 %v1653
        %v1665 = vunpack.c.l.b16 %v1654
        %v1666 = vunpack.c.h.b16 %v1654
        %v1667 = vpack.c.b16 %v1663, %v1659
        %v1668 = vpack.c.b16 %v1664, %v1660
        %v1669 = vpack.c.b16 %v1665, %v1661
        %v1670 = vpack.c.b16 %v1666, %v1662
        %1671 = vrot.lane.b32.xlu0 %v1667, 15
        %v1672 = vpop.permute.xlu0 %1671
        %1673 = vrot.lane.b32.xlu0 %v1668, 15
        %v1674 = vpop.permute.xlu0 %1673
        %1675 = vrot.lane.b32.xlu0 %v1669, 15
        %v1676 = vpop.permute.xlu0 %1675
        %1677 = vrot.lane.b32.xlu0 %v1670, 15
        %v1678 = vpop.permute.xlu0 %1677
        %vm1679 = vcmask 121856
        %v1680 = vsel %vm1679, %v1672, %v1674
        %v1681 = vsel %vm1679, %v1674, %v1676
        %v1682 = vsel %vm1679, %v1676, %v1678
        %1686 = vst [vmem:[#allocation2 + $0x390] sm:$0xff] %v1680
        %1687 = vst [vmem:[#allocation2 + $0x398] sm:$0xff] %v1681
        %1688 = vst [vmem:[#allocation2 + $0x3a0] sm:$0xff] %v1682
        %v1689 = vld [vmem:[%s193] sm:$0xff]
        %v1690 = vld [vmem:[%s193 + $0x8] sm:$0xff]
        %v1691 = vld [vmem:[%s193 + $0x14] sm:$0xff]
        %v1692 = vld [vmem:[%s193 + $0x1c] sm:$0xff]
        %v1697 = vunpack.c.l.b16 %v1689
        %v1698 = vunpack.c.h.b16 %v1689
        %v1699 = vunpack.c.l.b16 %v1690
        %v1700 = vunpack.c.h.b16 %v1690
        %v1701 = vunpack.c.l.b16 %v1691
        %v1702 = vunpack.c.h.b16 %v1691
        %v1703 = vunpack.c.l.b16 %v1692
        %v1704 = vunpack.c.h.b16 %v1692
        %v1705 = vpack.c.b16 %v1701, %v1697
        %v1706 = vpack.c.b16 %v1702, %v1698
        %v1707 = vpack.c.b16 %v1703, %v1699
        %v1708 = vpack.c.b16 %v1704, %v1700
        %1709 = vrot.lane.b32.xlu0 %v1705, 14
        %v1710 = vpop.permute.xlu0 %1709
        %1711 = vrot.lane.b32.xlu0 %v1706, 14
        %v1712 = vpop.permute.xlu0 %1711
        %1713 = vrot.lane.b32.xlu0 %v1707, 14
        %v1714 = vpop.permute.xlu0 %1713
        %1715 = vrot.lane.b32.xlu0 %v1708, 14
        %v1716 = vpop.permute.xlu0 %1715
        %vm1717 = vcmask 113664
        %v1718 = vsel %vm1717, %v1710, %v1712
        %v1719 = vsel %vm1717, %v1712, %v1714
        %v1720 = vsel %vm1717, %v1714, %v1716
        %1724 = vst [vmem:[#allocation2 + $0x3a8] sm:$0xff] %v1718
        %1725 = vst [vmem:[#allocation2 + $0x3b0] sm:$0xff] %v1719
        %1726 = vst [vmem:[#allocation2 + $0x3b8] sm:$0xff] %v1720
        %v1727 = vld [vmem:[%s193] sm:$0xff]
        %v1728 = vld [vmem:[%s193 + $0x8] sm:$0xff]
        %v1729 = vld [vmem:[%s193 + $0x14] sm:$0xff]
        %v1730 = vld [vmem:[%s193 + $0x1c] sm:$0xff]
        %v1735 = vunpack.c.l.b16 %v1727
        %v1736 = vunpack.c.h.b16 %v1727
        %v1737 = vunpack.c.l.b16 %v1728
        %v1738 = vunpack.c.h.b16 %v1728
        %v1739 = vunpack.c.l.b16 %v1729
        %v1740 = vunpack.c.h.b16 %v1729
        %v1741 = vunpack.c.l.b16 %v1730
        %v1742 = vunpack.c.h.b16 %v1730
        %v1743 = vpack.c.b16 %v1739, %v1735
        %v1744 = vpack.c.b16 %v1740, %v1736
        %v1745 = vpack.c.b16 %v1741, %v1737
        %v1746 = vpack.c.b16 %v1742, %v1738
        %1747 = vrot.lane.b32.xlu0 %v1743, 13
        %v1748 = vpop.permute.xlu0 %1747
        %1749 = vrot.lane.b32.xlu0 %v1744, 13
        %v1750 = vpop.permute.xlu0 %1749
        %1751 = vrot.lane.b32.xlu0 %v1745, 13
        %v1752 = vpop.permute.xlu0 %1751
        %1753 = vrot.lane.b32.xlu0 %v1746, 13
        %v1754 = vpop.permute.xlu0 %1753
        %vm1755 = vcmask 105472
        %v1756 = vsel %vm1755, %v1748, %v1750
        %v1757 = vsel %vm1755, %v1750, %v1752
        %v1758 = vsel %vm1755, %v1752, %v1754
        %1762 = vst [vmem:[#allocation2 + $0x3c0] sm:$0xff] %v1756
        %1763 = vst [vmem:[#allocation2 + $0x3c8] sm:$0xff] %v1757
        %1764 = vst [vmem:[#allocation2 + $0x3d0] sm:$0xff] %v1758
        %v1765 = vld [vmem:[%s193] sm:$0xff]
        %v1766 = vld [vmem:[%s193 + $0x8] sm:$0xff]
        %v1767 = vld [vmem:[%s193 + $0x14] sm:$0xff]
        %v1768 = vld [vmem:[%s193 + $0x1c] sm:$0xff]
        %v1773 = vunpack.c.l.b16 %v1765
        %v1774 = vunpack.c.h.b16 %v1765
        %v1775 = vunpack.c.l.b16 %v1766
        %v1776 = vunpack.c.h.b16 %v1766
        %v1777 = vunpack.c.l.b16 %v1767
        %v1778 = vunpack.c.h.b16 %v1767
        %v1779 = vunpack.c.l.b16 %v1768
        %v1780 = vunpack.c.h.b16 %v1768
        %v1781 = vpack.c.b16 %v1777, %v1773
        %v1782 = vpack.c.b16 %v1778, %v1774
        %v1783 = vpack.c.b16 %v1779, %v1775
        %v1784 = vpack.c.b16 %v1780, %v1776
        %1785 = vrot.lane.b32.xlu0 %v1781, 12
        %v1786 = vpop.permute.xlu0 %1785
        %1787 = vrot.lane.b32.xlu0 %v1782, 12
        %v1788 = vpop.permute.xlu0 %1787
        %1789 = vrot.lane.b32.xlu0 %v1783, 12
        %v1790 = vpop.permute.xlu0 %1789
        %1791 = vrot.lane.b32.xlu0 %v1784, 12
        %v1792 = vpop.permute.xlu0 %1791
        %vm1793 = vcmask 97280
        %v1794 = vsel %vm1793, %v1786, %v1788
        %v1795 = vsel %vm1793, %v1788, %v1790
        %v1796 = vsel %vm1793, %v1790, %v1792
        %1800 = vst [vmem:[#allocation2 + $0x3d8] sm:$0xff] %v1794
        %1801 = vst [vmem:[#allocation2 + $0x3e0] sm:$0xff] %v1795
        %1802 = vst [vmem:[#allocation2 + $0x3e8] sm:$0xff] %v1796
        %v1803 = vld [vmem:[%s193 + $0x4] sm:$0xff]
        %v1804 = vld [vmem:[%s193 + $0xc] sm:$0xff]
        %v1805 = vld [vmem:[%s193 + $0x18] sm:$0xff]
        %v1806 = vld [vmem:[%s193 + $0x20] sm:$0xff]
        %v1811 = vunpack.c.l.b16 %v1803
        %v1812 = vunpack.c.h.b16 %v1803
        %v1813 = vunpack.c.l.b16 %v1804
        %v1814 = vunpack.c.h.b16 %v1804
        %v1815 = vunpack.c.l.b16 %v1805
        %v1816 = vunpack.c.h.b16 %v1805
        %v1817 = vunpack.c.l.b16 %v1806
        %v1818 = vunpack.c.h.b16 %v1806
        %v1819 = vpack.c.b16 %v1815, %v1811
        %v1820 = vpack.c.b16 %v1816, %v1812
        %v1821 = vpack.c.b16 %v1817, %v1813
        %v1822 = vpack.c.b16 %v1818, %v1814
        %1823 = vrot.lane.b32.xlu0 %v1819, 124
        %v1824 = vpop.permute.xlu0 %1823
        %1825 = vrot.lane.b32.xlu0 %v1820, 124
        %v1826 = vpop.permute.xlu0 %1825
        %1827 = vrot.lane.b32.xlu0 %v1821, 124
        %v1828 = vpop.permute.xlu0 %1827
        %1829 = vrot.lane.b32.xlu0 %v1822, 124
        %v1830 = vpop.permute.xlu0 %1829
        %v1831 = vsel %vm387, %v1824, %v1826
        %v1832 = vsel %vm387, %v1826, %v1828
        %v1833 = vsel %vm387, %v1828, %v1830
        %1837 = vst [vmem:[#allocation2 + $0x3f0] sm:$0xff] %v1831
        %1838 = vst [vmem:[#allocation2 + $0x3f8] sm:$0xff] %v1832
        %1839 = vst [vmem:[#allocation2 + $0x400] sm:$0xff] %v1833
        %v1840 = vld [vmem:[%s193 + $0x4] sm:$0xff]
        %v1841 = vld [vmem:[%s193 + $0xc] sm:$0xff]
        %v1842 = vld [vmem:[%s193 + $0x18] sm:$0xff]
        %v1843 = vld [vmem:[%s193 + $0x20] sm:$0xff]
        %v1848 = vunpack.c.l.b16 %v1840
        %v1849 = vunpack.c.h.b16 %v1840
        %v1850 = vunpack.c.l.b16 %v1841
        %v1851 = vunpack.c.h.b16 %v1841
        %v1852 = vunpack.c.l.b16 %v1842
        %v1853 = vunpack.c.h.b16 %v1842
        %v1854 = vunpack.c.l.b16 %v1843
        %v1855 = vunpack.c.h.b16 %v1843
        %v1856 = vpack.c.b16 %v1852, %v1848
        %v1857 = vpack.c.b16 %v1853, %v1849
        %v1858 = vpack.c.b16 %v1854, %v1850
        %v1859 = vpack.c.b16 %v1855, %v1851
        %1860 = vrot.lane.b32.xlu0 %v1856, 123
        %v1861 = vpop.permute.xlu0 %1860
        %1862 = vrot.lane.b32.xlu0 %v1857, 123
        %v1863 = vpop.permute.xlu0 %1862
        %1864 = vrot.lane.b32.xlu0 %v1858, 123
        %v1865 = vpop.permute.xlu0 %1864
        %1866 = vrot.lane.b32.xlu0 %v1859, 123
        %v1867 = vpop.permute.xlu0 %1866
        %v1868 = vsel %vm425, %v1861, %v1863
        %v1869 = vsel %vm425, %v1863, %v1865
        %v1870 = vsel %vm425, %v1865, %v1867
        %1874 = vst [vmem:[#allocation2 + $0x408] sm:$0xff] %v1868
        %1875 = vst [vmem:[#allocation2 + $0x410] sm:$0xff] %v1869
        %1876 = vst [vmem:[#allocation2 + $0x418] sm:$0xff] %v1870
        %v1877 = vld [vmem:[%s193 + $0x4] sm:$0xff]
        %v1878 = vld [vmem:[%s193 + $0xc] sm:$0xff]
        %v1879 = vld [vmem:[%s193 + $0x18] sm:$0xff]
        %v1880 = vld [vmem:[%s193 + $0x20] sm:$0xff]
        %v1885 = vunpack.c.l.b16 %v1877
        %v1886 = vunpack.c.h.b16 %v1877
        %v1887 = vunpack.c.l.b16 %v1878
        %v1888 = vunpack.c.h.b16 %v1878
        %v1889 = vunpack.c.l.b16 %v1879
        %v1890 = vunpack.c.h.b16 %v1879
        %v1891 = vunpack.c.l.b16 %v1880
        %v1892 = vunpack.c.h.b16 %v1880
        %v1893 = vpack.c.b16 %v1889, %v1885
        %v1894 = vpack.c.b16 %v1890, %v1886
        %v1895 = vpack.c.b16 %v1891, %v1887
        %v1896 = vpack.c.b16 %v1892, %v1888
        %1897 = vrot.lane.b32.xlu0 %v1893, 122
        %v1898 = vpop.permute.xlu0 %1897
        %1899 = vrot.lane.b32.xlu0 %v1894, 122
        %v1900 = vpop.permute.xlu0 %1899
        %1901 = vrot.lane.b32.xlu0 %v1895, 122
        %v1902 = vpop.permute.xlu0 %1901
        %1903 = vrot.lane.b32.xlu0 %v1896, 122
        %v1904 = vpop.permute.xlu0 %1903
        %v1905 = vsel %vm463, %v1898, %v1900
        %v1906 = vsel %vm463, %v1900, %v1902
        %v1907 = vsel %vm463, %v1902, %v1904
        %1911 = vst [vmem:[#allocation2 + $0x420] sm:$0xff] %v1905
        %1912 = vst [vmem:[#allocation2 + $0x428] sm:$0xff] %v1906
        %1913 = vst [vmem:[#allocation2 + $0x430] sm:$0xff] %v1907
        %v1914 = vld [vmem:[%s193 + $0x4] sm:$0xff]
        %v1915 = vld [vmem:[%s193 + $0xc] sm:$0xff]
        %v1916 = vld [vmem:[%s193 + $0x18] sm:$0xff]
        %v1917 = vld [vmem:[%s193 + $0x20] sm:$0xff]
        %v1922 = vunpack.c.l.b16 %v1914
        %v1923 = vunpack.c.h.b16 %v1914
        %v1924 = vunpack.c.l.b16 %v1915
        %v1925 = vunpack.c.h.b16 %v1915
        %v1926 = vunpack.c.l.b16 %v1916
        %v1927 = vunpack.c.h.b16 %v1916
        %v1928 = vunpack.c.l.b16 %v1917
        %v1929 = vunpack.c.h.b16 %v1917
        %v1930 = vpack.c.b16 %v1926, %v1922
        %v1931 = vpack.c.b16 %v1927, %v1923
        %v1932 = vpack.c.b16 %v1928, %v1924
        %v1933 = vpack.c.b16 %v1929, %v1925
        %1934 = vrot.lane.b32.xlu0 %v1930, 121
        %v1935 = vpop.permute.xlu0 %1934
        %1936 = vrot.lane.b32.xlu0 %v1931, 121
        %v1937 = vpop.permute.xlu0 %1936
        %1938 = vrot.lane.b32.xlu0 %v1932, 121
        %v1939 = vpop.permute.xlu0 %1938
        %1940 = vrot.lane.b32.xlu0 %v1933, 121
        %v1941 = vpop.permute.xlu0 %1940
        %vm1942 = vcmask 990208
        %v1943 = vsel %vm1942, %v1935, %v1937
        %v1944 = vsel %vm1942, %v1937, %v1939
        %v1945 = vsel %vm1942, %v1939, %v1941
        %1949 = vst [vmem:[#allocation2 + $0x438] sm:$0xff] %v1943
        %1950 = vst [vmem:[#allocation2 + $0x440] sm:$0xff] %v1944
        %1951 = vst [vmem:[#allocation2 + $0x448] sm:$0xff] %v1945
        %v1952 = vld [vmem:[%s193 + $0x4] sm:$0xff]
        %v1953 = vld [vmem:[%s193 + $0xc] sm:$0xff]
        %v1954 = vld [vmem:[%s193 + $0x18] sm:$0xff]
        %v1955 = vld [vmem:[%s193 + $0x20] sm:$0xff]
        %v1960 = vunpack.c.l.b16 %v1952
        %v1961 = vunpack.c.h.b16 %v1952
        %v1962 = vunpack.c.l.b16 %v1953
        %v1963 = vunpack.c.h.b16 %v1953
        %v1964 = vunpack.c.l.b16 %v1954
        %v1965 = vunpack.c.h.b16 %v1954
        %v1966 = vunpack.c.l.b16 %v1955
        %v1967 = vunpack.c.h.b16 %v1955
        %v1968 = vpack.c.b16 %v1964, %v1960
        %v1969 = vpack.c.b16 %v1965, %v1961
        %v1970 = vpack.c.b16 %v1966, %v1962
        %v1971 = vpack.c.b16 %v1967, %v1963
        %1972 = vrot.lane.b32.xlu0 %v1968, 120
        %v1973 = vpop.permute.xlu0 %1972
        %1974 = vrot.lane.b32.xlu0 %v1969, 120
        %v1975 = vpop.permute.xlu0 %1974
        %1976 = vrot.lane.b32.xlu0 %v1970, 120
        %v1977 = vpop.permute.xlu0 %1976
        %1978 = vrot.lane.b32.xlu0 %v1971, 120
        %v1979 = vpop.permute.xlu0 %1978
        %vm1980 = vcmask 982016
        %v1981 = vsel %vm1980, %v1973, %v1975
        %v1982 = vsel %vm1980, %v1975, %v1977
        %v1983 = vsel %vm1980, %v1977, %v1979
        %1987 = vst [vmem:[#allocation2 + $0x450] sm:$0xff] %v1981
        %1988 = vst [vmem:[#allocation2 + $0x458] sm:$0xff] %v1982
        %1989 = vst [vmem:[#allocation2 + $0x460] sm:$0xff] %v1983
        %v1990 = vld [vmem:[%s193 + $0x4] sm:$0xff]
        %v1991 = vld [vmem:[%s193 + $0xc] sm:$0xff]
        %v1992 = vld [vmem:[%s193 + $0x18] sm:$0xff]
        %v1993 = vld [vmem:[%s193 + $0x20] sm:$0xff]
        %v1998 = vunpack.c.l.b16 %v1990
        %v1999 = vunpack.c.h.b16 %v1990
        %v2000 = vunpack.c.l.b16 %v1991
        %v2001 = vunpack.c.h.b16 %v1991
        %v2002 = vunpack.c.l.b16 %v1992
        %v2003 = vunpack.c.h.b16 %v1992
        %v2004 = vunpack.c.l.b16 %v1993
        %v2005 = vunpack.c.h.b16 %v1993
        %v2006 = vpack.c.b16 %v2002, %v1998
        %v2007 = vpack.c.b16 %v2003, %v1999
        %v2008 = vpack.c.b16 %v2004, %v2000
        %v2009 = vpack.c.b16 %v2005, %v2001
        %2010 = vrot.lane.b32.xlu0 %v2006, 119
        %v2011 = vpop.permute.xlu0 %2010
        %2012 = vrot.lane.b32.xlu0 %v2007, 119
        %v2013 = vpop.permute.xlu0 %2012
        %2014 = vrot.lane.b32.xlu0 %v2008, 119
        %v2015 = vpop.permute.xlu0 %2014
        %2016 = vrot.lane.b32.xlu0 %v2009, 119
        %v2017 = vpop.permute.xlu0 %2016
        %vm2018 = vcmask 973824
        %v2019 = vsel %vm2018, %v2011, %v2013
        %v2020 = vsel %vm2018, %v2013, %v2015
        %v2021 = vsel %vm2018, %v2015, %v2017
        %2025 = vst [vmem:[#allocation2 + $0x468] sm:$0xff] %v2019
        %2026 = vst [vmem:[#allocation2 + $0x470] sm:$0xff] %v2020
        %2027 = vst [vmem:[#allocation2 + $0x478] sm:$0xff] %v2021
        %v2028 = vld [vmem:[%s193 + $0x4] sm:$0xff]
        %v2029 = vld [vmem:[%s193 + $0xc] sm:$0xff]
        %v2030 = vld [vmem:[%s193 + $0x18] sm:$0xff]
        %v2031 = vld [vmem:[%s193 + $0x20] sm:$0xff]
        %v2036 = vunpack.c.l.b16 %v2028
        %v2037 = vunpack.c.h.b16 %v2028
        %v2038 = vunpack.c.l.b16 %v2029
        %v2039 = vunpack.c.h.b16 %v2029
        %v2040 = vunpack.c.l.b16 %v2030
        %v2041 = vunpack.c.h.b16 %v2030
        %v2042 = vunpack.c.l.b16 %v2031
        %v2043 = vunpack.c.h.b16 %v2031
        %v2044 = vpack.c.b16 %v2040, %v2036
        %v2045 = vpack.c.b16 %v2041, %v2037
        %v2046 = vpack.c.b16 %v2042, %v2038
        %v2047 = vpack.c.b16 %v2043, %v2039
        %2048 = vrot.lane.b32.xlu0 %v2044, 118
        %v2049 = vpop.permute.xlu0 %2048
        %2050 = vrot.lane.b32.xlu0 %v2045, 118
        %v2051 = vpop.permute.xlu0 %2050
        %2052 = vrot.lane.b32.xlu0 %v2046, 118
        %v2053 = vpop.permute.xlu0 %2052
        %2054 = vrot.lane.b32.xlu0 %v2047, 118
        %v2055 = vpop.permute.xlu0 %2054
        %vm2056 = vcmask 965632
        %v2057 = vsel %vm2056, %v2049, %v2051
        %v2058 = vsel %vm2056, %v2051, %v2053
        %v2059 = vsel %vm2056, %v2053, %v2055
        %2063 = vst [vmem:[#allocation2 + $0x480] sm:$0xff] %v2057
        %2064 = vst [vmem:[#allocation2 + $0x488] sm:$0xff] %v2058
        %2065 = vst [vmem:[#allocation2 + $0x490] sm:$0xff] %v2059
        %v2066 = vld [vmem:[#allocation6] sm:$0xff]
        %v2067 = vld [vmem:[#allocation6 + $0x8] sm:$0xff]
        %v2068 = vld [vmem:[#allocation6 + $0x10] sm:$0xff]
        %v2069 = vld [vmem:[#allocation6 + $0x18] sm:$0xf]
        %v2070 = vld [vmem:[#allocation2] sm:$0xff]
        %v2071 = vld [vmem:[#allocation2 + $0x8] sm:$0xff]
        %v2072 = vld [vmem:[#allocation2 + $0x10] sm:$0xff]
        %v2073 = vld [vmem:[#allocation2 + $0x18] sm:$0xff]
        %v2074 = vld [vmem:[#allocation2 + $0x20] sm:$0xff]
        %v2075 = vld [vmem:[#allocation2 + $0x28] sm:$0xff]
        %v2076 = vld [vmem:[#allocation2 + $0x30] sm:$0xff]
        %v2077 = vld [vmem:[#allocation2 + $0x38] sm:$0xff]
        %v2078 = vld [vmem:[#allocation2 + $0x40] sm:$0xff]
        %v2079 = vld [vmem:[#allocation2 + $0x48] sm:$0xff]
        %v2080 = vld [vmem:[#allocation2 + $0x50] sm:$0xff]
        %v2081 = vld [vmem:[#allocation2 + $0x58] sm:$0xff]
        %v2082 = vld [vmem:[#allocation2 + $0x60] sm:$0xff]
        %v2083 = vld [vmem:[#allocation2 + $0x68] sm:$0xff]
        %v2084 = vld [vmem:[#allocation2 + $0x70] sm:$0xff]
        %v2085 = vld [vmem:[#allocation2 + $0x78] sm:$0xff]
        %v2086 = vld [vmem:[#allocation2 + $0x80] sm:$0xff]
        %v2087 = vld [vmem:[#allocation2 + $0x88] sm:$0xff]
        %v2088 = vld [vmem:[#allocation2 + $0x90] sm:$0xff]
        %v2089 = vld [vmem:[#allocation2 + $0x98] sm:$0xff]
        %v2090 = vld [vmem:[#allocation2 + $0xa0] sm:$0xff]
        %v2091 = vld [vmem:[#allocation2 + $0xa8] sm:$0xff]
        %v2092 = vld [vmem:[#allocation2 + $0xb0] sm:$0xff]
        %v2093 = vld [vmem:[#allocation2 + $0xb8] sm:$0xff]
        %v2094 = vld [vmem:[#allocation2 + $0xc0] sm:$0xff]
        %v2095 = vld [vmem:[#allocation2 + $0xc8] sm:$0xff]
        %v2096 = vld [vmem:[#allocation2 + $0xd0] sm:$0xff]
        %v2097 = vld [vmem:[#allocation2 + $0xd8] sm:$0xff]
        %v2098 = vld [vmem:[#allocation2 + $0xe0] sm:$0xff]
        %v2099 = vld [vmem:[#allocation2 + $0xe8] sm:$0xff]
        %v2100 = vld [vmem:[#allocation2 + $0xf0] sm:$0xff]
        %v2101 = vld [vmem:[#allocation2 + $0xf8] sm:$0xff]
        %v2102 = vld [vmem:[#allocation2 + $0x100] sm:$0xff]
        %v2103 = vld [vmem:[#allocation2 + $0x108] sm:$0xff]
        %v2104 = vld [vmem:[#allocation2 + $0x110] sm:$0xff]
        %v2105 = vld [vmem:[#allocation2 + $0x118] sm:$0xff]
        %v2106 = vld [vmem:[#allocation2 + $0x120] sm:$0xff]
        %v2107 = vld [vmem:[#allocation2 + $0x128] sm:$0xff]
        %v2108 = vld [vmem:[#allocation2 + $0x130] sm:$0xff]
        %v2109 = vld [vmem:[#allocation2 + $0x138] sm:$0xff]
        %v2110 = vld [vmem:[#allocation2 + $0x140] sm:$0xff]
        %v2111 = vld [vmem:[#allocation2 + $0x148] sm:$0xff]
        %v2112 = vld [vmem:[#allocation2 + $0x150] sm:$0xff]
        %v2113 = vld [vmem:[#allocation2 + $0x158] sm:$0xff]
        %v2114 = vld [vmem:[#allocation2 + $0x160] sm:$0xff]
        %v2115 = vld [vmem:[#allocation2 + $0x168] sm:$0xff]
        %v2116 = vld [vmem:[#allocation2 + $0x170] sm:$0xff]
        %v2117 = vld [vmem:[#allocation2 + $0x178] sm:$0xff]
        %v2118 = vld [vmem:[#allocation2 + $0x180] sm:$0xff]
        %v2119 = vld [vmem:[#allocation2 + $0x188] sm:$0xff]
        %v2120 = vld [vmem:[#allocation2 + $0x190] sm:$0xff]
        %v2121 = vld [vmem:[#allocation2 + $0x198] sm:$0xff]
        %v2122 = vld [vmem:[#allocation2 + $0x1a0] sm:$0xff]
        %v2123 = vld [vmem:[#allocation2 + $0x1a8] sm:$0xff]
        %v2124 = vld [vmem:[#allocation2 + $0x1b0] sm:$0xff]
        %v2125 = vld [vmem:[#allocation2 + $0x1b8] sm:$0xff]
        %v2126 = vld [vmem:[#allocation2 + $0x1c0] sm:$0xff]
        %v2127 = vld [vmem:[#allocation2 + $0x1c8] sm:$0xff]
        %v2128 = vld [vmem:[#allocation2 + $0x1d0] sm:$0xff]
        %v2129 = vld [vmem:[#allocation2 + $0x1d8] sm:$0xff]
        %v2130 = vld [vmem:[#allocation2 + $0x1e0] sm:$0xff]
        %v2131 = vld [vmem:[#allocation2 + $0x1e8] sm:$0xff]
        %v2132 = vld [vmem:[#allocation2 + $0x1f0] sm:$0xff]
        %v2133 = vld [vmem:[#allocation2 + $0x1f8] sm:$0xff]
        %v2134 = vld [vmem:[#allocation2 + $0x200] sm:$0xff]
        %v2135 = vld [vmem:[#allocation2 + $0x208] sm:$0xff]
        %v2136 = vld [vmem:[#allocation2 + $0x210] sm:$0xff]
        %v2137 = vld [vmem:[#allocation2 + $0x218] sm:$0xff]
        %v2138 = vld [vmem:[#allocation2 + $0x220] sm:$0xff]
        %v2139 = vld [vmem:[#allocation2 + $0x228] sm:$0xff]
        %v2140 = vld [vmem:[#allocation2 + $0x230] sm:$0xff]
        %v2141 = vld [vmem:[#allocation2 + $0x238] sm:$0xff]
        %v2142 = vld [vmem:[#allocation2 + $0x240] sm:$0xff]
        %v2143 = vld [vmem:[#allocation2 + $0x248] sm:$0xff]
        %v2144 = vld [vmem:[#allocation2 + $0x250] sm:$0xff]
        %v2145 = vld [vmem:[#allocation2 + $0x258] sm:$0xff]
        %v2146 = vld [vmem:[#allocation2 + $0x260] sm:$0xff]
        %v2147 = vld [vmem:[#allocation2 + $0x268] sm:$0xff]
        %v2148 = vld [vmem:[#allocation2 + $0x270] sm:$0xff]
        %v2149 = vld [vmem:[#allocation2 + $0x278] sm:$0xff]
        %v2150 = vld [vmem:[#allocation2 + $0x280] sm:$0xff]
        %v2151 = vld [vmem:[#allocation2 + $0x288] sm:$0xff]
        %v2152 = vld [vmem:[#allocation2 + $0x290] sm:$0xff]
        %v2153 = vld [vmem:[#allocation2 + $0x298] sm:$0xff]
        %v2154 = vld [vmem:[#allocation2 + $0x2a0] sm:$0xff]
        %v2155 = vld [vmem:[#allocation2 + $0x2a8] sm:$0xff]
        %v2156 = vld [vmem:[#allocation2 + $0x2b0] sm:$0xff]
        %v2157 = vld [vmem:[#allocation2 + $0x2b8] sm:$0xff]
        %v2158 = vld [vmem:[#allocation2 + $0x2c0] sm:$0xff]
        %v2159 = vld [vmem:[#allocation2 + $0x2c8] sm:$0xff]
        %v2160 = vld [vmem:[#allocation2 + $0x2d0] sm:$0xff]
        %v2161 = vld [vmem:[#allocation2 + $0x2d8] sm:$0xff]
        %v2162 = vld [vmem:[#allocation2 + $0x2e0] sm:$0xff]
        %v2163 = vld [vmem:[#allocation2 + $0x2e8] sm:$0xff]
        %v2164 = vld [vmem:[#allocation2 + $0x2f0] sm:$0xff]
        %v2165 = vld [vmem:[#allocation2 + $0x2f8] sm:$0xff]
        %v2166 = vld [vmem:[#allocation2 + $0x300] sm:$0xff]
        %v2167 = vld [vmem:[#allocation2 + $0x308] sm:$0xff]
        %v2168 = vld [vmem:[#allocation2 + $0x310] sm:$0xff]
        %v2169 = vld [vmem:[#allocation2 + $0x318] sm:$0xff]
        %v2170 = vld [vmem:[#allocation2 + $0x320] sm:$0xff]
        %v2171 = vld [vmem:[#allocation2 + $0x328] sm:$0xff]
        %v2172 = vld [vmem:[#allocation2 + $0x330] sm:$0xff]
        %v2173 = vld [vmem:[#allocation2 + $0x338] sm:$0xff]
        %v2174 = vld [vmem:[#allocation2 + $0x340] sm:$0xff]
        %v2175 = vld [vmem:[#allocation2 + $0x348] sm:$0xff]
        %v2176 = vld [vmem:[#allocation2 + $0x350] sm:$0xff]
        %v2177 = vld [vmem:[#allocation2 + $0x358] sm:$0xff]
        %v2178 = vld [vmem:[#allocation2 + $0x360] sm:$0xff]
        %v2179 = vld [vmem:[#allocation2 + $0x368] sm:$0xff]
        %v2180 = vld [vmem:[#allocation2 + $0x370] sm:$0xff]
        %v2181 = vld [vmem:[#allocation2 + $0x378] sm:$0xff]
        %v2182 = vld [vmem:[#allocation2 + $0x380] sm:$0xff]
        %v2183 = vld [vmem:[#allocation2 + $0x388] sm:$0xff]
        %v2184 = vld [vmem:[#allocation2 + $0x390] sm:$0xff]
        %v2185 = vld [vmem:[#allocation2 + $0x398] sm:$0xff]
        %v2186 = vld [vmem:[#allocation2 + $0x3a0] sm:$0xff]
        %v2187 = vld [vmem:[#allocation2 + $0x3a8] sm:$0xff]
        %v2188 = vld [vmem:[#allocation2 + $0x3b0] sm:$0xff]
        %v2189 = vld [vmem:[#allocation2 + $0x3b8] sm:$0xff]
        %v2190 = vld [vmem:[#allocation2 + $0x3c0] sm:$0xff]
        %v2191 = vld [vmem:[#allocation2 + $0x3c8] sm:$0xff]
        %v2192 = vld [vmem:[#allocation2 + $0x3d0] sm:$0xff]
        %v2193 = vld [vmem:[#allocation2 + $0x3d8] sm:$0xff]
        %v2194 = vld [vmem:[#allocation2 + $0x3e0] sm:$0xff]
        %v2195 = vld [vmem:[#allocation2 + $0x3e8] sm:$0xff]
        %v2196 = vld [vmem:[#allocation2 + $0x3f0] sm:$0xff]
        %v2197 = vld [vmem:[#allocation2 + $0x3f8] sm:$0xff]
        %v2198 = vld [vmem:[#allocation2 + $0x400] sm:$0xff]
        %v2199 = vld [vmem:[#allocation2 + $0x408] sm:$0xff]
        %v2200 = vld [vmem:[#allocation2 + $0x410] sm:$0xff]
        %v2201 = vld [vmem:[#allocation2 + $0x418] sm:$0xff]
        %v2202 = vld [vmem:[#allocation2 + $0x420] sm:$0xff]
        %v2203 = vld [vmem:[#allocation2 + $0x428] sm:$0xff]
        %v2204 = vld [vmem:[#allocation2 + $0x430] sm:$0xff]
        %v2205 = vld [vmem:[#allocation2 + $0x438] sm:$0xff]
        %v2206 = vld [vmem:[#allocation2 + $0x440] sm:$0xff]
        %v2207 = vld [vmem:[#allocation2 + $0x448] sm:$0xff]
        %v2208 = vld [vmem:[#allocation2 + $0x450] sm:$0xff]
        %v2209 = vld [vmem:[#allocation2 + $0x458] sm:$0xff]
        %v2210 = vld [vmem:[#allocation2 + $0x460] sm:$0xff]
        %v2211 = vld [vmem:[#allocation2 + $0x468] sm:$0xff]
        %v2212 = vld [vmem:[#allocation2 + $0x470] sm:$0xff]
        %v2213 = vld [vmem:[#allocation2 + $0x478] sm:$0xff]
        %v2214 = vld [vmem:[#allocation2 + $0x480] sm:$0xff]
        %v2215 = vld [vmem:[#allocation2 + $0x488] sm:$0xff]
        %v2216 = vld [vmem:[#allocation2 + $0x490] sm:$0xff]
        %v2217 = vld [vmem:[%s2] sm:$0xff]
        %2219 = vset.pattern.permute.xlu0 0
        %2220 = vperm.xlu0 %2219, %v2217
        %v2221 = vpop.permute.xlu0 %2220
        %v2227 = vunpack.c.l.b16 %v2066
        %v2228 = vunpack.c.h.b16 %v2066
        %v2229 = vunpack.c.l.b16 %v2067
        %v2230 = vunpack.c.h.b16 %v2067
        %v2231 = vunpack.c.l.b16 %v2068
        %v2232 = vunpack.c.h.b16 %v2068
        %v2233 = vunpack.c.l.b16 %v2069
        %v2234 = vpack.c.b16 %v2227, %v2227
        %v2235 = vpack.c.b16 %v2228, %v2228
        %v2236 = vpack.c.b16 %v2229, %v2229
        %v2237 = vpack.c.b16 %v2230, %v2230
        %v2238 = vpack.c.b16 %v2231, %v2231
        %v2239 = vpack.c.b16 %v2232, %v2232
        %v2240 = vpack.c.b16 %v2233, %v2233
        %vm2247 = vcmask 130048
        %v2249 = vsel %vm2247, %v2240, 0
        %2251 = vmatprep.subr.bf16.mxu0 %v2071
        %2252 = vmatpush1.bf16.msra.mxu0 %v2070
        %2253 = vmatprep.subr.bf16.mxu0 %v2074
        %2254 = vmatpush1.bf16.msra.mxu0 %v2073
        %2255 = vmatprep.subr.bf16.mxu0 %v2077
        %2256 = vmatpush1.bf16.msra.mxu0 %v2076
        %2257 = vmatprep.subr.bf16.mxu0 %v2080
        %2258 = vmatpush1.bf16.msra.mxu0 %v2079
        %2259 = vmatprep.subr.bf16.mxu0 %v2083
        %2260 = vmatpush1.bf16.msra.mxu0 %v2082
        %2261 = vmatprep.subr.bf16.mxu0 %v2086
        %2262 = vmatpush1.bf16.msra.mxu0 %v2085
        %2263 = vmatprep.subr.bf16.mxu0 %v2089
        %2264 = vmatpush1.bf16.msra.mxu0 %v2088
        %2265 = vmatprep.subr.bf16.mxu0 %v2092
        %2266 = vmatpush1.bf16.msra.mxu0 %v2091
        %2267 = vmatprep.subr.bf16.mxu0 %v2095
        %2268 = vmatpush1.bf16.msra.mxu0 %v2094
        %2269 = vmatprep.subr.bf16.mxu0 %v2098
        %2270 = vmatpush1.bf16.msra.mxu0 %v2097
        %2271 = vmatprep.subr.bf16.mxu0 %v2101
        %2272 = vmatpush1.bf16.msra.mxu0 %v2100
        %2273 = vmatprep.subr.bf16.mxu0 %v2104
        %2274 = vmatpush1.bf16.msra.mxu0 %v2103
        %2275 = vmatprep.subr.bf16.mxu0 %v2107
        %2276 = vmatpush1.bf16.msra.mxu0 %v2106
        %2277 = vmatprep.subr.bf16.mxu0 %v2110
        %2278 = vmatpush1.bf16.msra.mxu0 %v2109
        %2279 = vmatprep.subr.bf16.mxu0 %v2113
        %2280 = vmatpush1.bf16.msra.mxu0 %v2112
        %2281 = vmatprep.subr.bf16.mxu0 %v2116
        %2282 = vmatpush1.bf16.msra.mxu0 %v2115
        %2283 = vmatprep.mubr.bf16.mxu0 %v2235
        %2284 = vmatmul.mubr.bf16.gmra.mrb[0].mxu0 %v2234
        %v2285 = vpop.f32.mrb[0].mxu0
        %v2286 = vadd.f32 %v2221, %v2285
        %v2287 = vpop.f32.mrb[0].mxu0
        %v2288 = vadd.f32 %v2221, %v2287
        %v2289 = vpop.f32.mrb[0].mxu0
        %v2290 = vpop.f32.mrb[0].mxu0
        %2291 = vdwg.mxu0
        %2292 = vmatprep.subr.bf16.mxu0 %v2119
        %2293 = vmatpush1.bf16.msra.mxu0 %v2118
        %2294 = vmatprep.subr.bf16.mxu0 %v2122
        %2295 = vmatpush1.bf16.msra.mxu0 %v2121
        %2296 = vmatprep.subr.bf16.mxu0 %v2125
        %2297 = vmatpush1.bf16.msra.mxu0 %v2124
        %2298 = vmatprep.subr.bf16.mxu0 %v2128
        %2299 = vmatpush1.bf16.msra.mxu0 %v2127
        %2300 = vmatprep.subr.bf16.mxu0 %v2131
        %2301 = vmatpush1.bf16.msra.mxu0 %v2130
        %2302 = vmatprep.subr.bf16.mxu0 %v2134
        %2303 = vmatpush1.bf16.msra.mxu0 %v2133
        %2304 = vmatprep.subr.bf16.mxu0 %v2137
        %2305 = vmatpush1.bf16.msra.mxu0 %v2136
        %2306 = vmatprep.subr.bf16.mxu0 %v2140
        %2307 = vmatpush1.bf16.msra.mxu0 %v2139
        %2308 = vmatprep.subr.bf16.mxu0 %v2143
        %2309 = vmatpush1.bf16.msra.mxu0 %v2142
        %2310 = vmatprep.subr.bf16.mxu0 %v2146
        %2311 = vmatpush1.bf16.msra.mxu0 %v2145
        %2312 = vmatprep.subr.bf16.mxu0 %v2149
        %2313 = vmatpush1.bf16.msra.mxu0 %v2148
        %2314 = vmatprep.subr.bf16.mxu0 %v2152
        %2315 = vmatpush1.bf16.msra.mxu0 %v2151
        %2316 = vmatprep.subr.bf16.mxu0 %v2155
        %2317 = vmatpush1.bf16.msra.mxu0 %v2154
        %2318 = vmatprep.subr.bf16.mxu0 %v2158
        %2319 = vmatpush1.bf16.msra.mxu0 %v2157
        %2320 = vmatprep.subr.bf16.mxu0 %v2161
        %2321 = vmatpush1.bf16.msra.mxu0 %v2160
        %2322 = vmatprep.subr.bf16.mxu0 %v2164
        %2323 = vmatpush1.bf16.msra.mxu0 %v2163
        %2324 = vmatprep.mubr.bf16.mxu0 %v2237
        %2325 = vmatmul.mubr.bf16.gmra.mrb[0].mxu0 %v2236
        %v2326 = vpop.f32.mrb[0].mxu0
        %v2327 = vadd.f32 %v2286, %v2326
        %v2328 = vpop.f32.mrb[0].mxu0
        %v2329 = vadd.f32 %v2288, %v2328
        %v2330 = vpop.f32.mrb[0].mxu0
        %v2331 = vpop.f32.mrb[0].mxu0
        %2332 = vdwg.mxu0
        %2333 = vmatprep.subr.bf16.mxu0 %v2167
        %2334 = vmatpush1.bf16.msra.mxu0 %v2166
        %2335 = vmatprep.subr.bf16.mxu0 %v2170
        %2336 = vmatpush1.bf16.msra.mxu0 %v2169
        %2337 = vmatprep.subr.bf16.mxu0 %v2173
        %2338 = vmatpush1.bf16.msra.mxu0 %v2172
        %2339 = vmatprep.subr.bf16.mxu0 %v2176
        %2340 = vmatpush1.bf16.msra.mxu0 %v2175
        %2341 = vmatprep.subr.bf16.mxu0 %v2179
        %2342 = vmatpush1.bf16.msra.mxu0 %v2178
        %2343 = vmatprep.subr.bf16.mxu0 %v2182
        %2344 = vmatpush1.bf16.msra.mxu0 %v2181
        %2345 = vmatprep.subr.bf16.mxu0 %v2185
        %2346 = vmatpush1.bf16.msra.mxu0 %v2184
        %2347 = vmatprep.subr.bf16.mxu0 %v2188
        %2348 = vmatpush1.bf16.msra.mxu0 %v2187
        %2349 = vmatprep.subr.bf16.mxu0 %v2191
        %2350 = vmatpush1.bf16.msra.mxu0 %v2190
        %2351 = vmatprep.subr.bf16.mxu0 %v2194
        %2352 = vmatpush1.bf16.msra.mxu0 %v2193
        %2353 = vmatprep.subr.bf16.mxu0 %v2197
        %2354 = vmatpush1.bf16.msra.mxu0 %v2196
        %2355 = vmatprep.subr.bf16.mxu0 %v2200
        %2356 = vmatpush1.bf16.msra.mxu0 %v2199
        %2357 = vmatprep.subr.bf16.mxu0 %v2203
        %2358 = vmatpush1.bf16.msra.mxu0 %v2202
        %2359 = vmatprep.subr.bf16.mxu0 %v2206
        %2360 = vmatpush1.bf16.msra.mxu0 %v2205
        %2361 = vmatprep.subr.bf16.mxu0 %v2209
        %2362 = vmatpush1.bf16.msra.mxu0 %v2208
        %2363 = vmatprep.subr.bf16.mxu0 %v2212
        %2364 = vmatpush1.bf16.msra.mxu0 %v2211
        %2365 = vmatprep.mubr.bf16.mxu0 %v2239
        %2366 = vmatmul.mubr.bf16.gmra.mrb[0].mxu0 %v2238
        %v2367 = vpop.f32.mrb[0].mxu0
        %v2368 = vadd.f32 %v2327, %v2367
        %v2369 = vpop.f32.mrb[0].mxu0
        %v2370 = vadd.f32 %v2329, %v2369
        %v2371 = vpop.f32.mrb[0].mxu0
        %v2372 = vpop.f32.mrb[0].mxu0
        %2373 = vdwg.mxu0
        %2374 = vmatprep.subr.bf16.mxu0 %v2215
        %2375 = vmatpush1.bf16.msra.mxu0 %v2214
        %2376 = vmatprep.subr.bf16.mxu0 0
        %2377 = vmatpush1.bf16.msra.mxu0 0
        %2378 = vmatprep.subr.bf16.mxu0 0
        %2379 = vmatpush1.bf16.msra.mxu0 0
        %2380 = vmatprep.subr.bf16.mxu0 0
        %2381 = vmatpush1.bf16.msra.mxu0 0
        %2382 = vmatprep.subr.bf16.mxu0 0
        %2383 = vmatpush1.bf16.msra.mxu0 0
        %2384 = vmatprep.subr.bf16.mxu0 0
        %2385 = vmatpush1.bf16.msra.mxu0 0
        %2386 = vmatprep.subr.bf16.mxu0 0
        %2387 = vmatpush1.bf16.msra.mxu0 0
        %2388 = vmatprep.subr.bf16.mxu0 0
        %2389 = vmatpush1.bf16.msra.mxu0 0
        %2390 = vmatprep.subr.bf16.mxu0 0
        %2391 = vmatpush1.bf16.msra.mxu0 0
        %2392 = vmatprep.subr.bf16.mxu0 0
        %2393 = vmatpush1.bf16.msra.mxu0 0
        %2394 = vmatprep.subr.bf16.mxu0 0
        %2395 = vmatpush1.bf16.msra.mxu0 0
        %2396 = vmatprep.subr.bf16.mxu0 0
        %2397 = vmatpush1.bf16.msra.mxu0 0
        %2398 = vmatprep.subr.bf16.mxu0 0
        %2399 = vmatpush1.bf16.msra.mxu0 0
        %2400 = vmatprep.subr.bf16.mxu0 0
        %2401 = vmatpush1.bf16.msra.mxu0 0
        %2402 = vmatprep.subr.bf16.mxu0 0
        %2403 = vmatpush1.bf16.msra.mxu0 0
        %2404 = vmatprep.subr.bf16.mxu0 0
        %2405 = vmatpush1.bf16.msra.mxu0 0
        %2406 = vmatprep.mubr.bf16.mxu0 0
        %2407 = vmatmul.mubr.bf16.gmra.mrb[0].mxu0 %v2249
        %v2408 = vpop.f32.mrb[0].mxu0
        %v2409 = vadd.f32 %v2368, %v2408
        %v2410 = vpop.f32.mrb[0].mxu0
        %v2411 = vadd.f32 %v2370, %v2410
        %v2412 = vpop.f32.mrb[0].mxu0
        %v2413 = vpop.f32.mrb[0].mxu0
        %2414 = vdwg.mxu0
        %2415 = vmatprep.subr.bf16.mxu0 0
        %2416 = vmatpush1.bf16.msra.mxu0 %v2072
        %2417 = vmatprep.subr.bf16.mxu0 0
        %2418 = vmatpush1.bf16.msra.mxu0 %v2075
        %2419 = vmatprep.subr.bf16.mxu0 0
        %2420 = vmatpush1.bf16.msra.mxu0 %v2078
        %2421 = vmatprep.subr.bf16.mxu0 0
        %2422 = vmatpush1.bf16.msra.mxu0 %v2081
        %2423 = vmatprep.subr.bf16.mxu0 0
        %2424 = vmatpush1.bf16.msra.mxu0 %v2084
        %2425 = vmatprep.subr.bf16.mxu0 0
        %2426 = vmatpush1.bf16.msra.mxu0 %v2087
        %2427 = vmatprep.subr.bf16.mxu0 0
        %2428 = vmatpush1.bf16.msra.mxu0 %v2090
        %2429 = vmatprep.subr.bf16.mxu0 0
        %2430 = vmatpush1.bf16.msra.mxu0 %v2093
        %2431 = vmatprep.subr.bf16.mxu0 0
        %2432 = vmatpush1.bf16.msra.mxu0 %v2096
        %2433 = vmatprep.subr.bf16.mxu0 0
        %2434 = vmatpush1.bf16.msra.mxu0 %v2099
        %2435 = vmatprep.subr.bf16.mxu0 0
        %2436 = vmatpush1.bf16.msra.mxu0 %v2102
        %2437 = vmatprep.subr.bf16.mxu0 0
        %2438 = vmatpush1.bf16.msra.mxu0 %v2105
        %2439 = vmatprep.subr.bf16.mxu0 0
        %2440 = vmatpush1.bf16.msra.mxu0 %v2108
        %2441 = vmatprep.subr.bf16.mxu0 0
        %2442 = vmatpush1.bf16.msra.mxu0 %v2111
        %2443 = vmatprep.subr.bf16.mxu0 0
        %2444 = vmatpush1.bf16.msra.mxu0 %v2114
        %2445 = vmatprep.subr.bf16.mxu0 0
        %2446 = vmatpush1.bf16.msra.mxu0 %v2117
        %2447 = vmatprep.mubr.bf16.mxu0 %v2235
        %2448 = vmatmul.mubr.bf16.gmra.mrb[0].mxu0 %v2234
        %v2449 = vpop.f32.mrb[0].mxu0
        %v2450 = vadd.f32 %v2221, %v2449
        %v2451 = vpop.f32.mrb[0].mxu0
        %v2452 = vpop.f32.mrb[0].mxu0
        %v2453 = vpop.f32.mrb[0].mxu0
        %2454 = vdwg.mxu0
        %2455 = vmatprep.subr.bf16.mxu0 0
        %2456 = vmatpush1.bf16.msra.mxu0 %v2120
        %2457 = vmatprep.subr.bf16.mxu0 0
        %2458 = vmatpush1.bf16.msra.mxu0 %v2123
        %2459 = vmatprep.subr.bf16.mxu0 0
        %2460 = vmatpush1.bf16.msra.mxu0 %v2126
        %2461 = vmatprep.subr.bf16.mxu0 0
        %2462 = vmatpush1.bf16.msra.mxu0 %v2129
        %2463 = vmatprep.subr.bf16.mxu0 0
        %2464 = vmatpush1.bf16.msra.mxu0 %v2132
        %2465 = vmatprep.subr.bf16.mxu0 0
        %2466 = vmatpush1.bf16.msra.mxu0 %v2135
        %2467 = vmatprep.subr.bf16.mxu0 0
        %2468 = vmatpush1.bf16.msra.mxu0 %v2138
        %2469 = vmatprep.subr.bf16.mxu0 0
        %2470 = vmatpush1.bf16.msra.mxu0 %v2141
        %2471 = vmatprep.subr.bf16.mxu0 0
        %2472 = vmatpush1.bf16.msra.mxu0 %v2144
        %2473 = vmatprep.subr.bf16.mxu0 0
        %2474 = vmatpush1.bf16.msra.mxu0 %v2147
        %2475 = vmatprep.subr.bf16.mxu0 0
        %2476 = vmatpush1.bf16.msra.mxu0 %v2150
        %2477 = vmatprep.subr.bf16.mxu0 0
        %2478 = vmatpush1.bf16.msra.mxu0 %v2153
        %2479 = vmatprep.subr.bf16.mxu0 0
        %2480 = vmatpush1.bf16.msra.mxu0 %v2156
        %2481 = vmatprep.subr.bf16.mxu0 0
        %2482 = vmatpush1.bf16.msra.mxu0 %v2159
        %2483 = vmatprep.subr.bf16.mxu0 0
        %2484 = vmatpush1.bf16.msra.mxu0 %v2162
        %2485 = vmatprep.subr.bf16.mxu0 0
        %2486 = vmatpush1.bf16.msra.mxu0 %v2165
        %2487 = vmatprep.mubr.bf16.mxu0 %v2237
        %2488 = vmatmul.mubr.bf16.gmra.mrb[0].mxu0 %v2236
        %v2489 = vpop.f32.mrb[0].mxu0
        %v2490 = vadd.f32 %v2450, %v2489
        %v2491 = vpop.f32.mrb[0].mxu0
        %v2492 = vpop.f32.mrb[0].mxu0
        %v2493 = vpop.f32.mrb[0].mxu0
        %2494 = vdwg.mxu0
        %2495 = vmatprep.subr.bf16.mxu0 0
        %2496 = vmatpush1.bf16.msra.mxu0 %v2168
        %2497 = vmatprep.subr.bf16.mxu0 0
        %2498 = vmatpush1.bf16.msra.mxu0 %v2171
        %2499 = vmatprep.subr.bf16.mxu0 0
        %2500 = vmatpush1.bf16.msra.mxu0 %v2174
        %2501 = vmatprep.subr.bf16.mxu0 0
        %2502 = vmatpush1.bf16.msra.mxu0 %v2177
        %2503 = vmatprep.subr.bf16.mxu0 0
        %2504 = vmatpush1.bf16.msra.mxu0 %v2180
        %2505 = vmatprep.subr.bf16.mxu0 0
        %2506 = vmatpush1.bf16.msra.mxu0 %v2183
        %2507 = vmatprep.subr.bf16.mxu0 0
        %2508 = vmatpush1.bf16.msra.mxu0 %v2186
        %2509 = vmatprep.subr.bf16.mxu0 0
        %2510 = vmatpush1.bf16.msra.mxu0 %v2189
        %2511 = vmatprep.subr.bf16.mxu0 0
        %2512 = vmatpush1.bf16.msra.mxu0 %v2192
        %2513 = vmatprep.subr.bf16.mxu0 0
        %2514 = vmatpush1.bf16.msra.mxu0 %v2195
        %2515 = vmatprep.subr.bf16.mxu0 0
        %2516 = vmatpush1.bf16.msra.mxu0 %v2198
        %2517 = vmatprep.subr.bf16.mxu0 0
        %2518 = vmatpush1.bf16.msra.mxu0 %v2201
        %2519 = vmatprep.subr.bf16.mxu0 0
        %2520 = vmatpush1.bf16.msra.mxu0 %v2204
        %2521 = vmatprep.subr.bf16.mxu0 0
        %2522 = vmatpush1.bf16.msra.mxu0 %v2207
        %2523 = vmatprep.subr.bf16.mxu0 0
        %2524 = vmatpush1.bf16.msra.mxu0 %v2210
        %2525 = vmatprep.subr.bf16.mxu0 0
        %2526 = vmatpush1.bf16.msra.mxu0 %v2213
        %2527 = vmatprep.mubr.bf16.mxu0 %v2239
        %2528 = vmatmul.mubr.bf16.gmra.mrb[0].mxu0 %v2238
        %v2529 = vpop.f32.mrb[0].mxu0
        %v2530 = vadd.f32 %v2490, %v2529
        %v2531 = vpop.f32.mrb[0].mxu0
        %v2532 = vpop.f32.mrb[0].mxu0
        %v2533 = vpop.f32.mrb[0].mxu0
        %2534 = vdwg.mxu0
        %2535 = vmatprep.subr.bf16.mxu0 0
        %2536 = vmatpush1.bf16.msra.mxu0 %v2216
        %2537 = vmatprep.subr.bf16.mxu0 0
        %2538 = vmatpush1.bf16.msra.mxu0 0
        %2539 = vmatprep.subr.bf16.mxu0 0
        %2540 = vmatpush1.bf16.msra.mxu0 0
        %2541 = vmatprep.subr.bf16.mxu0 0
        %2542 = vmatpush1.bf16.msra.mxu0 0
        %2543 = vmatprep.subr.bf16.mxu0 0
        %2544 = vmatpush1.bf16.msra.mxu0 0
        %2545 = vmatprep.subr.bf16.mxu0 0
        %2546 = vmatpush1.bf16.msra.mxu0 0
        %2547 = vmatprep.subr.bf16.mxu0 0
        %2548 = vmatpush1.bf16.msra.mxu0 0
        %2549 = vmatprep.subr.bf16.mxu0 0
        %2550 = vmatpush1.bf16.msra.mxu0 0
        %2551 = vmatprep.subr.bf16.mxu0 0
        %2552 = vmatpush1.bf16.msra.mxu0 0
        %2553 = vmatprep.subr.bf16.mxu0 0
        %2554 = vmatpush1.bf16.msra.mxu0 0
        %2555 = vmatprep.subr.bf16.mxu0 0
        %2556 = vmatpush1.bf16.msra.mxu0 0
        %2557 = vmatprep.subr.bf16.mxu0 0
        %2558 = vmatpush1.bf16.msra.mxu0 0
        %2559 = vmatprep.subr.bf16.mxu0 0
        %2560 = vmatpush1.bf16.msra.mxu0 0
        %2561 = vmatprep.subr.bf16.mxu0 0
        %2562 = vmatpush1.bf16.msra.mxu0 0
        %2563 = vmatprep.subr.bf16.mxu0 0
        %2564 = vmatpush1.bf16.msra.mxu0 0
        %2565 = vmatprep.subr.bf16.mxu0 0
        %2566 = vmatpush1.bf16.msra.mxu0 0
        %2567 = vmatprep.mubr.bf16.mxu0 0
        %2568 = vmatmul.mubr.bf16.gmra.mrb[0].mxu0 %v2249
        %v2569 = vpop.f32.mrb[0].mxu0
        %v2570 = vadd.f32 %v2530, %v2569
        %v2571 = vpop.f32.mrb[0].mxu0
        %v2572 = vpop.f32.mrb[0].mxu0
        %v2573 = vpop.f32.mrb[0].mxu0
        %2574 = vdwg.mxu0
        %v2575 = vtanh.pop %v2409
        %v2576 = vtanh.pop %v2411
        %v2577 = vtanh.pop %v2570
        %2578 = vst [vmem:[%s219] sm:$0xff] %v2575
        %2579 = vst [vmem:[%s219 + $0x8] sm:$0xff] %v2576
        %2580 = vst [vmem:[%s219 + $0x10] sm:$0xff] %v2577
        %s2581 = sand.u32 %s113, 1
        %s2582 = scalar_lea.sflag [#allocation5], %s2581
        %s2583 = sand.u32 %s113, 1
        %s2584 = smul.addr %s2583, 24
        %s2585 = scalar_lea.vmem [#allocation8], %s2584
        // Predicated region
        $region41: #{tpu_custom_call.1} parent=31 // pred_check
          %p2586 = pneg %p123
        $region42: #{tpu_custom_call.1} parent=31 // pred_check_branch
          %2588 = sbr.rel (%p2586) target = $region44
        $region43: #{tpu_custom_call.1} parent=31 // pred_region
          %s2589 = smul.u32 3, %s26
          %s2591 = ssub.s32 384, 384
          %2592 = vsyncadd %s2582, %s2591
          %s2593 = smul.addr %s25, 3
          %s2594 = sadd.s32 %s2589, %s2593
          %s2595 = smul.addr %s2594, 128
          %s2596 = scalar_lea.hbm %s3, %s2595
          %s2598 = sshll.u32 %s2585, 4
          %s2599 = int_to_ptr.vmem [resolvable:$true] %s2598
          %2601 = dma.vmem_to_hbm [thread:$0]  %s2599, 384, %s2596, %s2582
        $region44: #{tpu_custom_call.1} parent=31 // pred_fallthru
          _
      $region32: #{tpu_custom_call.1} parent=5 // pred_fallthru
        _
      %p2602 = scmp.le.s32.totalorder 2, %s16
      // Predicated region
      $region45: #{tpu_custom_call.1} parent=5 // pred_check
        %p2603 = pneg %p2602
      $region46: #{tpu_custom_call.1} parent=5 // pred_check_branch
        %2605 = sbr.rel (%p2603) target = $region48
      $region47: #{tpu_custom_call.1} parent=5 // pred_region
        %s2606 = ssub.s32 %s16, 2
        // Predicated region
        $region49: #{tpu_custom_call.1} parent=47 // pred_check
          %p2607 = pneg %p129
        $region50: #{tpu_custom_call.1} parent=47 // pred_check_branch
          %2609 = sbr.rel (%p2607) target = $region52
        $region51: #{tpu_custom_call.1} parent=47 // pred_region
          %s2610 = sand.u32 %s114, 1
          %s2611 = scalar_lea.sflag [#allocation5], %s2610
          %s2612 = sand.u32 %s114, 1
          %s2613 = smul.addr %s2612, 24
          %s2614 = scalar_lea.vmem [#allocation8], %s2613
          %2615 = dma.done %s2611, 384
        $region52: #{tpu_custom_call.1} parent=47 // pred_fallthru
          _
      $region48: #{tpu_custom_call.1} parent=5 // pred_fallthru
        _
    $region6: #{tpu_custom_call.1} parent=1 // loop_footer
      %s20 = sadd.s32 1, %s16
    $region7: #{tpu_custom_call.1} parent=1 // loop_footer_branch
      %15 = sbr.rel target = $region3
    $region8: #{tpu_custom_call.1} parent=1 // loop_exit
      _
    %2616 = vsyncpa [#allocation4], 1
    %s2617 = scalar_lea.sflag [#allocation4], 1
    %2618 = vsyncpa %s2617, 1
    %2619 = vsyncpa [#allocation7], 1
    %2620 = vsyncpa [#allocation5], 1
    %s2621 = scalar_lea.sflag [#allocation5], 1
    %2622 = vsyncpa %s2621, 1

</llo_original>
